<compile_context>
chip_gen: v7x
topology: tpu7x:2x2x1
jax: 0.10.0
libtpu: 0.0.40
codegen_flags: <defaults>
</compile_context>

<pallas_src>
import jax
import jax.numpy as jnp
import numpy as np
from jax import lax
from jax.experimental import pallas as pl
from jax.experimental.pallas import tpu as pltpu

POOL_K = 40    # AvgPool3d temporal kernel (both pools)
POOL_S = 10    # AvgPool3d temporal stride (both pools)
KT = 6         # temporal extent of both fused (6,2,2) convolutions
EPS = 1e-5


# ----------------------------------------------------------------------------
# Fused Pallas kernel: one grid step == one batch sample, all in VMEM
# ----------------------------------------------------------------------------
def _fused_forward_kernel(x_ref, pool6_ref, w1_ref, w2_ref, wfin_ref,
                          wl1_ref, wl2_ref, bout_ref, o_ref):
    kt = w1_ref.shape[0]             # 6 temporal taps
    p1 = pool6_ref.shape[1]          # 45 frames after pool_time
    t2 = wfin_ref.shape[0]           # 40 frames after the stage-2 conv
    c1 = w1_ref.shape[2]             # 256 = 4 spatial positions x 64 channels
    c2 = w2_ref.shape[2]             # 256 stage-2 output channels

    x = x_ref[0]                                                    # (T, 9) bf16

    # ---- stage 1: pool_time o (conv_time o conv_spat) ------------------------
    # Both ops are linear, so the (40,1,1)/(10,1,1) average pool is commuted in
    # front of the fused (6,2,2) conv: for every temporal tap k the pre-shifted
    # 0/1 window matrix pool6[k] pools the raw input on the MXU, then a
    # (9 -> 256) matmul applies the composed conv weights (2x2 spatial output
    # folded into the 256 lanes).  1/POOL_K and the conv bias are folded into
    # w1 / the head bias at trace time.  bf16 operands, f32 accumulation.
    p = jnp.zeros((p1, c1), jnp.float32)
    for k in range(kt):
        xpk = jnp.dot(pool6_ref[k], x,
                      preferred_element_type=jnp.float32)           # (P1, 9)
        p = p + jnp.dot(xpk.astype(jnp.bfloat16), w1_ref[k],
                        preferred_element_type=jnp.float32)         # (P1, 256)

    # ---- stage 2: conv_time2 o conv_spat2 as one (6,2,2) conv ----------------
    # In the folded-channel layout this is 6 temporally shifted
    # (T2,256)@(256,256) matmuls accumulated in f32 (in-kernel "im2col").
    z = jnp.zeros((t2, c2), jnp.float32)
    for k in range(kt):
        pk = p[k:k + t2, :].astype(jnp.bfloat16)                    # (T2, 256)
        z = z + jnp.dot(pk, w2_ref[k], preferred_element_type=jnp.float32)

    # ---- pool_time2 + AdaptiveAvgPool3d((1,1,1)) + squeeze -------------------
    # == per-sample weighted temporal mean (weights sum to 1).
    h = jnp.sum(z * wfin_ref[...], axis=0, keepdims=True)           # (1, 256)

    # ---- (BatchNorm3d-folded) linear -> (BatchNorm1d-folded) linear2 ---------
    # All biases were propagated forward into bout at trace time.
    g = jnp.dot(h.astype(jnp.bfloat16), wl1_ref[...],
                preferred_element_type=jnp.float32)                 # (1, 512)
    o = jnp.dot(g.astype(jnp.bfloat16), wl2_ref[...],
                preferred_element_type=jnp.float32) + bout_ref[...]  # (1, 4)
    o_ref[0] = o


# ----------------------------------------------------------------------------
# Trace-time weight composition (exact: the module has no nonlinearity)
# ----------------------------------------------------------------------------
def _fold_stage1(w_ct, b_ct, w_cs, b_cs):
    """conv_time (6,1,1) o conv_spat (1,2,2) -> one (6,2,2) conv with the 2x2
    output spatial positions folded into the channel axis.
    Returns W1[k, 3*ih+iw, (h*2+w)*64 + c] of shape (6, 9, 256) and b1 (256,)."""
    c_mid, kt = w_ct.shape[0], w_ct.shape[2]
    c_out = w_cs.shape[0]
    wt = w_ct.reshape(c_mid, kt)                        # (32, 6)   (Cin == 1)
    ws = w_cs.reshape(c_out, c_mid, 2, 2)               # (64, 32, 2, 2)
    wf = jnp.einsum('omhw,mk->okhw', ws, wt)            # (64, 6, 2, 2)
    b1 = b_cs + jnp.einsum('omhw,m->o', ws, b_ct)       # (64,)
    w1 = jnp.zeros((kt, 9, 4 * c_out), jnp.float32)
    for h in range(2):
        for w in range(2):
            j0 = (h * 2 + w) * c_out
            for dh in range(2):
                for dw in range(2):
                    s = 3 * (h + dh) + (w + dw)
                    w1 = w1.at[:, s, j0:j0 + c_out].set(wf[:, :, dh, dw].T)
    return w1, jnp.tile(b1, 4)                          # (6,9,256), (256,)


def _fold_stage2(w_ct2, b_ct2, w_cs2, b_cs2):
    """conv_time2 (6,1,1) o conv_spat2 (1,2,2) -> one (6,2,2) conv on the
    folded-channel layout.  Returns W2 (6, 256, 256) and b2 (256,)."""
    c_mid, c_in, kt = w_ct2.shape[0], w_ct2.shape[1], w_ct2.shape[2]
    c_out = w_cs2.shape[0]
    wt = w_ct2.reshape(c_mid, c_in, kt)                 # (128, 64, 6)
    ws = w_cs2.reshape(c_out, c_mid, 2, 2)              # (256, 128, 2, 2)
    wf = jnp.einsum('omhw,mik->oikhw', ws, wt)          # (256, 64, 6, 2, 2)
    b2 = b_cs2 + jnp.einsum('omhw,m->o', ws, b_ct2)     # (256,)
    # input folded channel j = (dh*2+dw)*64 + ci   ->   W2[k, j, co]
    w2 = jnp.transpose(wf, (2, 3, 4, 1, 0)).reshape(kt, 4 * c_in, c_out)
    return w2, b2


def _pool_matrices(T, p1):
    """Pre-shifted 0/1 window matrices for the commuted pool_time:
    pool6[k, i, t] = 1  iff  k + POOL_S*i <= t < k + POOL_S*i + POOL_K."""
    k = jnp.arange(KT)[:, None, None]
    i = jnp.arange(p1)[None, :, None] * POOL_S
    t = jnp.arange(T)[None, None, :]
    return ((t >= k + i) & (t < k + i + POOL_K)).astype(jnp.float32)


def _final_time_weights(t2):
    """pool_time2 + AdaptiveAvgPool3d((1,1,1)) as per-frame weights
    count_j(t in window j) / (POOL_K * n_windows); weights sum to 1."""
    nj = (t2 - POOL_K) // POOL_S + 1
    j = jnp.arange(nj)[:, None] * POOL_S
    t = jnp.arange(t2)[None, :]
    counts = ((t >= j) & (t < j + POOL_K)).astype(jnp.float32).sum(axis=0)
    return counts / float(POOL_K * nj)                  # (t2,)


# ----------------------------------------------------------------------------
# Forward pass (matches torch Conv3d.forward, BN in eval mode)
# ----------------------------------------------------------------------------
def conv3d_forward(params, x_ncdhw):
    N, c_in, T, H, W = x_ncdhw.shape
    assert c_in == 1 and H == 3 and W == 3, (
        "kernel is specialized to the module's canonical 1 x 3 x 3 geometry")
    T1 = T - KT + 1                                     # after conv_time
    assert POOL_K % POOL_S == 0 and T1 >= POOL_K, "temporal length too short"
    P1 = (T1 - POOL_K) // POOL_S + 1                    # after pool_time
    T2 = P1 - KT + 1                                    # after conv_time2
    assert T2 >= POOL_K, "temporal length too short for pool_time2"

    # ---- trace-time weight preparation (would be cached in a deployment) -----
    w1, b1 = _fold_stage1(params['w_ct'], params['b_ct'],
                          params['w_cs'], params['b_cs'])
    w1 = w1 / float(POOL_K)          # fold the pool_time 1/40 into the weights
    w2, b2 = _fold_stage2(params['w_ct2'], params['b_ct2'],
                          params['w_cs2'], params['b_cs2'])
    pool6 = _pool_matrices(T, P1)                       # (6, P1, T) 0/1
    wfin = _final_time_weights(T2)                      # (T2,)

    # BatchNorm3d folded into linear, BatchNorm1d folded into linear2.
    # TODO(synk): eval-mode (running statistics) only; train-mode batch
    # statistics are not reproduced.
    s3 = params['bn3_gamma'] * lax.rsqrt(params['bn3_var'] + EPS)
    t3 = params['bn3_beta'] - params['bn3_mean'] * s3
    s1 = params['bn1_gamma'] * lax.rsqrt(params['bn1_var'] + EPS)
    t1 = params['bn1_beta'] - params['bn1_mean'] * s1
    wl1 = params['w_l1'].T * s3[:, None]                # (256, 512)
    bl1 = t3 @ params['w_l1'].T + params['b_l1']        # (512,)
    wl2 = params['w_l2'].T * s1[:, None]                # (512, 4)
    bl2 = t1 @ params['w_l2'].T + params['b_l2']        # (4,)
    # No nonlinearity anywhere -> propagate the conv biases forward through the
    # remaining linear ops; everything collapses into one (1, 4) bias vector.
    c2 = b1 @ w2.sum(axis=0) + b2                       # conv bias after stage 2
    b_out = ((c2 @ wl1 + bl1) @ wl2 + bl2).reshape(1, -1).astype(jnp.float32)

    c1 = w1.shape[2]        # 256 (4 spatial positions x 64 channels)
    c2d = w2.shape[2]       # 256
    hid = wl1.shape[1]      # 512
    n_cls = wl2.shape[1]    # 4
    S = H * W               # 9

    # channels-last, spatial flattened: (N, T, 9)
    x3 = x_ncdhw[:, 0].reshape(N, T, S).astype(jnp.bfloat16)

    out = pl.pallas_call(
        _fused_forward_kernel,
        out_shape=jax.ShapeDtypeStruct((N, 1, n_cls), jnp.float32),
        grid=(N,),
        in_specs=[
            pl.BlockSpec((1, T, S), lambda n: (n, 0, 0)),      # x, per sample
            pl.BlockSpec((KT, P1, T), lambda n: (0, 0, 0)),    # pool windows
            pl.BlockSpec((KT, S, c1), lambda n: (0, 0, 0)),    # stage-1 weights
            pl.BlockSpec((KT, c1, c2d), lambda n: (0, 0, 0)),  # stage-2 weights
            pl.BlockSpec((T2, 1), lambda n: (0, 0)),           # final time weights
            pl.BlockSpec((c2d, hid), lambda n: (0, 0)),        # BN3-folded linear
            pl.BlockSpec((hid, n_cls), lambda n: (0, 0)),      # BN1-folded linear2
            pl.BlockSpec((1, n_cls), lambda n: (0, 0)),        # folded bias
        ],
        out_specs=pl.BlockSpec((1, 1, n_cls), lambda n: (n, 0, 0)),
        compiler_params=pltpu.CompilerParams(
            dimension_semantics=("parallel",)),
    )(x3,
      pool6.astype(jnp.bfloat16),
      w1.astype(jnp.bfloat16),
      w2.astype(jnp.bfloat16),
      wfin.reshape(T2, 1).astype(jnp.float32),
      wl1.astype(jnp.bfloat16),
      wl2.astype(jnp.bfloat16),
      b_out)

    return out.reshape(N, n_cls)


# ----------------------------------------------------------------------------
# Plain-JAX f32 reference (op-by-op, BN in eval mode) for a tolerance check
# ----------------------------------------------------------------------------
def reference_forward(params, x):
    dn = ('NCDHW', 'OIDHW', 'NCDHW')

    def conv(v, w, b):
        y = lax.conv_general_dilated(v, w, (1, 1, 1), 'VALID',
                                     dimension_numbers=dn)
        return y + b.reshape(1, -1, 1, 1, 1)

    def avgpool_t(v):
        s = lax.reduce_window(v, 0.0, lax.add, (1, 1, POOL_K, 1, 1),
                              (1, 1, POOL_S, 1, 1), 'VALID')
        return s / float(POOL_K)

    h = conv(x, params['w_ct'], params['b_ct'])
    h = conv(h, params['w_cs'], params['b_cs'])
    h = avgpool_t(h)
    h = conv(h, params['w_ct2'], params['b_ct2'])
    h = conv(h, params['w_cs2'], params['b_cs2'])
    h = avgpool_t(h)
    s3 = params['bn3_gamma'] * lax.rsqrt(params['bn3_var'] + EPS)
    t3 = params['bn3_beta'] - params['bn3_mean'] * s3
    h = h * s3.reshape(1, -1, 1, 1, 1) + t3.reshape(1, -1, 1, 1, 1)
    h = h.mean(axis=(2, 3, 4))                           # adaptivepool + squeeze
    h = h @ params['w_l1'].T + params['b_l1']
    s1 = params['bn1_gamma'] * lax.rsqrt(params['bn1_var'] + EPS)
    t1 = params['bn1_beta'] - params['bn1_mean'] * s1
    h = h * s1 + t1
    return h @ params['w_l2'].T + params['b_l2']


# ----------------------------------------------------------------------------
# Parameters (deterministic synthetic init, torch-layout shapes)
# ----------------------------------------------------------------------------
def init_params(key):
    ks = jax.random.split(key, 20)

    def unif(k, shape, fan_in):
        bound = 1.0 / float(fan_in) ** 0.5
        return jax.random.uniform(k, shape, jnp.float32, -bound, bound)

    return {
        'w_ct': unif(ks[0], (32, 1, 6, 1, 1), 6),         # conv_time
        'b_ct': unif(ks[1], (32,), 6),
        'w_cs': unif(ks[2], (64, 32, 1, 2, 2), 32 * 4),   # conv_spat
        'b_cs': unif(ks[3], (64,), 32 * 4),
        'w_ct2': unif(ks[4], (128, 64, 6, 1, 1), 64 * 6),  # conv_time2
        'b_ct2': unif(ks[5], (128,), 64 * 6),
        'w_cs2': unif(ks[6], (256, 128, 1, 2, 2), 128 * 4),  # conv_spat2
        'b_cs2': unif(ks[7], (256,), 128 * 4),
        'bn3_gamma': jax.random.uniform(ks[8], (256,), jnp.float32, 0.5, 1.5),
        'bn3_beta': jax.random.uniform(ks[9], (256,), jnp.float32, -0.5, 0.5),
        'bn3_mean': jax.random.uniform(ks[10], (256,), jnp.float32, -0.1, 0.1),
        'bn3_var': jax.random.uniform(ks[11], (256,), jnp.float32, 0.5, 1.5),
        'w_l1': unif(ks[12], (512, 256), 256),            # linear
        'b_l1': unif(ks[13], (512,), 256),
        'bn1_gamma': jax.random.uniform(ks[14], (512,), jnp.float32, 0.5, 1.5),
        'bn1_beta': jax.random.uniform(ks[15], (512,), jnp.float32, -0.5, 0.5),
        'bn1_mean': jax.random.uniform(ks[16], (512,), jnp.float32, -0.1, 0.1),
        'bn1_var': jax.random.uniform(ks[17], (512,), jnp.float32, 0.5, 1.5),
        'w_l2': unif(ks[18], (4, 512), 512),              # linear2
        'b_l2': unif(ks[19], (4,), 512),
    }


if __name__ == "__main__":
    key = jax.random.PRNGKey(0)
    k_x, k_p = jax.random.split(key)

    # Minimal shape consistent with the module: two AvgPool3d((40,1,1), stride
    # 10) stages plus two (6,1,1) temporal convs require T >= 485; the two
    # (1,2,2) spatial convs ahead of the 256-wide head require H = W = 3.
    N, T, H, W = 2, 485, 3, 3
    x = jax.random.normal(k_x, (N, 1, T, H, W), jnp.float32)
    params = init_params(k_p)

    out = jax.jit(conv3d_forward)(params, x)
    out = jax.block_until_ready(out)
    assert out.shape == (N, 4) and out.dtype == jnp.float32

    ref = jax.block_until_ready(jax.jit(reference_forward)(params, x))
    # bf16 MXU operands with f32 accumulation -> loose tolerance vs f32 ref.
    np.testing.assert_allclose(np.asarray(out), np.asarray(ref),
                               rtol=0.08, atol=0.04)
    print("KERNEL_OK")
</pallas_src>

<mosaic_0001>
module attributes {stable_mosaic.version = 11 : i64} {
  func.func @_fused_forward_kernel(%arg0: i32, %arg1: memref<1x485x9xbf16, #tpu.memory_space<vmem>>, %arg2: memref<6x45x485xbf16, #tpu.memory_space<vmem>>, %arg3: memref<6x9x256xbf16, #tpu.memory_space<vmem>>, %arg4: memref<6x256x256xbf16, #tpu.memory_space<vmem>>, %arg5: memref<40x1xf32, #tpu.memory_space<vmem>>, %arg6: memref<256x512xbf16, #tpu.memory_space<vmem>>, %arg7: memref<512x4xbf16, #tpu.memory_space<vmem>>, %arg8: memref<1x4xf32, #tpu.memory_space<vmem>>, %arg9: memref<1x1x4xf32, #tpu.memory_space<vmem>>) attributes {dimension_semantics = [#tpu.dimension_semantics<parallel>], iteration_bounds = array<i64: 2>, scalar_prefetch = 0 : i64, scratch_operands = 0 : i64, tpu.core_type = #tpu.core_type<tc>, window_params = [{transform_indices = @transform_0, window_bounds = array<i64: 1, 485, 9>}, {pipeline_mode = #tpu.pipeline_mode<synchronous>, transform_indices = @transform_1, window_bounds = array<i64: 6, 45, 485>}, {pipeline_mode = #tpu.pipeline_mode<synchronous>, transform_indices = @transform_2, window_bounds = array<i64: 6, 9, 256>}, {pipeline_mode = #tpu.pipeline_mode<synchronous>, transform_indices = @transform_3, window_bounds = array<i64: 6, 256, 256>}, {pipeline_mode = #tpu.pipeline_mode<synchronous>, transform_indices = @transform_4, window_bounds = array<i64: 40, 1>}, {pipeline_mode = #tpu.pipeline_mode<synchronous>, transform_indices = @transform_5, window_bounds = array<i64: 256, 512>}, {pipeline_mode = #tpu.pipeline_mode<synchronous>, transform_indices = @transform_6, window_bounds = array<i64: 512, 4>}, {pipeline_mode = #tpu.pipeline_mode<synchronous>, transform_indices = @transform_7, window_bounds = array<i64: 1, 4>}, {transform_indices = @transform_8, window_bounds = array<i64: 1, 1, 4>}]} {
    %c0 = arith.constant 0 : index
    %c0_0 = arith.constant 0 : index
    %c0_1 = arith.constant 0 : index
    %0 = vector.load %arg1[%c0, %c0_0, %c0_1] : memref<1x485x9xbf16, #tpu.memory_space<vmem>>, vector<1x485x9xbf16>
    %1 = vector.shape_cast %0 : vector<1x485x9xbf16> to vector<485x9xbf16>
    %cst = arith.constant 0.000000e+00 : f32
    %2 = vector.broadcast %cst : f32 to vector<45x256xf32>
    %c0_2 = arith.constant 0 : index
    %c0_3 = arith.constant 0 : index
    %c0_4 = arith.constant 0 : index
    %3 = vector.load %arg2[%c0_2, %c0_3, %c0_4] : memref<6x45x485xbf16, #tpu.memory_space<vmem>>, vector<1x45x485xbf16>
    %4 = vector.shape_cast %3 : vector<1x45x485xbf16> to vector<45x485xbf16>
    %cst_5 = arith.constant dense<0.000000e+00> : vector<45x9xf32>
    %5 = tpu.matmul %4, %1, %cst_5 {dimension_numbers = #tpu.dot_dimension_numbers<[1], [0], [0], [1], [0, 0, 1, 1], [], []>} : vector<45x485xbf16>, vector<485x9xbf16>, vector<45x9xf32> -> vector<45x9xf32>
    %6 = arith.truncf %5 : vector<45x9xf32> to vector<45x9xbf16>
    %c0_6 = arith.constant 0 : index
    %c0_7 = arith.constant 0 : index
    %c0_8 = arith.constant 0 : index
    %7 = vector.load %arg3[%c0_6, %c0_7, %c0_8] : memref<6x9x256xbf16, #tpu.memory_space<vmem>>, vector<1x9x256xbf16>
    %8 = vector.shape_cast %7 : vector<1x9x256xbf16> to vector<9x256xbf16>
    %cst_9 = arith.constant dense<0.000000e+00> : vector<45x256xf32>
    %9 = tpu.matmul %6, %8, %cst_9 {dimension_numbers = #tpu.dot_dimension_numbers<[1], [0], [0], [1], [0, 0, 1, 1], [], []>} : vector<45x9xbf16>, vector<9x256xbf16>, vector<45x256xf32> -> vector<45x256xf32>
    %10 = arith.addf %2, %9 : vector<45x256xf32>
    %c1 = arith.constant 1 : index
    %c0_10 = arith.constant 0 : index
    %c0_11 = arith.constant 0 : index
    %11 = vector.load %arg2[%c1, %c0_10, %c0_11] : memref<6x45x485xbf16, #tpu.memory_space<vmem>>, vector<1x45x485xbf16>
    %12 = vector.shape_cast %11 : vector<1x45x485xbf16> to vector<45x485xbf16>
    %cst_12 = arith.constant dense<0.000000e+00> : vector<45x9xf32>
    %13 = tpu.matmul %12, %1, %cst_12 {dimension_numbers = #tpu.dot_dimension_numbers<[1], [0], [0], [1], [0, 0, 1, 1], [], []>} : vector<45x485xbf16>, vector<485x9xbf16>, vector<45x9xf32> -> vector<45x9xf32>
    %14 = arith.truncf %13 : vector<45x9xf32> to vector<45x9xbf16>
    %c1_13 = arith.constant 1 : index
    %c0_14 = arith.constant 0 : index
    %c0_15 = arith.constant 0 : index
    %15 = vector.load %arg3[%c1_13, %c0_14, %c0_15] : memref<6x9x256xbf16, #tpu.memory_space<vmem>>, vector<1x9x256xbf16>
    %16 = vector.shape_cast %15 : vector<1x9x256xbf16> to vector<9x256xbf16>
    %cst_16 = arith.constant dense<0.000000e+00> : vector<45x256xf32>
    %17 = tpu.matmul %14, %16, %cst_16 {dimension_numbers = #tpu.dot_dimension_numbers<[1], [0], [0], [1], [0, 0, 1, 1], [], []>} : vector<45x9xbf16>, vector<9x256xbf16>, vector<45x256xf32> -> vector<45x256xf32>
    %18 = arith.addf %10, %17 : vector<45x256xf32>
    %c2 = arith.constant 2 : index
    %c0_17 = arith.constant 0 : index
    %c0_18 = arith.constant 0 : index
    %19 = vector.load %arg2[%c2, %c0_17, %c0_18] : memref<6x45x485xbf16, #tpu.memory_space<vmem>>, vector<1x45x485xbf16>
    %20 = vector.shape_cast %19 : vector<1x45x485xbf16> to vector<45x485xbf16>
    %cst_19 = arith.constant dense<0.000000e+00> : vector<45x9xf32>
    %21 = tpu.matmul %20, %1, %cst_19 {dimension_numbers = #tpu.dot_dimension_numbers<[1], [0], [0], [1], [0, 0, 1, 1], [], []>} : vector<45x485xbf16>, vector<485x9xbf16>, vector<45x9xf32> -> vector<45x9xf32>
    %22 = arith.truncf %21 : vector<45x9xf32> to vector<45x9xbf16>
    %c2_20 = arith.constant 2 : index
    %c0_21 = arith.constant 0 : index
    %c0_22 = arith.constant 0 : index
    %23 = vector.load %arg3[%c2_20, %c0_21, %c0_22] : memref<6x9x256xbf16, #tpu.memory_space<vmem>>, vector<1x9x256xbf16>
    %24 = vector.shape_cast %23 : vector<1x9x256xbf16> to vector<9x256xbf16>
    %cst_23 = arith.constant dense<0.000000e+00> : vector<45x256xf32>
    %25 = tpu.matmul %22, %24, %cst_23 {dimension_numbers = #tpu.dot_dimension_numbers<[1], [0], [0], [1], [0, 0, 1, 1], [], []>} : vector<45x9xbf16>, vector<9x256xbf16>, vector<45x256xf32> -> vector<45x256xf32>
    %26 = arith.addf %18, %25 : vector<45x256xf32>
    %c3 = arith.constant 3 : index
    %c0_24 = arith.constant 0 : index
    %c0_25 = arith.constant 0 : index
    %27 = vector.load %arg2[%c3, %c0_24, %c0_25] : memref<6x45x485xbf16, #tpu.memory_space<vmem>>, vector<1x45x485xbf16>
    %28 = vector.shape_cast %27 : vector<1x45x485xbf16> to vector<45x485xbf16>
    %cst_26 = arith.constant dense<0.000000e+00> : vector<45x9xf32>
    %29 = tpu.matmul %28, %1, %cst_26 {dimension_numbers = #tpu.dot_dimension_numbers<[1], [0], [0], [1], [0, 0, 1, 1], [], []>} : vector<45x485xbf16>, vector<485x9xbf16>, vector<45x9xf32> -> vector<45x9xf32>
    %30 = arith.truncf %29 : vector<45x9xf32> to vector<45x9xbf16>
    %c3_27 = arith.constant 3 : index
    %c0_28 = arith.constant 0 : index
    %c0_29 = arith.constant 0 : index
    %31 = vector.load %arg3[%c3_27, %c0_28, %c0_29] : memref<6x9x256xbf16, #tpu.memory_space<vmem>>, vector<1x9x256xbf16>
    %32 = vector.shape_cast %31 : vector<1x9x256xbf16> to vector<9x256xbf16>
    %cst_30 = arith.constant dense<0.000000e+00> : vector<45x256xf32>
    %33 = tpu.matmul %30, %32, %cst_30 {dimension_numbers = #tpu.dot_dimension_numbers<[1], [0], [0], [1], [0, 0, 1, 1], [], []>} : vector<45x9xbf16>, vector<9x256xbf16>, vector<45x256xf32> -> vector<45x256xf32>
    %34 = arith.addf %26, %33 : vector<45x256xf32>
    %c4 = arith.constant 4 : index
    %c0_31 = arith.constant 0 : index
    %c0_32 = arith.constant 0 : index
    %35 = vector.load %arg2[%c4, %c0_31, %c0_32] : memref<6x45x485xbf16, #tpu.memory_space<vmem>>, vector<1x45x485xbf16>
    %36 = vector.shape_cast %35 : vector<1x45x485xbf16> to vector<45x485xbf16>
    %cst_33 = arith.constant dense<0.000000e+00> : vector<45x9xf32>
    %37 = tpu.matmul %36, %1, %cst_33 {dimension_numbers = #tpu.dot_dimension_numbers<[1], [0], [0], [1], [0, 0, 1, 1], [], []>} : vector<45x485xbf16>, vector<485x9xbf16>, vector<45x9xf32> -> vector<45x9xf32>
    %38 = arith.truncf %37 : vector<45x9xf32> to vector<45x9xbf16>
    %c4_34 = arith.constant 4 : index
    %c0_35 = arith.constant 0 : index
    %c0_36 = arith.constant 0 : index
    %39 = vector.load %arg3[%c4_34, %c0_35, %c0_36] : memref<6x9x256xbf16, #tpu.memory_space<vmem>>, vector<1x9x256xbf16>
    %40 = vector.shape_cast %39 : vector<1x9x256xbf16> to vector<9x256xbf16>
    %cst_37 = arith.constant dense<0.000000e+00> : vector<45x256xf32>
    %41 = tpu.matmul %38, %40, %cst_37 {dimension_numbers = #tpu.dot_dimension_numbers<[1], [0], [0], [1], [0, 0, 1, 1], [], []>} : vector<45x9xbf16>, vector<9x256xbf16>, vector<45x256xf32> -> vector<45x256xf32>
    %42 = arith.addf %34, %41 : vector<45x256xf32>
    %c5 = arith.constant 5 : index
    %c0_38 = arith.constant 0 : index
    %c0_39 = arith.constant 0 : index
    %43 = vector.load %arg2[%c5, %c0_38, %c0_39] : memref<6x45x485xbf16, #tpu.memory_space<vmem>>, vector<1x45x485xbf16>
    %44 = vector.shape_cast %43 : vector<1x45x485xbf16> to vector<45x485xbf16>
    %cst_40 = arith.constant dense<0.000000e+00> : vector<45x9xf32>
    %45 = tpu.matmul %44, %1, %cst_40 {dimension_numbers = #tpu.dot_dimension_numbers<[1], [0], [0], [1], [0, 0, 1, 1], [], []>} : vector<45x485xbf16>, vector<485x9xbf16>, vector<45x9xf32> -> vector<45x9xf32>
    %46 = arith.truncf %45 : vector<45x9xf32> to vector<45x9xbf16>
    %c5_41 = arith.constant 5 : index
    %c0_42 = arith.constant 0 : index
    %c0_43 = arith.constant 0 : index
    %47 = vector.load %arg3[%c5_41, %c0_42, %c0_43] : memref<6x9x256xbf16, #tpu.memory_space<vmem>>, vector<1x9x256xbf16>
    %48 = vector.shape_cast %47 : vector<1x9x256xbf16> to vector<9x256xbf16>
    %cst_44 = arith.constant dense<0.000000e+00> : vector<45x256xf32>
    %49 = tpu.matmul %46, %48, %cst_44 {dimension_numbers = #tpu.dot_dimension_numbers<[1], [0], [0], [1], [0, 0, 1, 1], [], []>} : vector<45x9xbf16>, vector<9x256xbf16>, vector<45x256xf32> -> vector<45x256xf32>
    %50 = arith.addf %42, %49 : vector<45x256xf32>
    %cst_45 = arith.constant 0.000000e+00 : f32
    %51 = vector.broadcast %cst_45 : f32 to vector<40x256xf32>
    %52 = vector.extract_strided_slice %50 {offsets = [0, 0], sizes = [40, 256], strides = [1, 1]} : vector<45x256xf32> to vector<40x256xf32>
    %53 = arith.truncf %52 : vector<40x256xf32> to vector<40x256xbf16>
    %c0_46 = arith.constant 0 : index
    %c0_47 = arith.constant 0 : index
    %c0_48 = arith.constant 0 : index
    %54 = vector.load %arg4[%c0_46, %c0_47, %c0_48] : memref<6x256x256xbf16, #tpu.memory_space<vmem>>, vector<1x256x256xbf16>
    %55 = vector.shape_cast %54 : vector<1x256x256xbf16> to vector<256x256xbf16>
    %cst_49 = arith.constant dense<0.000000e+00> : vector<40x256xf32>
    %56 = tpu.matmul %53, %55, %cst_49 {dimension_numbers = #tpu.dot_dimension_numbers<[1], [0], [0], [1], [0, 0, 1, 1], [], []>} : vector<40x256xbf16>, vector<256x256xbf16>, vector<40x256xf32> -> vector<40x256xf32>
    %57 = arith.addf %51, %56 : vector<40x256xf32>
    %58 = vector.extract_strided_slice %50 {offsets = [1, 0], sizes = [40, 256], strides = [1, 1]} : vector<45x256xf32> to vector<40x256xf32>
    %59 = arith.truncf %58 : vector<40x256xf32> to vector<40x256xbf16>
    %c1_50 = arith.constant 1 : index
    %c0_51 = arith.constant 0 : index
    %c0_52 = arith.constant 0 : index
    %60 = vector.load %arg4[%c1_50, %c0_51, %c0_52] : memref<6x256x256xbf16, #tpu.memory_space<vmem>>, vector<1x256x256xbf16>
    %61 = vector.shape_cast %60 : vector<1x256x256xbf16> to vector<256x256xbf16>
    %cst_53 = arith.constant dense<0.000000e+00> : vector<40x256xf32>
    %62 = tpu.matmul %59, %61, %cst_53 {dimension_numbers = #tpu.dot_dimension_numbers<[1], [0], [0], [1], [0, 0, 1, 1], [], []>} : vector<40x256xbf16>, vector<256x256xbf16>, vector<40x256xf32> -> vector<40x256xf32>
    %63 = arith.addf %57, %62 : vector<40x256xf32>
    %64 = vector.extract_strided_slice %50 {offsets = [2, 0], sizes = [40, 256], strides = [1, 1]} : vector<45x256xf32> to vector<40x256xf32>
    %65 = arith.truncf %64 : vector<40x256xf32> to vector<40x256xbf16>
    %c2_54 = arith.constant 2 : index
    %c0_55 = arith.constant 0 : index
    %c0_56 = arith.constant 0 : index
    %66 = vector.load %arg4[%c2_54, %c0_55, %c0_56] : memref<6x256x256xbf16, #tpu.memory_space<vmem>>, vector<1x256x256xbf16>
    %67 = vector.shape_cast %66 : vector<1x256x256xbf16> to vector<256x256xbf16>
    %cst_57 = arith.constant dense<0.000000e+00> : vector<40x256xf32>
    %68 = tpu.matmul %65, %67, %cst_57 {dimension_numbers = #tpu.dot_dimension_numbers<[1], [0], [0], [1], [0, 0, 1, 1], [], []>} : vector<40x256xbf16>, vector<256x256xbf16>, vector<40x256xf32> -> vector<40x256xf32>
    %69 = arith.addf %63, %68 : vector<40x256xf32>
    %70 = vector.extract_strided_slice %50 {offsets = [3, 0], sizes = [40, 256], strides = [1, 1]} : vector<45x256xf32> to vector<40x256xf32>
    %71 = arith.truncf %70 : vector<40x256xf32> to vector<40x256xbf16>
    %c3_58 = arith.constant 3 : index
    %c0_59 = arith.constant 0 : index
    %c0_60 = arith.constant 0 : index
    %72 = vector.load %arg4[%c3_58, %c0_59, %c0_60] : memref<6x256x256xbf16, #tpu.memory_space<vmem>>, vector<1x256x256xbf16>
    %73 = vector.shape_cast %72 : vector<1x256x256xbf16> to vector<256x256xbf16>
    %cst_61 = arith.constant dense<0.000000e+00> : vector<40x256xf32>
    %74 = tpu.matmul %71, %73, %cst_61 {dimension_numbers = #tpu.dot_dimension_numbers<[1], [0], [0], [1], [0, 0, 1, 1], [], []>} : vector<40x256xbf16>, vector<256x256xbf16>, vector<40x256xf32> -> vector<40x256xf32>
    %75 = arith.addf %69, %74 : vector<40x256xf32>
    %76 = vector.extract_strided_slice %50 {offsets = [4, 0], sizes = [40, 256], strides = [1, 1]} : vector<45x256xf32> to vector<40x256xf32>
    %77 = arith.truncf %76 : vector<40x256xf32> to vector<40x256xbf16>
    %c4_62 = arith.constant 4 : index
    %c0_63 = arith.constant 0 : index
    %c0_64 = arith.constant 0 : index
    %78 = vector.load %arg4[%c4_62, %c0_63, %c0_64] : memref<6x256x256xbf16, #tpu.memory_space<vmem>>, vector<1x256x256xbf16>
    %79 = vector.shape_cast %78 : vector<1x256x256xbf16> to vector<256x256xbf16>
    %cst_65 = arith.constant dense<0.000000e+00> : vector<40x256xf32>
    %80 = tpu.matmul %77, %79, %cst_65 {dimension_numbers = #tpu.dot_dimension_numbers<[1], [0], [0], [1], [0, 0, 1, 1], [], []>} : vector<40x256xbf16>, vector<256x256xbf16>, vector<40x256xf32> -> vector<40x256xf32>
    %81 = arith.addf %75, %80 : vector<40x256xf32>
    %82 = vector.extract_strided_slice %50 {offsets = [5, 0], sizes = [40, 256], strides = [1, 1]} : vector<45x256xf32> to vector<40x256xf32>
    %83 = arith.truncf %82 : vector<40x256xf32> to vector<40x256xbf16>
    %c5_66 = arith.constant 5 : index
    %c0_67 = arith.constant 0 : index
    %c0_68 = arith.constant 0 : index
    %84 = vector.load %arg4[%c5_66, %c0_67, %c0_68] : memref<6x256x256xbf16, #tpu.memory_space<vmem>>, vector<1x256x256xbf16>
    %85 = vector.shape_cast %84 : vector<1x256x256xbf16> to vector<256x256xbf16>
    %cst_69 = arith.constant dense<0.000000e+00> : vector<40x256xf32>
    %86 = tpu.matmul %83, %85, %cst_69 {dimension_numbers = #tpu.dot_dimension_numbers<[1], [0], [0], [1], [0, 0, 1, 1], [], []>} : vector<40x256xbf16>, vector<256x256xbf16>, vector<40x256xf32> -> vector<40x256xf32>
    %87 = arith.addf %81, %86 : vector<40x256xf32>
    %c0_70 = arith.constant 0 : index
    %c0_71 = arith.constant 0 : index
    %88 = vector.load %arg5[%c0_70, %c0_71] : memref<40x1xf32, #tpu.memory_space<vmem>>, vector<40x1xf32>
    %89 = vector.broadcast %88 : vector<40x1xf32> to vector<40x256xf32>
    %90 = arith.mulf %87, %89 : vector<40x256xf32>
    %cst_72 = arith.constant dense<0.000000e+00> : vector<256xf32>
    %91 = vector.multi_reduction <add>, %90, %cst_72 [0] : vector<40x256xf32> to vector<256xf32>
    %92 = vector.shape_cast %91 : vector<256xf32> to vector<1x256xf32>
    %93 = arith.truncf %92 : vector<1x256xf32> to vector<1x256xbf16>
    %c0_73 = arith.constant 0 : index
    %c0_74 = arith.constant 0 : index
    %94 = vector.load %arg6[%c0_73, %c0_74] : memref<256x512xbf16, #tpu.memory_space<vmem>>, vector<256x512xbf16>
    %cst_75 = arith.constant dense<0.000000e+00> : vector<1x512xf32>
    %95 = tpu.matmul %93, %94, %cst_75 {dimension_numbers = #tpu.dot_dimension_numbers<[1], [0], [0], [1], [0, 0, 1, 1], [], []>} : vector<1x256xbf16>, vector<256x512xbf16>, vector<1x512xf32> -> vector<1x512xf32>
    %96 = arith.truncf %95 : vector<1x512xf32> to vector<1x512xbf16>
    %c0_76 = arith.constant 0 : index
    %c0_77 = arith.constant 0 : index
    %97 = vector.load %arg7[%c0_76, %c0_77] : memref<512x4xbf16, #tpu.memory_space<vmem>>, vector<512x4xbf16>
    %cst_78 = arith.constant dense<0.000000e+00> : vector<1x4xf32>
    %98 = tpu.matmul %96, %97, %cst_78 {dimension_numbers = #tpu.dot_dimension_numbers<[1], [0], [0], [1], [0, 0, 1, 1], [], []>} : vector<1x512xbf16>, vector<512x4xbf16>, vector<1x4xf32> -> vector<1x4xf32>
    %c0_79 = arith.constant 0 : index
    %c0_80 = arith.constant 0 : index
    %99 = vector.load %arg8[%c0_79, %c0_80] : memref<1x4xf32, #tpu.memory_space<vmem>>, vector<1x4xf32>
    %100 = arith.addf %98, %99 : vector<1x4xf32>
    %c0_81 = arith.constant 0 : index
    %c0_82 = arith.constant 0 : index
    %c0_83 = arith.constant 0 : index
    %101 = vector.load %arg9[%c0_81, %c0_82, %c0_83] : memref<1x1x4xf32, #tpu.memory_space<vmem>>, vector<1x1x4xf32>
    %102 = vector.shape_cast %101 : vector<1x1x4xf32> to vector<1x4xf32>
    %103 = vector.shape_cast %100 : vector<1x4xf32> to vector<1x1x4xf32>
    tpu.vector_store %arg9[%c0_81, %c0_82, %c0_83], %103 {strides = array<i32>} : memref<1x1x4xf32, #tpu.memory_space<vmem>>, vector<1x1x4xf32>,
    return
  }
  func.func @transform_0(%arg0: i32) -> (i32, i32, i32) {
    %c0_i32 = arith.constant 0 : i32
    %c0_i32_0 = arith.constant 0 : i32
    %c0_i32_1 = arith.constant 0 : i32
    return %arg0, %c0_i32, %c0_i32_0 : i32, i32, i32
  }
  func.func @transform_1(%arg0: i32) -> (i32, i32, i32) {
    %c0_i32 = arith.constant 0 : i32
    %c0_i32_0 = arith.constant 0 : i32
    %c0_i32_1 = arith.constant 0 : i32
    %c0_i32_2 = arith.constant 0 : i32
    return %c0_i32, %c0_i32_0, %c0_i32_1 : i32, i32, i32
  }
  func.func @transform_2(%arg0: i32) -> (i32, i32, i32) {
    %c0_i32 = arith.constant 0 : i32
    %c0_i32_0 = arith.constant 0 : i32
    %c0_i32_1 = arith.constant 0 : i32
    %c0_i32_2 = arith.constant 0 : i32
    return %c0_i32, %c0_i32_0, %c0_i32_1 : i32, i32, i32
  }
  func.func @transform_3(%arg0: i32) -> (i32, i32, i32) {
    %c0_i32 = arith.constant 0 : i32
    %c0_i32_0 = arith.constant 0 : i32
    %c0_i32_1 = arith.constant 0 : i32
    %c0_i32_2 = arith.constant 0 : i32
    return %c0_i32, %c0_i32_0, %c0_i32_1 : i32, i32, i32
  }
  func.func @transform_4(%arg0: i32) -> (i32, i32) {
    %c0_i32 = arith.constant 0 : i32
    %c0_i32_0 = arith.constant 0 : i32
    %c0_i32_1 = arith.constant 0 : i32
    return %c0_i32, %c0_i32_0 : i32, i32
  }
  func.func @transform_5(%arg0: i32) -> (i32, i32) {
    %c0_i32 = arith.constant 0 : i32
    %c0_i32_0 = arith.constant 0 : i32
    %c0_i32_1 = arith.constant 0 : i32
    return %c0_i32, %c0_i32_0 : i32, i32
  }
  func.func @transform_6(%arg0: i32) -> (i32, i32) {
    %c0_i32 = arith.constant 0 : i32
    %c0_i32_0 = arith.constant 0 : i32
    %c0_i32_1 = arith.constant 0 : i32
    return %c0_i32, %c0_i32_0 : i32, i32
  }
  func.func @transform_7(%arg0: i32) -> (i32, i32) {
    %c0_i32 = arith.constant 0 : i32
    %c0_i32_0 = arith.constant 0 : i32
    %c0_i32_1 = arith.constant 0 : i32
    return %c0_i32, %c0_i32_0 : i32, i32
  }
  func.func @transform_8(%arg0: i32) -> (i32, i32, i32) {
    %c0_i32 = arith.constant 0 : i32
    %c0_i32_0 = arith.constant 0 : i32
    %c0_i32_1 = arith.constant 0 : i32
    return %arg0, %c0_i32, %c0_i32_0 : i32, i32, i32
  }
}

</mosaic_0001>

<llo_original>
// kernel: tile.8
$region0: #{tile.8}
  #allocation0 [shape = 's32[1]{0}', space=sflag, size = 0x4, scoped, tag = 'scoped memory for tile.8']
  %s0 = inlined_call_operand.vmem [shape: f32[64], index: 0, kind: input, shape index: {}]
  %s1 = inlined_call_operand.vmem [shape: f32[4,64], index: 1, kind: output, shape index: {}]
  // Predicated region
  $region2: #{tile.8} parent=0 // pred_check
    _
  $region3: #{tile.8} parent=0 // pred_check_branch
    %3 = sbr.rel (0) target = $region5
  $region4: #{tile.8} parent=0 // pred_region
    _
  $region5: #{tile.8} parent=0 // pred_fallthru
    _
  %v4 = vld [vmem:[%s0] ss:$0 sm:$0xff]
  %5 = vst [vmem:[%s1] sm:$0xf] %v4

// kernel: tile.9
$region0: #{tile.9}
  %s0 = inlined_call_operand.vmem [shape: f32[4,64], index: 0, kind: input, shape index: {}]
  %s1 = inlined_call_operand.vmem [shape: f32[256], index: 1, kind: output, shape index: {}]
  $region1: #{tile.9} parent=0
    #allocation0 [shape = 'u8[4096]{0}', space=vmem, size = 0x1000, scoped, tag = 'scoped mem for output reshape']
    #allocation1 [shape = 'u8[4096]{0}', space=vmem, size = 0x1000, scoped, tag = 'scoped mem for input reshape']
    %s3 = sshllo.u32 0, 4
    %v4 = vld [vmem:[%s0] sm:%s3]
    %5 = vst [vmem:[#allocation1] sm:%s3] %v4
    %s6 = smov 3
    %v7 = vld [vmem:[#allocation1] ss:$2 sm:%s6]
    %vm8 = vcmask 523264
    %9 = vst.msk [vmem:[#allocation0] sm:$0x3] %vm8, %v7
    %s10 = scalar_lea.vmem [#allocation1], 1
    %s11 = smov 3
    %v12 = vld [vmem:[%s10] ss:$2 sm:%s11]
    %13 = vrot.lane.b32.xlu0 %v12, 64
    %v14 = vpop.permute.xlu0 %13
    %vm15 = vcmask 1048064
    %16 = vst.msk [vmem:[#allocation0] sm:$0x3] %vm15, %v14
    %s18 = sshllo.u32 0, 2
    %v20 = vld [vmem:[#allocation0] sm:%s18]
    %s21 = sshllo.u32 0, 2
    %22 = vst [vmem:[%s1] sm:%s21] %v20

// kernel: conv3d_forward.1
$region0: #{conv3d_forward.1}
  #allocation0 [shape = 'u32[]', space=smem, size = 0x4, offset = 0x4, fixed_abs, tag = 'smem constant byte address 0x4 - core index']
  #allocation1 [shape = 'u32[144,128]{1,0:T(1,128)}', space=vmem, size = 0x12000, scoped, tag = 'internal scratch']
  %s0 = inlined_call_operand.vmem [shape: bf16[2,485,9], index: 0, kind: input, shape index: {}]
  %s1 = inlined_call_operand.vmem [shape: bf16[6,45,485], index: 1, kind: input, shape index: {}]
  %s2 = inlined_call_operand.vmem [shape: bf16[6,9,256], index: 2, kind: input, shape index: {}]
  %s3 = inlined_call_operand.vmem [shape: bf16[6,256,256], index: 3, kind: input, shape index: {}]
  %s4 = inlined_call_operand.vmem [shape: f32[40,1], index: 4, kind: input, shape index: {}]
  %s5 = inlined_call_operand.vmem [shape: bf16[256,512], index: 5, kind: input, shape index: {}]
  %s6 = inlined_call_operand.vmem [shape: bf16[512,4], index: 6, kind: input, shape index: {}]
  %s7 = inlined_call_operand.vmem [shape: f32[1,4], index: 7, kind: input, shape index: {}]
  %s8 = inlined_call_operand.hbm [shape: f32[2,1,4], index: 8, kind: output, shape index: {}]
  %s9 = sld [smem:[#allocation0]]
  $region65: #{conv3d_forward.1} parent=0
    _
  %s11 = ssub.s32 1, %s9
  %s12 = scalar_select 0, %s11, %s9
  $region1: #{conv3d_forward.1} parent=0
    #allocation2 [shape = 'u8[1024]{0}', space=vmem, size = 0x400, scoped, tag = 'output window, operand 0']
    #allocation3 [shape = 's32[2]{0}', space=sflag, size = 0x8, scoped, tag = 'scoped memory for conv3d_forward.1']
    %13 = vsyncpa [#allocation3], 0
    %s14 = scalar_lea.sflag [#allocation3], 1
    %15 = vsyncpa %s14, 0
    loop: start=0, step=1, limit=4
    $region2: #{conv3d_forward.1} parent=1 // loop_pre_header
      _
    $region3: #{conv3d_forward.1} parent=1 // loop_header
      %s17 = sphi 0, %s21
      %p18 = scmp.ge.s32.totalorder %s17, 4
      %s27 = sphi 0, %s29
      %s30 = sphi 0, %s27
      %s31 = sphi 0, %s30
      %s47 = sphi 0, %s31
      %s51 = sphi 0, %s51
      %s53 = sphi 0, %s51
      %s54 = sphi 0, %s53
      %s68 = sphi 0, %s54
      %s72 = sphi 0, %s72
      %s74 = sphi 0, %s72
      %s75 = sphi 0, %s74
      %s89 = sphi 0, %s75
      %s93 = sphi 0, %s93
      %s95 = sphi 0, %s93
      %s96 = sphi 0, %s95
      %s110 = sphi 0, %s96
      %s114 = sphi 0, %s114
      %s116 = sphi 0, %s114
      %s117 = sphi 0, %s116
      %s131 = sphi 0, %s117
      %s135 = sphi 0, %s135
      %s137 = sphi 0, %s135
      %s138 = sphi 0, %s137
      %s152 = sphi 0, %s138
      %s156 = sphi 0, %s156
      %s158 = sphi 0, %s156
      %s159 = sphi 0, %s158
      %s173 = sphi 0, %s159
      %s177 = sphi 0, %s177
      %s179 = sphi 0, %s177
      %s180 = sphi 0, %s179
      %s194 = sphi 0, %s180
      %s200 = sphi 0, %s202
      %s203 = sphi 0, %s200
      %s204 = sphi 0, %s203
      %s220 = sphi 0, %s204
    $region4: #{conv3d_forward.1} parent=1 // loop_header_branch
      %20 = sbr.rel (%p18) target = $region8
    $region5: #{conv3d_forward.1} parent=1 // loop_body
      %s22 = ssub.s32 %s17, 1
      %s23 = ssub.s32 %s17, 2
      %s24 = sadd.s32 %s17, 1
      %s25 = ssub.s32 %s17, %s24
      %p26 = scmp.eq.s32.totalorder %s25, 0
      %s28 = sadd.s32 %s27, 1
      %s29 = scalar_select %p26, %s27, %s28
      %p32 = pneg %p26
      %p33 = scmp.eq.s32.totalorder %s17, 1
      %p34 = por %p32, %p33
      %p35 = scmp.ne.s32.totalorder %s27, %s30
      %p36 = scmp.eq.s32.totalorder %s17, 0
      %p37 = por %p35, %p36
      %p38 = scmp.ne.s32.totalorder %s27, %s30
      %p39 = scmp.eq.s32.totalorder %s22, 1
      %p40 = por %p38, %p39
      %p41 = scmp.ne.s32.totalorder %s30, %s31
      %p42 = scmp.eq.s32.totalorder %s22, 0
      %p43 = por %p41, %p42
      %p44 = scmp.ne.s32.totalorder %s30, %s31
      %p45 = scmp.eq.s32.totalorder %s23, 1
      %p46 = por %p44, %p45
      %p48 = scmp.ne.s32.totalorder %s31, %s47
      %p49 = scmp.eq.s32.totalorder %s23, 0
      %p50 = por %p48, %p49
      %s52 = sadd.s32 %s51, 1
      %p55 = scmp.eq.s32.totalorder %s17, 1
      %p56 = scmp.ne.s32.totalorder %s51, %s53
      %p57 = scmp.eq.s32.totalorder %s17, 0
      %p58 = por %p56, %p57
      %p59 = scmp.ne.s32.totalorder %s51, %s53
      %p60 = scmp.eq.s32.totalorder %s22, 1
      %p61 = por %p59, %p60
      %p62 = scmp.ne.s32.totalorder %s53, %s54
      %p63 = scmp.eq.s32.totalorder %s22, 0
      %p64 = por %p62, %p63
      %p65 = scmp.ne.s32.totalorder %s53, %s54
      %p66 = scmp.eq.s32.totalorder %s23, 1
      %p67 = por %p65, %p66
      %p69 = scmp.ne.s32.totalorder %s54, %s68
      %p70 = scmp.eq.s32.totalorder %s23, 0
      %p71 = por %p69, %p70
      %s73 = sadd.s32 %s72, 1
      %p76 = scmp.eq.s32.totalorder %s17, 1
      %p77 = scmp.ne.s32.totalorder %s72, %s74
      %p78 = scmp.eq.s32.totalorder %s17, 0
      %p79 = por %p77, %p78
      %p80 = scmp.ne.s32.totalorder %s72, %s74
      %p81 = scmp.eq.s32.totalorder %s22, 1
      %p82 = por %p80, %p81
      %p83 = scmp.ne.s32.totalorder %s74, %s75
      %p84 = scmp.eq.s32.totalorder %s22, 0
      %p85 = por %p83, %p84
      %p86 = scmp.ne.s32.totalorder %s74, %s75
      %p87 = scmp.eq.s32.totalorder %s23, 1
      %p88 = por %p86, %p87
      %p90 = scmp.ne.s32.totalorder %s75, %s89
      %p91 = scmp.eq.s32.totalorder %s23, 0
      %p92 = por %p90, %p91
      %s94 = sadd.s32 %s93, 1
      %p97 = scmp.eq.s32.totalorder %s17, 1
      %p98 = scmp.ne.s32.totalorder %s93, %s95
      %p99 = scmp.eq.s32.totalorder %s17, 0
      %p100 = por %p98, %p99
      %p101 = scmp.ne.s32.totalorder %s93, %s95
      %p102 = scmp.eq.s32.totalorder %s22, 1
      %p103 = por %p101, %p102
      %p104 = scmp.ne.s32.totalorder %s95, %s96
      %p105 = scmp.eq.s32.totalorder %s22, 0
      %p106 = por %p104, %p105
      %p107 = scmp.ne.s32.totalorder %s95, %s96
      %p108 = scmp.eq.s32.totalorder %s23, 1
      %p109 = por %p107, %p108
      %p111 = scmp.ne.s32.totalorder %s96, %s110
      %p112 = scmp.eq.s32.totalorder %s23, 0
      %p113 = por %p111, %p112
      %s115 = sadd.s32 %s114, 1
      %p118 = scmp.eq.s32.totalorder %s17, 1
      %p119 = scmp.ne.s32.totalorder %s114, %s116
      %p120 = scmp.eq.s32.totalorder %s17, 0
      %p121 = por %p119, %p120
      %p122 = scmp.ne.s32.totalorder %s114, %s116
      %p123 = scmp.eq.s32.totalorder %s22, 1
      %p124 = por %p122, %p123
      %p125 = scmp.ne.s32.totalorder %s116, %s117
      %p126 = scmp.eq.s32.totalorder %s22, 0
      %p127 = por %p125, %p126
      %p128 = scmp.ne.s32.totalorder %s116, %s117
      %p129 = scmp.eq.s32.totalorder %s23, 1
      %p130 = por %p128, %p129
      %p132 = scmp.ne.s32.totalorder %s117, %s131
      %p133 = scmp.eq.s32.totalorder %s23, 0
      %p134 = por %p132, %p133
      %s136 = sadd.s32 %s135, 1
      %p139 = scmp.eq.s32.totalorder %s17, 1
      %p140 = scmp.ne.s32.totalorder %s135, %s137
      %p141 = scmp.eq.s32.totalorder %s17, 0
      %p142 = por %p140, %p141
      %p143 = scmp.ne.s32.totalorder %s135, %s137
      %p144 = scmp.eq.s32.totalorder %s22, 1
      %p145 = por %p143, %p144
      %p146 = scmp.ne.s32.totalorder %s137, %s138
      %p147 = scmp.eq.s32.totalorder %s22, 0
      %p148 = por %p146, %p147
      %p149 = scmp.ne.s32.totalorder %s137, %s138
      %p150 = scmp.eq.s32.totalorder %s23, 1
      %p151 = por %p149, %p150
      %p153 = scmp.ne.s32.totalorder %s138, %s152
      %p154 = scmp.eq.s32.totalorder %s23, 0
      %p155 = por %p153, %p154
      %s157 = sadd.s32 %s156, 1
      %p160 = scmp.eq.s32.totalorder %s17, 1
      %p161 = scmp.ne.s32.totalorder %s156, %s158
      %p162 = scmp.eq.s32.totalorder %s17, 0
      %p163 = por %p161, %p162
      %p164 = scmp.ne.s32.totalorder %s156, %s158
      %p165 = scmp.eq.s32.totalorder %s22, 1
      %p166 = por %p164, %p165
      %p167 = scmp.ne.s32.totalorder %s158, %s159
      %p168 = scmp.eq.s32.totalorder %s22, 0
      %p169 = por %p167, %p168
      %p170 = scmp.ne.s32.totalorder %s158, %s159
      %p171 = scmp.eq.s32.totalorder %s23, 1
      %p172 = por %p170, %p171
      %p174 = scmp.ne.s32.totalorder %s159, %s173
      %p175 = scmp.eq.s32.totalorder %s23, 0
      %p176 = por %p174, %p175
      %s178 = sadd.s32 %s177, 1
      %p181 = scmp.eq.s32.totalorder %s17, 1
      %p182 = scmp.ne.s32.totalorder %s177, %s179
      %p183 = scmp.eq.s32.totalorder %s17, 0
      %p184 = por %p182, %p183
      %p185 = scmp.ne.s32.totalorder %s177, %s179
      %p186 = scmp.eq.s32.totalorder %s22, 1
      %p187 = por %p185, %p186
      %p188 = scmp.ne.s32.totalorder %s179, %s180
      %p189 = scmp.eq.s32.totalorder %s22, 0
      %p190 = por %p188, %p189
      %p191 = scmp.ne.s32.totalorder %s179, %s180
      %p192 = scmp.eq.s32.totalorder %s23, 1
      %p193 = por %p191, %p192
      %p195 = scmp.ne.s32.totalorder %s180, %s194
      %p196 = scmp.eq.s32.totalorder %s23, 0
      %p197 = por %p195, %p196
      %s198 = ssub.s32 %s17, %s24
      %p199 = scmp.eq.s32.totalorder %s198, 0
      %s201 = sadd.s32 %s200, 1
      %s202 = scalar_select %p199, %s200, %s201
      %p205 = pneg %p199
      %p206 = scmp.eq.s32.totalorder %s17, 1
      %p207 = por %p205, %p206
      %p208 = scmp.ne.s32.totalorder %s200, %s203
      %p209 = scmp.eq.s32.totalorder %s17, 0
      %p210 = por %p208, %p209
      %p211 = scmp.ne.s32.totalorder %s200, %s203
      %p212 = scmp.eq.s32.totalorder %s22, 1
      %p213 = por %p211, %p212
      %p214 = scmp.ne.s32.totalorder %s203, %s204
      %p215 = scmp.eq.s32.totalorder %s22, 0
      %p216 = por %p214, %p215
      %p217 = scmp.ne.s32.totalorder %s203, %s204
      %p218 = scmp.eq.s32.totalorder %s23, 1
      %p219 = por %p217, %p218
      %p221 = scmp.ne.s32.totalorder %s204, %s220
      %p222 = scmp.eq.s32.totalorder %s23, 0
      %p223 = por %p221, %p222
      %p224 = scmp.le.s32.totalorder 1, %s17
      %p225 = scmp.lt.s32.totalorder %s17, 3
      %p226 = pnand %p224, %p225
      %p227 = pneg %p226
      // Predicated region
      $region9: #{conv3d_forward.1} parent=5 // pred_check
        _
      $region10: #{conv3d_forward.1} parent=5 // pred_check_branch
        %229 = sbr.rel (%p226) target = $region12
      $region11: #{conv3d_forward.1} parent=5 // pred_region
        %s230 = ssub.s32 %s17, 1
        // Predicated region
        $region13: #{conv3d_forward.1} parent=11 // pred_check
          %p231 = pneg %p64
        $region14: #{conv3d_forward.1} parent=11 // pred_check_branch
          %233 = sbr.rel (%p231) target = $region16
        $region15: #{conv3d_forward.1} parent=11 // pred_region
          _
        $region16: #{conv3d_forward.1} parent=11 // pred_fallthru
          _
        // Predicated region
        $region17: #{conv3d_forward.1} parent=11 // pred_check
          %p234 = pneg %p85
        $region18: #{conv3d_forward.1} parent=11 // pred_check_branch
          %236 = sbr.rel (%p234) target = $region20
        $region19: #{conv3d_forward.1} parent=11 // pred_region
          _
        $region20: #{conv3d_forward.1} parent=11 // pred_fallthru
          _
        // Predicated region
        $region21: #{conv3d_forward.1} parent=11 // pred_check
          %p237 = pneg %p106
        $region22: #{conv3d_forward.1} parent=11 // pred_check_branch
          %239 = sbr.rel (%p237) target = $region24
        $region23: #{conv3d_forward.1} parent=11 // pred_region
          _
        $region24: #{conv3d_forward.1} parent=11 // pred_fallthru
          _
        // Predicated region
        $region25: #{conv3d_forward.1} parent=11 // pred_check
          %p240 = pneg %p127
        $region26: #{conv3d_forward.1} parent=11 // pred_check_branch
          %242 = sbr.rel (%p240) target = $region28
        $region27: #{conv3d_forward.1} parent=11 // pred_region
          _
        $region28: #{conv3d_forward.1} parent=11 // pred_fallthru
          _
        // Predicated region
        $region29: #{conv3d_forward.1} parent=11 // pred_check
          %p243 = pneg %p148
        $region30: #{conv3d_forward.1} parent=11 // pred_check_branch
          %245 = sbr.rel (%p243) target = $region32
        $region31: #{conv3d_forward.1} parent=11 // pred_region
          _
        $region32: #{conv3d_forward.1} parent=11 // pred_fallthru
          _
        // Predicated region
        $region33: #{conv3d_forward.1} parent=11 // pred_check
          %p246 = pneg %p169
        $region34: #{conv3d_forward.1} parent=11 // pred_check_branch
          %248 = sbr.rel (%p246) target = $region36
        $region35: #{conv3d_forward.1} parent=11 // pred_region
          _
        $region36: #{conv3d_forward.1} parent=11 // pred_fallthru
          _
        // Predicated region
        $region37: #{conv3d_forward.1} parent=11 // pred_check
          %p249 = pneg %p190
        $region38: #{conv3d_forward.1} parent=11 // pred_check_branch
          %251 = sbr.rel (%p249) target = $region40
        $region39: #{conv3d_forward.1} parent=11 // pred_region
          _
        $region40: #{conv3d_forward.1} parent=11 // pred_fallthru
          _
      $region12: #{conv3d_forward.1} parent=5 // pred_fallthru
        _
      %p252 = scmp.lt.s32.totalorder %s17, 2
      // Predicated region
      $region41: #{conv3d_forward.1} parent=5 // pred_check
        %p253 = pneg %p252
      $region42: #{conv3d_forward.1} parent=5 // pred_check_branch
        %255 = sbr.rel (%p253) target = $region44
      $region43: #{conv3d_forward.1} parent=5 // pred_region
        // Predicated region
        $region45: #{conv3d_forward.1} parent=43 // pred_check
          %p256 = pneg %p37
        $region46: #{conv3d_forward.1} parent=43 // pred_check_branch
          %258 = sbr.rel (%p256) target = $region48
        $region47: #{conv3d_forward.1} parent=43 // pred_region
          %p259 = scmp.lt.s32.totalorder %s17, 1
          %s260 = scalar_select %p259, %s17, 1
          %s261 = smul.addr %s260, 61
          %s262 = smul.addr %s261, 4
          %s263 = scalar_lea.vmem %s0, %s262
        $region48: #{conv3d_forward.1} parent=43 // pred_fallthru
          _
      $region44: #{conv3d_forward.1} parent=5 // pred_fallthru
        _
      %p264 = scmp.le.s32.totalorder 1, %s17
      %p265 = scmp.lt.s32.totalorder %s17, 3
      %p266 = pnand %p264, %p265
      %p267 = pneg %p266
      // Predicated region
      $region49: #{conv3d_forward.1} parent=5 // pred_check
        _
      $region50: #{conv3d_forward.1} parent=5 // pred_check_branch
        %269 = sbr.rel (%p266) target = $region52
      $region51: #{conv3d_forward.1} parent=5 // pred_region
        %s270 = ssub.s32 %s17, 1
        %p271 = scmp.lt.s32.totalorder %s22, 1
        %s272 = scalar_select %p271, %s22, 1
        %s273 = smul.addr %s272, 61
        %s274 = smul.addr %s273, 4
        %s275 = scalar_lea.vmem %s0, %s274
        %p276 = pneg %p43
        %p277 = pneg %p40
        %p278 = pneg %p64
        %p279 = pneg %p61
        %p280 = pneg %p85
        %p281 = pneg %p82
        %p282 = pneg %p106
        %p283 = pneg %p103
        %p284 = pneg %p127
        %p285 = pneg %p124
        %p286 = pneg %p148
        %p287 = pneg %p145
        %p288 = pneg %p169
        %p289 = pneg %p166
        %p290 = pneg %p190
        %p291 = pneg %p187
        %p292 = pneg %p216
        %p293 = pneg %p213
        %s294 = sand.u32 %s203, 1
        %s295 = scalar_lea.sflag [#allocation3], %s294
        %s296 = sand.u32 %s203, 1
        %s297 = scalar_lea.vmem [#allocation2], %s296
        %p298 = scmp.lt.s32.totalorder %s22, 1
        %s299 = scalar_select %p298, %s22, 1
        %s300 = smul.addr %s299, 61
        %s301 = smul.addr %s300, 4
        %s302 = scalar_lea.vmem %s0, %s301
        %v304 = vld [vmem:[%s302] sm:$0xf]
        %v305 = vld [vmem:[%s302 + $0x4] sm:$0xf]
        %v306 = vld [vmem:[%s302 + $0x8] sm:$0xf]
        %v307 = vld [vmem:[%s302 + $0xc] sm:$0xf]
        %v308 = vld [vmem:[%s302 + $0x10] sm:$0xf]
        %v309 = vld [vmem:[%s302 + $0x14] sm:$0xf]
        %v310 = vld [vmem:[%s302 + $0x18] sm:$0xf]
        %v311 = vld [vmem:[%s302 + $0x1c] sm:$0xf]
        %v312 = vld [vmem:[%s302 + $0x20] sm:$0xf]
        %v313 = vld [vmem:[%s302 + $0x24] sm:$0xf]
        %v314 = vld [vmem:[%s302 + $0x28] sm:$0xf]
        %v315 = vld [vmem:[%s302 + $0x2c] sm:$0xf]
        %v316 = vld [vmem:[%s302 + $0x30] sm:$0xf]
        %v317 = vld [vmem:[%s302 + $0x34] sm:$0xf]
        %v318 = vld [vmem:[%s302 + $0x38] sm:$0xf]
        %v319 = vld [vmem:[%s302 + $0x3c] sm:$0xf]
        %v320 = vld [vmem:[%s302 + $0x40] sm:$0xf]
        %v321 = vld [vmem:[%s302 + $0x44] sm:$0xf]
        %v322 = vld [vmem:[%s302 + $0x48] sm:$0xf]
        %v323 = vld [vmem:[%s302 + $0x4c] sm:$0xf]
        %v324 = vld [vmem:[%s302 + $0x50] sm:$0xf]
        %v325 = vld [vmem:[%s302 + $0x54] sm:$0xf]
        %v326 = vld [vmem:[%s302 + $0x58] sm:$0xf]
        %v327 = vld [vmem:[%s302 + $0x5c] sm:$0xf]
        %v328 = vld [vmem:[%s302 + $0x60] sm:$0xf]
        %v329 = vld [vmem:[%s302 + $0x64] sm:$0xf]
        %v330 = vld [vmem:[%s302 + $0x68] sm:$0xf]
        %v331 = vld [vmem:[%s302 + $0x6c] sm:$0xf]
        %v332 = vld [vmem:[%s302 + $0x70] sm:$0xf]
        %v333 = vld [vmem:[%s302 + $0x74] sm:$0xf]
        %v334 = vld [vmem:[%s302 + $0x78] sm:$0xf]
        %v335 = vld [vmem:[%s302 + $0x7c] sm:$0xf]
        %v336 = vld [vmem:[%s302 + $0x80] sm:$0xf]
        %v337 = vld [vmem:[%s302 + $0x84] sm:$0xf]
        %v338 = vld [vmem:[%s302 + $0x88] sm:$0xf]
        %v339 = vld [vmem:[%s302 + $0x8c] sm:$0xf]
        %v340 = vld [vmem:[%s302 + $0x90] sm:$0xf]
        %v341 = vld [vmem:[%s302 + $0x94] sm:$0xf]
        %v342 = vld [vmem:[%s302 + $0x98] sm:$0xf]
        %v343 = vld [vmem:[%s302 + $0x9c] sm:$0xf]
        %v344 = vld [vmem:[%s302 + $0xa0] sm:$0xf]
        %v345 = vld [vmem:[%s302 + $0xa4] sm:$0xf]
        %v346 = vld [vmem:[%s302 + $0xa8] sm:$0xf]
        %v347 = vld [vmem:[%s302 + $0xac] sm:$0xf]
        %v348 = vld [vmem:[%s302 + $0xb0] sm:$0xf]
        %v349 = vld [vmem:[%s302 + $0xb4] sm:$0xf]
        %v350 = vld [vmem:[%s302 + $0xb8] sm:$0xf]
        %v351 = vld [vmem:[%s302 + $0xbc] sm:$0xf]
        %v352 = vld [vmem:[%s302 + $0xc0] sm:$0xf]
        %v353 = vld [vmem:[%s302 + $0xc4] sm:$0xf]
        %v354 = vld [vmem:[%s302 + $0xc8] sm:$0xf]
        %v355 = vld [vmem:[%s302 + $0xcc] sm:$0xf]
        %v356 = vld [vmem:[%s302 + $0xd0] sm:$0xf]
        %v357 = vld [vmem:[%s302 + $0xd4] sm:$0xf]
        %v358 = vld [vmem:[%s302 + $0xd8] sm:$0xf]
        %v359 = vld [vmem:[%s302 + $0xdc] sm:$0xf]
        %v360 = vld [vmem:[%s302 + $0xe0] sm:$0xf]
        %v361 = vld [vmem:[%s302 + $0xe4] sm:$0xf]
        %v362 = vld [vmem:[%s302 + $0xe8] sm:$0xf]
        %v363 = vld [vmem:[%s302 + $0xec] sm:$0xf]
        %v364 = vld [vmem:[%s302 + $0xf0] sm:$0x7]
        %v365 = vld [vmem:[%s1] sm:$0xff]
        %v366 = vld [vmem:[%s1 + $0x8] sm:$0xff]
        %v367 = vld [vmem:[%s1 + $0x10] sm:$0xff]
        %v368 = vld [vmem:[%s1 + $0x18] sm:$0xff]
        %v369 = vld [vmem:[%s1 + $0x20] sm:$0xff]
        %v370 = vld [vmem:[%s1 + $0x28] sm:$0xff]
        %v371 = vld [vmem:[%s1 + $0x30] sm:$0xff]
        %v372 = vld [vmem:[%s1 + $0x38] sm:$0xff]
        %v373 = vld [vmem:[%s1 + $0x40] sm:$0xff]
        %v374 = vld [vmem:[%s1 + $0x48] sm:$0xff]
        %v375 = vld [vmem:[%s1 + $0x50] sm:$0x77]
        %v376 = vld [vmem:[%s1 + $0x58] sm:$0x77]
        %v389 = vunpack.c.l.b16 %v365
        %v390 = vunpack.c.h.b16 %v365
        %v391 = vunpack.c.l.b16 %v366
        %v392 = vunpack.c.h.b16 %v366
        %v393 = vunpack.c.l.b16 %v367
        %v394 = vunpack.c.h.b16 %v367
        %v395 = vunpack.c.l.b16 %v368
        %v396 = vunpack.c.h.b16 %v368
        %v397 = vunpack.c.l.b16 %v369
        %v398 = vunpack.c.h.b16 %v369
        %v399 = vunpack.c.l.b16 %v370
        %v400 = vunpack.c.h.b16 %v370
        %v401 = vunpack.c.l.b16 %v371
        %v402 = vunpack.c.h.b16 %v371
        %v403 = vunpack.c.l.b16 %v372
        %v404 = vunpack.c.h.b16 %v372
        %v405 = vunpack.c.l.b16 %v373
        %v406 = vunpack.c.h.b16 %v373
        %v407 = vunpack.c.l.b16 %v374
        %v408 = vunpack.c.h.b16 %v374
        %v409 = vunpack.c.l.b16 %v375
        %v410 = vunpack.c.h.b16 %v375
        %v411 = vunpack.c.l.b16 %v376
        %v412 = vunpack.c.h.b16 %v376
        %v413 = vpack.c.b16 %v393, %v389
        %v414 = vpack.c.b16 %v394, %v390
        %v415 = vpack.c.b16 %v395, %v391
        %v416 = vpack.c.b16 %v396, %v392
        %v417 = vpack.c.b16 %v401, %v397
        %v418 = vpack.c.b16 %v402, %v398
        %v419 = vpack.c.b16 %v403, %v399
        %v420 = vpack.c.b16 %v404, %v400
        %v421 = vpack.c.b16 %v409, %v405
        %v422 = vpack.c.b16 %v410, %v406
        %v423 = vpack.c.b16 %v411, %v407
        %v424 = vpack.c.b16 %v412, %v408
        %v495 = vunpack.c.l.b16 %v304
        %v496 = vunpack.c.l.b16 %v305
        %v497 = vunpack.c.l.b16 %v306
        %v498 = vunpack.c.l.b16 %v307
        %v499 = vunpack.c.l.b16 %v308
        %v500 = vunpack.c.l.b16 %v309
        %v501 = vunpack.c.l.b16 %v310
        %v502 = vunpack.c.l.b16 %v311
        %v503 = vunpack.c.l.b16 %v312
        %v504 = vunpack.c.l.b16 %v313
        %v505 = vunpack.c.l.b16 %v314
        %v506 = vunpack.c.l.b16 %v315
        %v507 = vunpack.c.l.b16 %v316
        %v508 = vunpack.c.l.b16 %v317
        %v509 = vunpack.c.l.b16 %v318
        %v510 = vunpack.c.l.b16 %v319
        %v511 = vunpack.c.l.b16 %v320
        %v512 = vunpack.c.l.b16 %v321
        %v513 = vunpack.c.l.b16 %v322
        %v514 = vunpack.c.l.b16 %v323
        %v515 = vunpack.c.l.b16 %v324
        %v516 = vunpack.c.l.b16 %v325
        %v517 = vunpack.c.l.b16 %v326
        %v518 = vunpack.c.l.b16 %v327
        %v519 = vunpack.c.l.b16 %v328
        %v520 = vunpack.c.l.b16 %v329
        %v521 = vunpack.c.l.b16 %v330
        %v522 = vunpack.c.l.b16 %v331
        %v523 = vunpack.c.l.b16 %v332
        %v524 = vunpack.c.l.b16 %v333
        %v525 = vunpack.c.l.b16 %v334
        %v526 = vunpack.c.l.b16 %v335
        %v527 = vunpack.c.l.b16 %v336
        %v528 = vunpack.c.l.b16 %v337
        %v529 = vunpack.c.l.b16 %v338
        %v530 = vunpack.c.l.b16 %v339
        %v531 = vunpack.c.l.b16 %v340
        %v532 = vunpack.c.l.b16 %v341
        %v533 = vunpack.c.l.b16 %v342
        %v534 = vunpack.c.l.b16 %v343
        %v535 = vunpack.c.l.b16 %v344
        %v536 = vunpack.c.l.b16 %v345
        %v537 = vunpack.c.l.b16 %v346
        %v538 = vunpack.c.l.b16 %v347
        %v539 = vunpack.c.l.b16 %v348
        %v540 = vunpack.c.l.b16 %v349
        %v541 = vunpack.c.l.b16 %v350
        %v542 = vunpack.c.l.b16 %v351
        %v543 = vunpack.c.l.b16 %v352
        %v544 = vunpack.c.l.b16 %v353
        %v545 = vunpack.c.l.b16 %v354
        %v546 = vunpack.c.l.b16 %v355
        %v547 = vunpack.c.l.b16 %v356
        %v548 = vunpack.c.l.b16 %v357
        %v549 = vunpack.c.l.b16 %v358
        %v550 = vunpack.c.l.b16 %v359
        %v551 = vunpack.c.l.b16 %v360
        %v552 = vunpack.c.l.b16 %v361
        %v553 = vunpack.c.l.b16 %v362
        %v554 = vunpack.c.l.b16 %v363
        %v555 = vunpack.c.l.b16 %v364
        %v556 = vpack.c.b16 %v496, %v495
        %v557 = vpack.c.b16 %v498, %v497
        %v558 = vpack.c.b16 %v500, %v499
        %v559 = vpack.c.b16 %v502, %v501
        %v560 = vpack.c.b16 %v504, %v503
        %v561 = vpack.c.b16 %v506, %v505
        %v562 = vpack.c.b16 %v508, %v507
        %v563 = vpack.c.b16 %v510, %v509
        %v564 = vpack.c.b16 %v512, %v511
        %v565 = vpack.c.b16 %v514, %v513
        %v566 = vpack.c.b16 %v516, %v515
        %v567 = vpack.c.b16 %v518, %v517
        %v568 = vpack.c.b16 %v520, %v519
        %v569 = vpack.c.b16 %v522, %v521
        %v570 = vpack.c.b16 %v524, %v523
        %v571 = vpack.c.b16 %v526, %v525
        %v572 = vpack.c.b16 %v528, %v527
        %v573 = vpack.c.b16 %v530, %v529
        %v574 = vpack.c.b16 %v532, %v531
        %v575 = vpack.c.b16 %v534, %v533
        %v576 = vpack.c.b16 %v536, %v535
        %v577 = vpack.c.b16 %v538, %v537
        %v578 = vpack.c.b16 %v540, %v539
        %v579 = vpack.c.b16 %v542, %v541
        %v580 = vpack.c.b16 %v544, %v543
        %v581 = vpack.c.b16 %v546, %v545
        %v582 = vpack.c.b16 %v548, %v547
        %v583 = vpack.c.b16 %v550, %v549
        %v584 = vpack.c.b16 %v552, %v551
        %v585 = vpack.c.b16 %v554, %v553
        %v586 = vpack.c.b16 %v555, %v555
        %vm617 = vcmask 826368
        %v619 = vsel %vm617, %v416, 0
        %v622 = vsel %vm617, %v420, 0
        %v625 = vsel %vm617, %v424, 0
        %vm627 = vcmask 1041408
        %vm628 = vcmask 1042432
        %v629 = vsel %vm627, 4294967295, 65535
        %v630 = vsel %vm628, %v629, 0
        %v632 = vand.u32 %v586, %v630
        %634 = vmatprep.subr.bf16.mxu0 0
        %635 = vmatpush1.bf16.msra.mxu0 %v556
        %636 = vmatprep.subr.bf16.mxu0 0
        %637 = vmatpush1.bf16.msra.mxu0 %v557
        %638 = vmatprep.subr.bf16.mxu0 0
        %639 = vmatpush1.bf16.msra.mxu0 %v558
        %640 = vmatprep.subr.bf16.mxu0 0
        %641 = vmatpush1.bf16.msra.mxu0 %v559
        %642 = vmatprep.subr.bf16.mxu0 0
        %643 = vmatpush1.bf16.msra.mxu0 %v560
        %644 = vmatprep.subr.bf16.mxu0 0
        %645 = vmatpush1.bf16.msra.mxu0 %v561
        %646 = vmatprep.subr.bf16.mxu0 0
        %647 = vmatpush1.bf16.msra.mxu0 %v562
        %648 = vmatprep.subr.bf16.mxu0 0
        %649 = vmatpush1.bf16.msra.mxu0 %v563
        %650 = vmatprep.subr.bf16.mxu0 0
        %651 = vmatpush1.bf16.msra.mxu0 %v564
        %652 = vmatprep.subr.bf16.mxu0 0
        %653 = vmatpush1.bf16.msra.mxu0 %v565
        %654 = vmatprep.subr.bf16.mxu0 0
        %655 = vmatpush1.bf16.msra.mxu0 %v566
        %656 = vmatprep.subr.bf16.mxu0 0
        %657 = vmatpush1.bf16.msra.mxu0 %v567
        %658 = vmatprep.subr.bf16.mxu0 0
        %659 = vmatpush1.bf16.msra.mxu0 %v568
        %660 = vmatprep.subr.bf16.mxu0 0
        %661 = vmatpush1.bf16.msra.mxu0 %v569
        %662 = vmatprep.subr.bf16.mxu0 0
        %663 = vmatpush1.bf16.msra.mxu0 %v570
        %664 = vmatprep.subr.bf16.mxu0 0
        %665 = vmatpush1.bf16.msra.mxu0 %v571
        %666 = vmatprep.mubr.bf16.mxu0 %v414
        %667 = vmatmul.mubr.bf16.gmra.mrb[0].mxu0 %v413
        %v668 = vpop.f32.mrb[0].mxu0
        %v669 = vadd.f32 0.0, %v668
        %v670 = vpop.f32.mrb[0].mxu0
        %v671 = vpop.f32.mrb[0].mxu0
        %v672 = vadd.f32 0.0, %v671
        %v673 = vpop.f32.mrb[0].mxu0
        %674 = vmatprep.mubr.bf16.mxu0 %v418
        %675 = vmatmul.mubr.bf16.gmra.mrb[0].mxu0 %v417
        %v676 = vpop.f32.mrb[0].mxu0
        %v677 = vadd.f32 0.0, %v676
        %v678 = vpop.f32.mrb[0].mxu0
        %v679 = vpop.f32.mrb[0].mxu0
        %v680 = vadd.f32 0.0, %v679
        %v681 = vpop.f32.mrb[0].mxu0
        %682 = vmatprep.mubr.bf16.mxu0 %v422
        %683 = vmatmul.mubr.bf16.gmra.mrb[0].mxu0 %v421
        %v684 = vpop.f32.mrb[0].mxu0
        %v685 = vadd.f32 0.0, %v684
        %v686 = vpop.f32.mrb[0].mxu0
        %v687 = vpop.f32.mrb[0].mxu0
        %v688 = vadd.f32 0.0, %v687
        %v689 = vpop.f32.mrb[0].mxu0
        %690 = vdwg.mxu0
        %691 = vmatprep.subr.bf16.mxu0 0
        %692 = vmatpush1.bf16.msra.mxu0 %v572
        %693 = vmatprep.subr.bf16.mxu0 0
        %694 = vmatpush1.bf16.msra.mxu0 %v573
        %695 = vmatprep.subr.bf16.mxu0 0
        %696 = vmatpush1.bf16.msra.mxu0 %v574
        %697 = vmatprep.subr.bf16.mxu0 0
        %698 = vmatpush1.bf16.msra.mxu0 %v575
        %699 = vmatprep.subr.bf16.mxu0 0
        %700 = vmatpush1.bf16.msra.mxu0 %v576
        %701 = vmatprep.subr.bf16.mxu0 0
        %702 = vmatpush1.bf16.msra.mxu0 %v577
        %703 = vmatprep.subr.bf16.mxu0 0
        %704 = vmatpush1.bf16.msra.mxu0 %v578
        %705 = vmatprep.subr.bf16.mxu0 0
        %706 = vmatpush1.bf16.msra.mxu0 %v579
        %707 = vmatprep.subr.bf16.mxu0 0
        %708 = vmatpush1.bf16.msra.mxu0 %v580
        %709 = vmatprep.subr.bf16.mxu0 0
        %710 = vmatpush1.bf16.msra.mxu0 %v581
        %711 = vmatprep.subr.bf16.mxu0 0
        %712 = vmatpush1.bf16.msra.mxu0 %v582
        %713 = vmatprep.subr.bf16.mxu0 0
        %714 = vmatpush1.bf16.msra.mxu0 %v583
        %715 = vmatprep.subr.bf16.mxu0 0
        %716 = vmatpush1.bf16.msra.mxu0 %v584
        %717 = vmatprep.subr.bf16.mxu0 0
        %718 = vmatpush1.bf16.msra.mxu0 %v585
        %719 = vmatprep.subr.bf16.mxu0 0
        %720 = vmatpush1.bf16.msra.mxu0 %v632
        %721 = vmatprep.subr.bf16.mxu0 0
        %722 = vmatpush1.bf16.msra.mxu0 0
        %723 = vmatprep.mubr.bf16.mxu0 %v619
        %724 = vmatmul.mubr.bf16.gmra.mrb[0].mxu0 %v415
        %v725 = vpop.f32.mrb[0].mxu0
        %v726 = vadd.f32 %v669, %v725
        %v727 = vpop.f32.mrb[0].mxu0
        %v728 = vpop.f32.mrb[0].mxu0
        %v729 = vadd.f32 %v672, %v728
        %v730 = vpop.f32.mrb[0].mxu0
        %731 = vmatprep.mubr.bf16.mxu0 %v622
        %732 = vmatmul.mubr.bf16.gmra.mrb[0].mxu0 %v419
        %v733 = vpop.f32.mrb[0].mxu0
        %v734 = vadd.f32 %v677, %v733
        %v735 = vpop.f32.mrb[0].mxu0
        %v736 = vpop.f32.mrb[0].mxu0
        %v737 = vadd.f32 %v680, %v736
        %v738 = vpop.f32.mrb[0].mxu0
        %739 = vmatprep.mubr.bf16.mxu0 %v625
        %740 = vmatmul.mubr.bf16.gmra.mrb[0].mxu0 %v423
        %v741 = vpop.f32.mrb[0].mxu0
        %v742 = vadd.f32 %v685, %v741
        %v743 = vpop.f32.mrb[0].mxu0
        %v744 = vpop.f32.mrb[0].mxu0
        %v745 = vadd.f32 %v688, %v744
        %v746 = vpop.f32.mrb[0].mxu0
        %747 = vdwg.mxu0
        %v748 = vpack.c.bf16 %v729, %v726
        %v749 = vpack.c.bf16 %v737, %v734
        %v750 = vpack.c.bf16 %v745, %v742
        %v751 = vld [vmem:[%s2] sm:$0xff]
        %v752 = vld [vmem:[%s2 + $0x8] sm:$0x11]
        %s753 = scalar_lea.vmem %s1, 96
        %v754 = vld [vmem:[%s753] sm:$0xff]
        %v755 = vld [vmem:[%s753 + $0x8] sm:$0xff]
        %v756 = vld [vmem:[%s753 + $0x10] sm:$0xff]
        %v757 = vld [vmem:[%s753 + $0x18] sm:$0xff]
        %v758 = vld [vmem:[%s753 + $0x20] sm:$0xff]
        %v759 = vld [vmem:[%s753 + $0x28] sm:$0xff]
        %v760 = vld [vmem:[%s753 + $0x30] sm:$0xff]
        %v761 = vld [vmem:[%s753 + $0x38] sm:$0xff]
        %v762 = vld [vmem:[%s753 + $0x40] sm:$0xff]
        %v763 = vld [vmem:[%s753 + $0x48] sm:$0xff]
        %v764 = vld [vmem:[%s753 + $0x50] sm:$0x77]
        %v765 = vld [vmem:[%s753 + $0x58] sm:$0x77]
        %v778 = vunpack.c.l.b16 %v754
        %v779 = vunpack.c.h.b16 %v754
        %v780 = vunpack.c.l.b16 %v755
        %v781 = vunpack.c.h.b16 %v755
        %v782 = vunpack.c.l.b16 %v756
        %v783 = vunpack.c.h.b16 %v756
        %v784 = vunpack.c.l.b16 %v757
        %v785 = vunpack.c.h.b16 %v757
        %v786 = vunpack.c.l.b16 %v758
        %v787 = vunpack.c.h.b16 %v758
        %v788 = vunpack.c.l.b16 %v759
        %v789 = vunpack.c.h.b16 %v759
        %v790 = vunpack.c.l.b16 %v760
        %v791 = vunpack.c.h.b16 %v760
        %v792 = vunpack.c.l.b16 %v761
        %v793 = vunpack.c.h.b16 %v761
        %v794 = vunpack.c.l.b16 %v762
        %v795 = vunpack.c.h.b16 %v762
        %v796 = vunpack.c.l.b16 %v763
        %v797 = vunpack.c.h.b16 %v763
        %v798 = vunpack.c.l.b16 %v764
        %v799 = vunpack.c.h.b16 %v764
        %v800 = vunpack.c.l.b16 %v765
        %v801 = vunpack.c.h.b16 %v765
        %v802 = vpack.c.b16 %v782, %v778
        %v803 = vpack.c.b16 %v783, %v779
        %v804 = vpack.c.b16 %v784, %v780
        %v805 = vpack.c.b16 %v785, %v781
        %v806 = vpack.c.b16 %v790, %v786
        %v807 = vpack.c.b16 %v791, %v787
        %v808 = vpack.c.b16 %v792, %v788
        %v809 = vpack.c.b16 %v793, %v789
        %v810 = vpack.c.b16 %v798, %v794
        %v811 = vpack.c.b16 %v799, %v795
        %v812 = vpack.c.b16 %v800, %v796
        %v813 = vpack.c.b16 %v801, %v797
        %v824 = vsel %vm617, %v805, 0
        %v827 = vsel %vm617, %v809, 0
        %v830 = vsel %vm617, %v813, 0
        %832 = vmatprep.subr.bf16.mxu0 0
        %833 = vmatpush1.bf16.msra.mxu0 %v556
        %834 = vmatprep.subr.bf16.mxu0 0
        %835 = vmatpush1.bf16.msra.mxu0 %v557
        %836 = vmatprep.subr.bf16.mxu0 0
        %837 = vmatpush1.bf16.msra.mxu0 %v558
        %838 = vmatprep.subr.bf16.mxu0 0
        %839 = vmatpush1.bf16.msra.mxu0 %v559
        %840 = vmatprep.subr.bf16.mxu0 0
        %841 = vmatpush1.bf16.msra.mxu0 %v560
        %842 = vmatprep.subr.bf16.mxu0 0
        %843 = vmatpush1.bf16.msra.mxu0 %v561
        %844 = vmatprep.subr.bf16.mxu0 0
        %845 = vmatpush1.bf16.msra.mxu0 %v562
        %846 = vmatprep.subr.bf16.mxu0 0
        %847 = vmatpush1.bf16.msra.mxu0 %v563
        %848 = vmatprep.subr.bf16.mxu0 0
        %849 = vmatpush1.bf16.msra.mxu0 %v564
        %850 = vmatprep.subr.bf16.mxu0 0
        %851 = vmatpush1.bf16.msra.mxu0 %v565
        %852 = vmatprep.subr.bf16.mxu0 0
        %853 = vmatpush1.bf16.msra.mxu0 %v566
        %854 = vmatprep.subr.bf16.mxu0 0
        %855 = vmatpush1.bf16.msra.mxu0 %v567
        %856 = vmatprep.subr.bf16.mxu0 0
        %857 = vmatpush1.bf16.msra.mxu0 %v568
        %858 = vmatprep.subr.bf16.mxu0 0
        %859 = vmatpush1.bf16.msra.mxu0 %v569
        %860 = vmatprep.subr.bf16.mxu0 0
        %861 = vmatpush1.bf16.msra.mxu0 %v570
        %862 = vmatprep.subr.bf16.mxu0 0
        %863 = vmatpush1.bf16.msra.mxu0 %v571
        %864 = vmatprep.mubr.bf16.mxu0 %v803
        %865 = vmatmul.mubr.bf16.gmra.mrb[0].mxu0 %v802
        %v866 = vpop.f32.mrb[0].mxu0
        %v867 = vadd.f32 0.0, %v866
        %v868 = vpop.f32.mrb[0].mxu0
        %v869 = vpop.f32.mrb[0].mxu0
        %v870 = vadd.f32 0.0, %v869
        %v871 = vpop.f32.mrb[0].mxu0
        %872 = vmatprep.mubr.bf16.mxu0 %v807
        %873 = vmatmul.mubr.bf16.gmra.mrb[0].mxu0 %v806
        %v874 = vpop.f32.mrb[0].mxu0
        %v875 = vadd.f32 0.0, %v874
        %v876 = vpop.f32.mrb[0].mxu0
        %v877 = vpop.f32.mrb[0].mxu0
        %v878 = vadd.f32 0.0, %v877
        %v879 = vpop.f32.mrb[0].mxu0
        %880 = vmatprep.mubr.bf16.mxu0 %v811
        %881 = vmatmul.mubr.bf16.gmra.mrb[0].mxu0 %v810
        %v882 = vpop.f32.mrb[0].mxu0
        %v883 = vadd.f32 0.0, %v882
        %v884 = vpop.f32.mrb[0].mxu0
        %v885 = vpop.f32.mrb[0].mxu0
        %v886 = vadd.f32 0.0, %v885
        %v887 = vpop.f32.mrb[0].mxu0
        %888 = vdwg.mxu0
        %889 = vmatprep.subr.bf16.mxu0 0
        %890 = vmatpush1.bf16.msra.mxu0 %v572
        %891 = vmatprep.subr.bf16.mxu0 0
        %892 = vmatpush1.bf16.msra.mxu0 %v573
        %893 = vmatprep.subr.bf16.mxu0 0
        %894 = vmatpush1.bf16.msra.mxu0 %v574
        %895 = vmatprep.subr.bf16.mxu0 0
        %896 = vmatpush1.bf16.msra.mxu0 %v575
        %897 = vmatprep.subr.bf16.mxu0 0
        %898 = vmatpush1.bf16.msra.mxu0 %v576
        %899 = vmatprep.subr.bf16.mxu0 0
        %900 = vmatpush1.bf16.msra.mxu0 %v577
        %901 = vmatprep.subr.bf16.mxu0 0
        %902 = vmatpush1.bf16.msra.mxu0 %v578
        %903 = vmatprep.subr.bf16.mxu0 0
        %904 = vmatpush1.bf16.msra.mxu0 %v579
        %905 = vmatprep.subr.bf16.mxu0 0
        %906 = vmatpush1.bf16.msra.mxu0 %v580
        %907 = vmatprep.subr.bf16.mxu0 0
        %908 = vmatpush1.bf16.msra.mxu0 %v581
        %909 = vmatprep.subr.bf16.mxu0 0
        %910 = vmatpush1.bf16.msra.mxu0 %v582
        %911 = vmatprep.subr.bf16.mxu0 0
        %912 = vmatpush1.bf16.msra.mxu0 %v583
        %913 = vmatprep.subr.bf16.mxu0 0
        %914 = vmatpush1.bf16.msra.mxu0 %v584
        %915 = vmatprep.subr.bf16.mxu0 0
        %916 = vmatpush1.bf16.msra.mxu0 %v585
        %917 = vmatprep.subr.bf16.mxu0 0
        %918 = vmatpush1.bf16.msra.mxu0 %v632
        %919 = vmatprep.subr.bf16.mxu0 0
        %920 = vmatpush1.bf16.msra.mxu0 0
        %921 = vmatprep.mubr.bf16.mxu0 %v824
        %922 = vmatmul.mubr.bf16.gmra.mrb[0].mxu0 %v804
        %v923 = vpop.f32.mrb[0].mxu0
        %v924 = vadd.f32 %v867, %v923
        %v925 = vpop.f32.mrb[0].mxu0
        %v926 = vpop.f32.mrb[0].mxu0
        %v927 = vadd.f32 %v870, %v926
        %v928 = vpop.f32.mrb[0].mxu0
        %929 = vmatprep.mubr.bf16.mxu0 %v827
        %930 = vmatmul.mubr.bf16.gmra.mrb[0].mxu0 %v808
        %v931 = vpop.f32.mrb[0].mxu0
        %v932 = vadd.f32 %v875, %v931
        %v933 = vpop.f32.mrb[0].mxu0
        %v934 = vpop.f32.mrb[0].mxu0
        %v935 = vadd.f32 %v878, %v934
        %v936 = vpop.f32.mrb[0].mxu0
        %937 = vmatprep.mubr.bf16.mxu0 %v830
        %938 = vmatmul.mubr.bf16.gmra.mrb[0].mxu0 %v812
        %v939 = vpop.f32.mrb[0].mxu0
        %v940 = vadd.f32 %v883, %v939
        %v941 = vpop.f32.mrb[0].mxu0
        %v942 = vpop.f32.mrb[0].mxu0
        %v943 = vadd.f32 %v886, %v942
        %v944 = vpop.f32.mrb[0].mxu0
        %945 = vdwg.mxu0
        %v946 = vpack.c.bf16 %v927, %v924
        %v947 = vpack.c.bf16 %v935, %v932
        %v948 = vpack.c.bf16 %v943, %v940
        %s949 = scalar_lea.vmem %s2, 16
        %v950 = vld [vmem:[%s949] sm:$0xff]
        %v951 = vld [vmem:[%s949 + $0x8] sm:$0x11]
        %v954 = vunpack.c.l.b16 %v950
        %v955 = vunpack.c.h.b16 %v950
        %v956 = vunpack.c.l.b16 %v951
        %v957 = vunpack.c.h.b16 %v951
        %v958 = vpack.c.b16 %v956, %v954
        %v959 = vpack.c.b16 %v957, %v955
        %vm960 = vcmask 72704
        %v962 = vsel %vm960, %v946, 0
        %v965 = vsel %vm960, %v947, 0
        %v968 = vsel %vm960, %v948, 0
        %vm970 = vcmask 1043456
        %vm971 = vcmask 1044480
        %v972 = vsel %vm970, 4294967295, 65535
        %v973 = vsel %vm971, %v972, 0
        %v975 = vand.u32 %v958, %v973
        %v978 = vand.u32 %v959, %v973
        %980 = vmatprep.subr.bf16.mxu0 %v978
        %981 = vmatpush1.bf16.msra.mxu0 %v975
        %982 = vmatprep.subr.bf16.mxu0 0
        %983 = vmatpush1.bf16.msra.mxu0 0
        %984 = vmatprep.subr.bf16.mxu0 0
        %985 = vmatpush1.bf16.msra.mxu0 0
        %986 = vmatprep.subr.bf16.mxu0 0
        %987 = vmatpush1.bf16.msra.mxu0 0
        %988 = vmatprep.subr.bf16.mxu0 0
        %989 = vmatpush1.bf16.msra.mxu0 0
        %990 = vmatprep.subr.bf16.mxu0 0
        %991 = vmatpush1.bf16.msra.mxu0 0
        %992 = vmatprep.subr.bf16.mxu0 0
        %993 = vmatpush1.bf16.msra.mxu0 0
        %994 = vmatprep.subr.bf16.mxu0 0
        %995 = vmatpush1.bf16.msra.mxu0 0
        %996 = vmatprep.subr.bf16.mxu0 0
        %997 = vmatpush1.bf16.msra.mxu0 0
        %998 = vmatprep.subr.bf16.mxu0 0
        %999 = vmatpush1.bf16.msra.mxu0 0
        %1000 = vmatprep.subr.bf16.mxu0 0
        %1001 = vmatpush1.bf16.msra.mxu0 0
        %1002 = vmatprep.subr.bf16.mxu0 0
        %1003 = vmatpush1.bf16.msra.mxu0 0
        %1004 = vmatprep.subr.bf16.mxu0 0
        %1005 = vmatpush1.bf16.msra.mxu0 0
        %1006 = vmatprep.subr.bf16.mxu0 0
        %1007 = vmatpush1.bf16.msra.mxu0 0
        %1008 = vmatprep.subr.bf16.mxu0 0
        %1009 = vmatpush1.bf16.msra.mxu0 0
        %1010 = vmatprep.subr.bf16.mxu0 0
        %1011 = vmatpush1.bf16.msra.mxu0 0
        %1012 = vmatprep.mubr.bf16.mxu0 0
        %1013 = vmatmul.mubr.bf16.gmra.mrb[0].mxu0 %v962
        %v1014 = vpop.f32.mrb[0].mxu0
        %v1015 = vadd.f32 0.0, %v1014
        %v1016 = vpop.f32.mrb[0].mxu0
        %v1017 = vadd.f32 0.0, %v1016
        %v1018 = vpop.f32.mrb[0].mxu0
        %v1019 = vadd.f32 0.0, %v1018
        %v1020 = vpop.f32.mrb[0].mxu0
        %v1021 = vadd.f32 0.0, %v1020
        %1022 = vmatprep.mubr.bf16.mxu0 0
        %1023 = vmatmul.mubr.bf16.gmra.mrb[0].mxu0 %v965
        %v1024 = vpop.f32.mrb[0].mxu0
        %v1025 = vadd.f32 0.0, %v1024
        %v1026 = vpop.f32.mrb[0].mxu0
        %v1027 = vadd.f32 0.0, %v1026
        %v1028 = vpop.f32.mrb[0].mxu0
        %v1029 = vadd.f32 0.0, %v1028
        %v1030 = vpop.f32.mrb[0].mxu0
        %v1031 = vadd.f32 0.0, %v1030
        %1032 = vmatprep.mubr.bf16.mxu0 0
        %1033 = vmatmul.mubr.bf16.gmra.mrb[0].mxu0 %v968
        %v1034 = vpop.f32.mrb[0].mxu0
        %v1035 = vadd.f32 0.0, %v1034
        %v1036 = vpop.f32.mrb[0].mxu0
        %v1037 = vadd.f32 0.0, %v1036
        %v1038 = vpop.f32.mrb[0].mxu0
        %v1039 = vadd.f32 0.0, %v1038
        %v1040 = vpop.f32.mrb[0].mxu0
        %v1041 = vadd.f32 0.0, %v1040
        %1042 = vdwg.mxu0
        %v1045 = vunpack.c.l.b16 %v751
        %v1046 = vunpack.c.h.b16 %v751
        %v1047 = vunpack.c.l.b16 %v752
        %v1048 = vunpack.c.h.b16 %v752
        %v1049 = vpack.c.b16 %v1047, %v1045
        %v1050 = vpack.c.b16 %v1048, %v1046
        %v1052 = vsel %vm960, %v748, 0
        %v1055 = vsel %vm960, %v749, 0
        %v1058 = vsel %vm960, %v750, 0
        %v1061 = vand.u32 %v1049, %v973
        %v1064 = vand.u32 %v1050, %v973
        %1066 = vmatprep.subr.bf16.mxu0 %v1064
        %1067 = vmatpush1.bf16.msra.mxu0 %v1061
        %1068 = vmatprep.subr.bf16.mxu0 0
        %1069 = vmatpush1.bf16.msra.mxu0 0
        %1070 = vmatprep.subr.bf16.mxu0 0
        %1071 = vmatpush1.bf16.msra.mxu0 0
        %1072 = vmatprep.subr.bf16.mxu0 0
        %1073 = vmatpush1.bf16.msra.mxu0 0
        %1074 = vmatprep.subr.bf16.mxu0 0
        %1075 = vmatpush1.bf16.msra.mxu0 0
        %1076 = vmatprep.subr.bf16.mxu0 0
        %1077 = vmatpush1.bf16.msra.mxu0 0
        %1078 = vmatprep.subr.bf16.mxu0 0
        %1079 = vmatpush1.bf16.msra.mxu0 0
        %1080 = vmatprep.subr.bf16.mxu0 0
        %1081 = vmatpush1.bf16.msra.mxu0 0
        %1082 = vmatprep.subr.bf16.mxu0 0
        %1083 = vmatpush1.bf16.msra.mxu0 0
        %1084 = vmatprep.subr.bf16.mxu0 0
        %1085 = vmatpush1.bf16.msra.mxu0 0
        %1086 = vmatprep.subr.bf16.mxu0 0
        %1087 = vmatpush1.bf16.msra.mxu0 0
        %1088 = vmatprep.subr.bf16.mxu0 0
        %1089 = vmatpush1.bf16.msra.mxu0 0
        %1090 = vmatprep.subr.bf16.mxu0 0
        %1091 = vmatpush1.bf16.msra.mxu0 0
        %1092 = vmatprep.subr.bf16.mxu0 0
        %1093 = vmatpush1.bf16.msra.mxu0 0
        %1094 = vmatprep.subr.bf16.mxu0 0
        %1095 = vmatpush1.bf16.msra.mxu0 0
        %1096 = vmatprep.subr.bf16.mxu0 0
        %1097 = vmatpush1.bf16.msra.mxu0 0
        %1098 = vmatprep.mubr.bf16.mxu0 0
        %1099 = vmatmul.mubr.bf16.gmra.mrb[0].mxu0 %v1052
        %v1100 = vpop.f32.mrb[0].mxu0
        %v1101 = vadd.f32 %v1015, %v1100
        %v1102 = vpop.f32.mrb[0].mxu0
        %v1103 = vadd.f32 %v1017, %v1102
        %v1104 = vpop.f32.mrb[0].mxu0
        %v1105 = vadd.f32 %v1019, %v1104
        %v1106 = vpop.f32.mrb[0].mxu0
        %v1107 = vadd.f32 %v1021, %v1106
        %1108 = vmatprep.mubr.bf16.mxu0 0
        %1109 = vmatmul.mubr.bf16.gmra.mrb[0].mxu0 %v1055
        %v1110 = vpop.f32.mrb[0].mxu0
        %v1111 = vadd.f32 %v1025, %v1110
        %v1112 = vpop.f32.mrb[0].mxu0
        %v1113 = vadd.f32 %v1027, %v1112
        %v1114 = vpop.f32.mrb[0].mxu0
        %v1115 = vadd.f32 %v1029, %v1114
        %v1116 = vpop.f32.mrb[0].mxu0
        %v1117 = vadd.f32 %v1031, %v1116
        %1118 = vmatprep.mubr.bf16.mxu0 0
        %1119 = vmatmul.mubr.bf16.gmra.mrb[0].mxu0 %v1058
        %v1120 = vpop.f32.mrb[0].mxu0
        %v1121 = vadd.f32 %v1035, %v1120
        %v1122 = vpop.f32.mrb[0].mxu0
        %v1123 = vadd.f32 %v1037, %v1122
        %v1124 = vpop.f32.mrb[0].mxu0
        %v1125 = vadd.f32 %v1039, %v1124
        %v1126 = vpop.f32.mrb[0].mxu0
        %v1127 = vadd.f32 %v1041, %v1126
        %1128 = vdwg.mxu0
        %s1129 = scalar_lea.vmem %s1, 192
        %v1130 = vld [vmem:[%s1129] sm:$0xff]
        %v1131 = vld [vmem:[%s1129 + $0x8] sm:$0xff]
        %v1132 = vld [vmem:[%s1129 + $0x10] sm:$0xff]
        %v1133 = vld [vmem:[%s1129 + $0x18] sm:$0xff]
        %v1134 = vld [vmem:[%s1129 + $0x20] sm:$0xff]
        %v1135 = vld [vmem:[%s1129 + $0x28] sm:$0xff]
        %v1136 = vld [vmem:[%s1129 + $0x30] sm:$0xff]
        %v1137 = vld [vmem:[%s1129 + $0x38] sm:$0xff]
        %v1138 = vld [vmem:[%s1129 + $0x40] sm:$0xff]
        %v1139 = vld [vmem:[%s1129 + $0x48] sm:$0xff]
        %v1140 = vld [vmem:[%s1129 + $0x50] sm:$0x77]
        %v1141 = vld [vmem:[%s1129 + $0x58] sm:$0x77]
        %v1154 = vunpack.c.l.b16 %v1130
        %v1155 = vunpack.c.h.b16 %v1130
        %v1156 = vunpack.c.l.b16 %v1131
        %v1157 = vunpack.c.h.b16 %v1131
        %v1158 = vunpack.c.l.b16 %v1132
        %v1159 = vunpack.c.h.b16 %v1132
        %v1160 = vunpack.c.l.b16 %v1133
        %v1161 = vunpack.c.h.b16 %v1133
        %v1162 = vunpack.c.l.b16 %v1134
        %v1163 = vunpack.c.h.b16 %v1134
        %v1164 = vunpack.c.l.b16 %v1135
        %v1165 = vunpack.c.h.b16 %v1135
        %v1166 = vunpack.c.l.b16 %v1136
        %v1167 = vunpack.c.h.b16 %v1136
        %v1168 = vunpack.c.l.b16 %v1137
        %v1169 = vunpack.c.h.b16 %v1137
        %v1170 = vunpack.c.l.b16 %v1138
        %v1171 = vunpack.c.h.b16 %v1138
        %v1172 = vunpack.c.l.b16 %v1139
        %v1173 = vunpack.c.h.b16 %v1139
        %v1174 = vunpack.c.l.b16 %v1140
        %v1175 = vunpack.c.h.b16 %v1140
        %v1176 = vunpack.c.l.b16 %v1141
        %v1177 = vunpack.c.h.b16 %v1141
        %v1178 = vpack.c.b16 %v1158, %v1154
        %v1179 = vpack.c.b16 %v1159, %v1155
        %v1180 = vpack.c.b16 %v1160, %v1156
        %v1181 = vpack.c.b16 %v1161, %v1157
        %v1182 = vpack.c.b16 %v1166, %v1162
        %v1183 = vpack.c.b16 %v1167, %v1163
        %v1184 = vpack.c.b16 %v1168, %v1164
        %v1185 = vpack.c.b16 %v1169, %v1165
        %v1186 = vpack.c.b16 %v1174, %v1170
        %v1187 = vpack.c.b16 %v1175, %v1171
        %v1188 = vpack.c.b16 %v1176, %v1172
        %v1189 = vpack.c.b16 %v1177, %v1173
        %v1200 = vsel %vm617, %v1181, 0
        %v1203 = vsel %vm617, %v1185, 0
        %v1206 = vsel %vm617, %v1189, 0
        %1208 = vmatprep.subr.bf16.mxu0 0
        %1209 = vmatpush1.bf16.msra.mxu0 %v556
        %1210 = vmatprep.subr.bf16.mxu0 0
        %1211 = vmatpush1.bf16.msra.mxu0 %v557
        %1212 = vmatprep.subr.bf16.mxu0 0
        %1213 = vmatpush1.bf16.msra.mxu0 %v558
        %1214 = vmatprep.subr.bf16.mxu0 0
        %1215 = vmatpush1.bf16.msra.mxu0 %v559
        %1216 = vmatprep.subr.bf16.mxu0 0
        %1217 = vmatpush1.bf16.msra.mxu0 %v560
        %1218 = vmatprep.subr.bf16.mxu0 0
        %1219 = vmatpush1.bf16.msra.mxu0 %v561
        %1220 = vmatprep.subr.bf16.mxu0 0
        %1221 = vmatpush1.bf16.msra.mxu0 %v562
        %1222 = vmatprep.subr.bf16.mxu0 0
        %1223 = vmatpush1.bf16.msra.mxu0 %v563
        %1224 = vmatprep.subr.bf16.mxu0 0
        %1225 = vmatpush1.bf16.msra.mxu0 %v564
        %1226 = vmatprep.subr.bf16.mxu0 0
        %1227 = vmatpush1.bf16.msra.mxu0 %v565
        %1228 = vmatprep.subr.bf16.mxu0 0
        %1229 = vmatpush1.bf16.msra.mxu0 %v566
        %1230 = vmatprep.subr.bf16.mxu0 0
        %1231 = vmatpush1.bf16.msra.mxu0 %v567
        %1232 = vmatprep.subr.bf16.mxu0 0
        %1233 = vmatpush1.bf16.msra.mxu0 %v568
        %1234 = vmatprep.subr.bf16.mxu0 0
        %1235 = vmatpush1.bf16.msra.mxu0 %v569
        %1236 = vmatprep.subr.bf16.mxu0 0
        %1237 = vmatpush1.bf16.msra.mxu0 %v570
        %1238 = vmatprep.subr.bf16.mxu0 0
        %1239 = vmatpush1.bf16.msra.mxu0 %v571
        %1240 = vmatprep.mubr.bf16.mxu0 %v1179
        %1241 = vmatmul.mubr.bf16.gmra.mrb[0].mxu0 %v1178
        %v1242 = vpop.f32.mrb[0].mxu0
        %v1243 = vadd.f32 0.0, %v1242
        %v1244 = vpop.f32.mrb[0].mxu0
        %v1245 = vpop.f32.mrb[0].mxu0
        %v1246 = vadd.f32 0.0, %v1245
        %v1247 = vpop.f32.mrb[0].mxu0
        %1248 = vmatprep.mubr.bf16.mxu0 %v1183
        %1249 = vmatmul.mubr.bf16.gmra.mrb[0].mxu0 %v1182
        %v1250 = vpop.f32.mrb[0].mxu0
        %v1251 = vadd.f32 0.0, %v1250
        %v1252 = vpop.f32.mrb[0].mxu0
        %v1253 = vpop.f32.mrb[0].mxu0
        %v1254 = vadd.f32 0.0, %v1253
        %v1255 = vpop.f32.mrb[0].mxu0
        %1256 = vmatprep.mubr.bf16.mxu0 %v1187
        %1257 = vmatmul.mubr.bf16.gmra.mrb[0].mxu0 %v1186
        %v1258 = vpop.f32.mrb[0].mxu0
        %v1259 = vadd.f32 0.0, %v1258
        %v1260 = vpop.f32.mrb[0].mxu0
        %v1261 = vpop.f32.mrb[0].mxu0
        %v1262 = vadd.f32 0.0, %v1261
        %v1263 = vpop.f32.mrb[0].mxu0
        %1264 = vdwg.mxu0
        %1265 = vmatprep.subr.bf16.mxu0 0
        %1266 = vmatpush1.bf16.msra.mxu0 %v572
        %1267 = vmatprep.subr.bf16.mxu0 0
        %1268 = vmatpush1.bf16.msra.mxu0 %v573
        %1269 = vmatprep.subr.bf16.mxu0 0
        %1270 = vmatpush1.bf16.msra.mxu0 %v574
        %1271 = vmatprep.subr.bf16.mxu0 0
        %1272 = vmatpush1.bf16.msra.mxu0 %v575
        %1273 = vmatprep.subr.bf16.mxu0 0
        %1274 = vmatpush1.bf16.msra.mxu0 %v576
        %1275 = vmatprep.subr.bf16.mxu0 0
        %1276 = vmatpush1.bf16.msra.mxu0 %v577
        %1277 = vmatprep.subr.bf16.mxu0 0
        %1278 = vmatpush1.bf16.msra.mxu0 %v578
        %1279 = vmatprep.subr.bf16.mxu0 0
        %1280 = vmatpush1.bf16.msra.mxu0 %v579
        %1281 = vmatprep.subr.bf16.mxu0 0
        %1282 = vmatpush1.bf16.msra.mxu0 %v580
        %1283 = vmatprep.subr.bf16.mxu0 0
        %1284 = vmatpush1.bf16.msra.mxu0 %v581
        %1285 = vmatprep.subr.bf16.mxu0 0
        %1286 = vmatpush1.bf16.msra.mxu0 %v582
        %1287 = vmatprep.subr.bf16.mxu0 0
        %1288 = vmatpush1.bf16.msra.mxu0 %v583
        %1289 = vmatprep.subr.bf16.mxu0 0
        %1290 = vmatpush1.bf16.msra.mxu0 %v584
        %1291 = vmatprep.subr.bf16.mxu0 0
        %1292 = vmatpush1.bf16.msra.mxu0 %v585
        %1293 = vmatprep.subr.bf16.mxu0 0
        %1294 = vmatpush1.bf16.msra.mxu0 %v632
        %1295 = vmatprep.subr.bf16.mxu0 0
        %1296 = vmatpush1.bf16.msra.mxu0 0
        %1297 = vmatprep.mubr.bf16.mxu0 %v1200
        %1298 = vmatmul.mubr.bf16.gmra.mrb[0].mxu0 %v1180
        %v1299 = vpop.f32.mrb[0].mxu0
        %v1300 = vadd.f32 %v1243, %v1299
        %v1301 = vpop.f32.mrb[0].mxu0
        %v1302 = vpop.f32.mrb[0].mxu0
        %v1303 = vadd.f32 %v1246, %v1302
        %v1304 = vpop.f32.mrb[0].mxu0
        %1305 = vmatprep.mubr.bf16.mxu0 %v1203
        %1306 = vmatmul.mubr.bf16.gmra.mrb[0].mxu0 %v1184
        %v1307 = vpop.f32.mrb[0].mxu0
        %v1308 = vadd.f32 %v1251, %v1307
        %v1309 = vpop.f32.mrb[0].mxu0
        %v1310 = vpop.f32.mrb[0].mxu0
        %v1311 = vadd.f32 %v1254, %v1310
        %v1312 = vpop.f32.mrb[0].mxu0
        %1313 = vmatprep.mubr.bf16.mxu0 %v1206
        %1314 = vmatmul.mubr.bf16.gmra.mrb[0].mxu0 %v1188
        %v1315 = vpop.f32.mrb[0].mxu0
        %v1316 = vadd.f32 %v1259, %v1315
        %v1317 = vpop.f32.mrb[0].mxu0
        %v1318 = vpop.f32.mrb[0].mxu0
        %v1319 = vadd.f32 %v1262, %v1318
        %v1320 = vpop.f32.mrb[0].mxu0
        %1321 = vdwg.mxu0
        %v1322 = vpack.c.bf16 %v1303, %v1300
        %v1323 = vpack.c.bf16 %v1311, %v1308
        %v1324 = vpack.c.bf16 %v1319, %v1316
        %s1325 = scalar_lea.vmem %s2, 32
        %v1326 = vld [vmem:[%s1325] sm:$0xff]
        %v1327 = vld [vmem:[%s1325 + $0x8] sm:$0x11]
        %v1330 = vunpack.c.l.b16 %v1326
        %v1331 = vunpack.c.h.b16 %v1326
        %v1332 = vunpack.c.l.b16 %v1327
        %v1333 = vunpack.c.h.b16 %v1327
        %v1334 = vpack.c.b16 %v1332, %v1330
        %v1335 = vpack.c.b16 %v1333, %v1331
        %v1337 = vsel %vm960, %v1322, 0
        %v1340 = vsel %vm960, %v1323, 0
        %v1343 = vsel %vm960, %v1324, 0
        %v1346 = vand.u32 %v1334, %v973
        %v1349 = vand.u32 %v1335, %v973
        %1351 = vmatprep.subr.bf16.mxu0 %v1349
        %1352 = vmatpush1.bf16.msra.mxu0 %v1346
        %1353 = vmatprep.subr.bf16.mxu0 0
        %1354 = vmatpush1.bf16.msra.mxu0 0
        %1355 = vmatprep.subr.bf16.mxu0 0
        %1356 = vmatpush1.bf16.msra.mxu0 0
        %1357 = vmatprep.subr.bf16.mxu0 0
        %1358 = vmatpush1.bf16.msra.mxu0 0
        %1359 = vmatprep.subr.bf16.mxu0 0
        %1360 = vmatpush1.bf16.msra.mxu0 0
        %1361 = vmatprep.subr.bf16.mxu0 0
        %1362 = vmatpush1.bf16.msra.mxu0 0
        %1363 = vmatprep.subr.bf16.mxu0 0
        %1364 = vmatpush1.bf16.msra.mxu0 0
        %1365 = vmatprep.subr.bf16.mxu0 0
        %1366 = vmatpush1.bf16.msra.mxu0 0
        %1367 = vmatprep.subr.bf16.mxu0 0
        %1368 = vmatpush1.bf16.msra.mxu0 0
        %1369 = vmatprep.subr.bf16.mxu0 0
        %1370 = vmatpush1.bf16.msra.mxu0 0
        %1371 = vmatprep.subr.bf16.mxu0 0
        %1372 = vmatpush1.bf16.msra.mxu0 0
        %1373 = vmatprep.subr.bf16.mxu0 0
        %1374 = vmatpush1.bf16.msra.mxu0 0
        %1375 = vmatprep.subr.bf16.mxu0 0
        %1376 = vmatpush1.bf16.msra.mxu0 0
        %1377 = vmatprep.subr.bf16.mxu0 0
        %1378 = vmatpush1.bf16.msra.mxu0 0
        %1379 = vmatprep.subr.bf16.mxu0 0
        %1380 = vmatpush1.bf16.msra.mxu0 0
        %1381 = vmatprep.subr.bf16.mxu0 0
        %1382 = vmatpush1.bf16.msra.mxu0 0
        %1383 = vmatprep.mubr.bf16.mxu0 0
        %1384 = vmatmul.mubr.bf16.gmra.mrb[0].mxu0 %v1337
        %v1385 = vpop.f32.mrb[0].mxu0
        %v1386 = vadd.f32 0.0, %v1385
        %v1387 = vpop.f32.mrb[0].mxu0
        %v1388 = vadd.f32 0.0, %v1387
        %v1389 = vpop.f32.mrb[0].mxu0
        %v1390 = vadd.f32 0.0, %v1389
        %v1391 = vpop.f32.mrb[0].mxu0
        %v1392 = vadd.f32 0.0, %v1391
        %1393 = vmatprep.mubr.bf16.mxu0 0
        %1394 = vmatmul.mubr.bf16.gmra.mrb[0].mxu0 %v1340
        %v1395 = vpop.f32.mrb[0].mxu0
        %v1396 = vadd.f32 0.0, %v1395
        %v1397 = vpop.f32.mrb[0].mxu0
        %v1398 = vadd.f32 0.0, %v1397
        %v1399 = vpop.f32.mrb[0].mxu0
        %v1400 = vadd.f32 0.0, %v1399
        %v1401 = vpop.f32.mrb[0].mxu0
        %v1402 = vadd.f32 0.0, %v1401
        %1403 = vmatprep.mubr.bf16.mxu0 0
        %1404 = vmatmul.mubr.bf16.gmra.mrb[0].mxu0 %v1343
        %v1405 = vpop.f32.mrb[0].mxu0
        %v1406 = vadd.f32 0.0, %v1405
        %v1407 = vpop.f32.mrb[0].mxu0
        %v1408 = vadd.f32 0.0, %v1407
        %v1409 = vpop.f32.mrb[0].mxu0
        %v1410 = vadd.f32 0.0, %v1409
        %v1411 = vpop.f32.mrb[0].mxu0
        %v1412 = vadd.f32 0.0, %v1411
        %1413 = vdwg.mxu0
        %v1414 = vadd.f32 %v1101, %v1386
        %v1415 = vadd.f32 %v1103, %v1388
        %v1416 = vadd.f32 %v1105, %v1390
        %v1417 = vadd.f32 %v1107, %v1392
        %v1418 = vadd.f32 %v1111, %v1396
        %v1419 = vadd.f32 %v1113, %v1398
        %v1420 = vadd.f32 %v1115, %v1400
        %v1421 = vadd.f32 %v1117, %v1402
        %v1422 = vadd.f32 %v1121, %v1406
        %v1423 = vadd.f32 %v1123, %v1408
        %v1424 = vadd.f32 %v1125, %v1410
        %v1425 = vadd.f32 %v1127, %v1412
        %s1426 = scalar_lea.vmem %s1, 288
        %v1427 = vld [vmem:[%s1426] sm:$0xff]
        %v1428 = vld [vmem:[%s1426 + $0x8] sm:$0xff]
        %v1429 = vld [vmem:[%s1426 + $0x10] sm:$0xff]
        %v1430 = vld [vmem:[%s1426 + $0x18] sm:$0xff]
        %v1431 = vld [vmem:[%s1426 + $0x20] sm:$0xff]
        %v1432 = vld [vmem:[%s1426 + $0x28] sm:$0xff]
        %v1433 = vld [vmem:[%s1426 + $0x30] sm:$0xff]
        %v1434 = vld [vmem:[%s1426 + $0x38] sm:$0xff]
        %v1435 = vld [vmem:[%s1426 + $0x40] sm:$0xff]
        %v1436 = vld [vmem:[%s1426 + $0x48] sm:$0xff]
        %v1437 = vld [vmem:[%s1426 + $0x50] sm:$0x77]
        %v1438 = vld [vmem:[%s1426 + $0x58] sm:$0x77]
        %v1451 = vunpack.c.l.b16 %v1427
        %v1452 = vunpack.c.h.b16 %v1427
        %v1453 = vunpack.c.l.b16 %v1428
        %v1454 = vunpack.c.h.b16 %v1428
        %v1455 = vunpack.c.l.b16 %v1429
        %v1456 = vunpack.c.h.b16 %v1429
        %v1457 = vunpack.c.l.b16 %v1430
        %v1458 = vunpack.c.h.b16 %v1430
        %v1459 = vunpack.c.l.b16 %v1431
        %v1460 = vunpack.c.h.b16 %v1431
        %v1461 = vunpack.c.l.b16 %v1432
        %v1462 = vunpack.c.h.b16 %v1432
        %v1463 = vunpack.c.l.b16 %v1433
        %v1464 = vunpack.c.h.b16 %v1433
        %v1465 = vunpack.c.l.b16 %v1434
        %v1466 = vunpack.c.h.b16 %v1434
        %v1467 = vunpack.c.l.b16 %v1435
        %v1468 = vunpack.c.h.b16 %v1435
        %v1469 = vunpack.c.l.b16 %v1436
        %v1470 = vunpack.c.h.b16 %v1436
        %v1471 = vunpack.c.l.b16 %v1437
        %v1472 = vunpack.c.h.b16 %v1437
        %v1473 = vunpack.c.l.b16 %v1438
        %v1474 = vunpack.c.h.b16 %v1438
        %v1475 = vpack.c.b16 %v1455, %v1451
        %v1476 = vpack.c.b16 %v1456, %v1452
        %v1477 = vpack.c.b16 %v1457, %v1453
        %v1478 = vpack.c.b16 %v1458, %v1454
        %v1479 = vpack.c.b16 %v1463, %v1459
        %v1480 = vpack.c.b16 %v1464, %v1460
        %v1481 = vpack.c.b16 %v1465, %v1461
        %v1482 = vpack.c.b16 %v1466, %v1462
        %v1483 = vpack.c.b16 %v1471, %v1467
        %v1484 = vpack.c.b16 %v1472, %v1468
        %v1485 = vpack.c.b16 %v1473, %v1469
        %v1486 = vpack.c.b16 %v1474, %v1470
        %v1497 = vsel %vm617, %v1478, 0
        %v1500 = vsel %vm617, %v1482, 0
        %v1503 = vsel %vm617, %v1486, 0
        %1505 = vmatprep.subr.bf16.mxu0 0
        %1506 = vmatpush1.bf16.msra.mxu0 %v556
        %1507 = vmatprep.subr.bf16.mxu0 0
        %1508 = vmatpush1.bf16.msra.mxu0 %v557
        %1509 = vmatprep.subr.bf16.mxu0 0
        %1510 = vmatpush1.bf16.msra.mxu0 %v558
        %1511 = vmatprep.subr.bf16.mxu0 0
        %1512 = vmatpush1.bf16.msra.mxu0 %v559
        %1513 = vmatprep.subr.bf16.mxu0 0
        %1514 = vmatpush1.bf16.msra.mxu0 %v560
        %1515 = vmatprep.subr.bf16.mxu0 0
        %1516 = vmatpush1.bf16.msra.mxu0 %v561
        %1517 = vmatprep.subr.bf16.mxu0 0
        %1518 = vmatpush1.bf16.msra.mxu0 %v562
        %1519 = vmatprep.subr.bf16.mxu0 0
        %1520 = vmatpush1.bf16.msra.mxu0 %v563
        %1521 = vmatprep.subr.bf16.mxu0 0
        %1522 = vmatpush1.bf16.msra.mxu0 %v564
        %1523 = vmatprep.subr.bf16.mxu0 0
        %1524 = vmatpush1.bf16.msra.mxu0 %v565
        %1525 = vmatprep.subr.bf16.mxu0 0
        %1526 = vmatpush1.bf16.msra.mxu0 %v566
        %1527 = vmatprep.subr.bf16.mxu0 0
        %1528 = vmatpush1.bf16.msra.mxu0 %v567
        %1529 = vmatprep.subr.bf16.mxu0 0
        %1530 = vmatpush1.bf16.msra.mxu0 %v568
        %1531 = vmatprep.subr.bf16.mxu0 0
        %1532 = vmatpush1.bf16.msra.mxu0 %v569
        %1533 = vmatprep.subr.bf16.mxu0 0
        %1534 = vmatpush1.bf16.msra.mxu0 %v570
        %1535 = vmatprep.subr.bf16.mxu0 0
        %1536 = vmatpush1.bf16.msra.mxu0 %v571
        %1537 = vmatprep.mubr.bf16.mxu0 %v1476
        %1538 = vmatmul.mubr.bf16.gmra.mrb[0].mxu0 %v1475
        %v1539 = vpop.f32.mrb[0].mxu0
        %v1540 = vadd.f32 0.0, %v1539
        %v1541 = vpop.f32.mrb[0].mxu0
        %v1542 = vpop.f32.mrb[0].mxu0
        %v1543 = vadd.f32 0.0, %v1542
        %v1544 = vpop.f32.mrb[0].mxu0
        %1545 = vmatprep.mubr.bf16.mxu0 %v1480
        %1546 = vmatmul.mubr.bf16.gmra.mrb[0].mxu0 %v1479
        %v1547 = vpop.f32.mrb[0].mxu0
        %v1548 = vadd.f32 0.0, %v1547
        %v1549 = vpop.f32.mrb[0].mxu0
        %v1550 = vpop.f32.mrb[0].mxu0
        %v1551 = vadd.f32 0.0, %v1550
        %v1552 = vpop.f32.mrb[0].mxu0
        %1553 = vmatprep.mubr.bf16.mxu0 %v1484
        %1554 = vmatmul.mubr.bf16.gmra.mrb[0].mxu0 %v1483
        %v1555 = vpop.f32.mrb[0].mxu0
        %v1556 = vadd.f32 0.0, %v1555
        %v1557 = vpop.f32.mrb[0].mxu0
        %v1558 = vpop.f32.mrb[0].mxu0
        %v1559 = vadd.f32 0.0, %v1558
        %v1560 = vpop.f32.mrb[0].mxu0
        %1561 = vdwg.mxu0
        %1562 = vmatprep.subr.bf16.mxu0 0
        %1563 = vmatpush1.bf16.msra.mxu0 %v572
        %1564 = vmatprep.subr.bf16.mxu0 0
        %1565 = vmatpush1.bf16.msra.mxu0 %v573
        %1566 = vmatprep.subr.bf16.mxu0 0
        %1567 = vmatpush1.bf16.msra.mxu0 %v574
        %1568 = vmatprep.subr.bf16.mxu0 0
        %1569 = vmatpush1.bf16.msra.mxu0 %v575
        %1570 = vmatprep.subr.bf16.mxu0 0
        %1571 = vmatpush1.bf16.msra.mxu0 %v576
        %1572 = vmatprep.subr.bf16.mxu0 0
        %1573 = vmatpush1.bf16.msra.mxu0 %v577
        %1574 = vmatprep.subr.bf16.mxu0 0
        %1575 = vmatpush1.bf16.msra.mxu0 %v578
        %1576 = vmatprep.subr.bf16.mxu0 0
        %1577 = vmatpush1.bf16.msra.mxu0 %v579
        %1578 = vmatprep.subr.bf16.mxu0 0
        %1579 = vmatpush1.bf16.msra.mxu0 %v580
        %1580 = vmatprep.subr.bf16.mxu0 0
        %1581 = vmatpush1.bf16.msra.mxu0 %v581
        %1582 = vmatprep.subr.bf16.mxu0 0
        %1583 = vmatpush1.bf16.msra.mxu0 %v582
        %1584 = vmatprep.subr.bf16.mxu0 0
        %1585 = vmatpush1.bf16.msra.mxu0 %v583
        %1586 = vmatprep.subr.bf16.mxu0 0
        %1587 = vmatpush1.bf16.msra.mxu0 %v584
        %1588 = vmatprep.subr.bf16.mxu0 0
        %1589 = vmatpush1.bf16.msra.mxu0 %v585
        %1590 = vmatprep.subr.bf16.mxu0 0
        %1591 = vmatpush1.bf16.msra.mxu0 %v632
        %1592 = vmatprep.subr.bf16.mxu0 0
        %1593 = vmatpush1.bf16.msra.mxu0 0
        %1594 = vmatprep.mubr.bf16.mxu0 %v1497
        %1595 = vmatmul.mubr.bf16.gmra.mrb[0].mxu0 %v1477
        %v1596 = vpop.f32.mrb[0].mxu0
        %v1597 = vadd.f32 %v1540, %v1596
        %v1598 = vpop.f32.mrb[0].mxu0
        %v1599 = vpop.f32.mrb[0].mxu0
        %v1600 = vadd.f32 %v1543, %v1599
        %v1601 = vpop.f32.mrb[0].mxu0
        %1602 = vmatprep.mubr.bf16.mxu0 %v1500
        %1603 = vmatmul.mubr.bf16.gmra.mrb[0].mxu0 %v1481
        %v1604 = vpop.f32.mrb[0].mxu0
        %v1605 = vadd.f32 %v1548, %v1604
        %v1606 = vpop.f32.mrb[0].mxu0
        %v1607 = vpop.f32.mrb[0].mxu0
        %v1608 = vadd.f32 %v1551, %v1607
        %v1609 = vpop.f32.mrb[0].mxu0
        %1610 = vmatprep.mubr.bf16.mxu0 %v1503
        %1611 = vmatmul.mubr.bf16.gmra.mrb[0].mxu0 %v1485
        %v1612 = vpop.f32.mrb[0].mxu0
        %v1613 = vadd.f32 %v1556, %v1612
        %v1614 = vpop.f32.mrb[0].mxu0
        %v1615 = vpop.f32.mrb[0].mxu0
        %v1616 = vadd.f32 %v1559, %v1615
        %v1617 = vpop.f32.mrb[0].mxu0
        %1618 = vdwg.mxu0
        %v1619 = vpack.c.bf16 %v1600, %v1597
        %v1620 = vpack.c.bf16 %v1608, %v1605
        %v1621 = vpack.c.bf16 %v1616, %v1613
        %s1622 = scalar_lea.vmem %s2, 48
        %v1623 = vld [vmem:[%s1622] sm:$0xff]
        %v1624 = vld [vmem:[%s1622 + $0x8] sm:$0x11]
        %v1627 = vunpack.c.l.b16 %v1623
        %v1628 = vunpack.c.h.b16 %v1623
        %v1629 = vunpack.c.l.b16 %v1624
        %v1630 = vunpack.c.h.b16 %v1624
        %v1631 = vpack.c.b16 %v1629, %v1627
        %v1632 = vpack.c.b16 %v1630, %v1628
        %v1634 = vsel %vm960, %v1619, 0
        %v1637 = vsel %vm960, %v1620, 0
        %v1640 = vsel %vm960, %v1621, 0
        %v1643 = vand.u32 %v1631, %v973
        %v1646 = vand.u32 %v1632, %v973
        %1648 = vmatprep.subr.bf16.mxu0 %v1646
        %1649 = vmatpush1.bf16.msra.mxu0 %v1643
        %1650 = vmatprep.subr.bf16.mxu0 0
        %1651 = vmatpush1.bf16.msra.mxu0 0
        %1652 = vmatprep.subr.bf16.mxu0 0
        %1653 = vmatpush1.bf16.msra.mxu0 0
        %1654 = vmatprep.subr.bf16.mxu0 0
        %1655 = vmatpush1.bf16.msra.mxu0 0
        %1656 = vmatprep.subr.bf16.mxu0 0
        %1657 = vmatpush1.bf16.msra.mxu0 0
        %1658 = vmatprep.subr.bf16.mxu0 0
        %1659 = vmatpush1.bf16.msra.mxu0 0
        %1660 = vmatprep.subr.bf16.mxu0 0
        %1661 = vmatpush1.bf16.msra.mxu0 0
        %1662 = vmatprep.subr.bf16.mxu0 0
        %1663 = vmatpush1.bf16.msra.mxu0 0
        %1664 = vmatprep.subr.bf16.mxu0 0
        %1665 = vmatpush1.bf16.msra.mxu0 0
        %1666 = vmatprep.subr.bf16.mxu0 0
        %1667 = vmatpush1.bf16.msra.mxu0 0
        %1668 = vmatprep.subr.bf16.mxu0 0
        %1669 = vmatpush1.bf16.msra.mxu0 0
        %1670 = vmatprep.subr.bf16.mxu0 0
        %1671 = vmatpush1.bf16.msra.mxu0 0
        %1672 = vmatprep.subr.bf16.mxu0 0
        %1673 = vmatpush1.bf16.msra.mxu0 0
        %1674 = vmatprep.subr.bf16.mxu0 0
        %1675 = vmatpush1.bf16.msra.mxu0 0
        %1676 = vmatprep.subr.bf16.mxu0 0
        %1677 = vmatpush1.bf16.msra.mxu0 0
        %1678 = vmatprep.subr.bf16.mxu0 0
        %1679 = vmatpush1.bf16.msra.mxu0 0
        %1680 = vmatprep.mubr.bf16.mxu0 0
        %1681 = vmatmul.mubr.bf16.gmra.mrb[0].mxu0 %v1634
        %v1682 = vpop.f32.mrb[0].mxu0
        %v1683 = vadd.f32 0.0, %v1682
        %v1684 = vpop.f32.mrb[0].mxu0
        %v1685 = vadd.f32 0.0, %v1684
        %v1686 = vpop.f32.mrb[0].mxu0
        %v1687 = vadd.f32 0.0, %v1686
        %v1688 = vpop.f32.mrb[0].mxu0
        %v1689 = vadd.f32 0.0, %v1688
        %1690 = vmatprep.mubr.bf16.mxu0 0
        %1691 = vmatmul.mubr.bf16.gmra.mrb[0].mxu0 %v1637
        %v1692 = vpop.f32.mrb[0].mxu0
        %v1693 = vadd.f32 0.0, %v1692
        %v1694 = vpop.f32.mrb[0].mxu0
        %v1695 = vadd.f32 0.0, %v1694
        %v1696 = vpop.f32.mrb[0].mxu0
        %v1697 = vadd.f32 0.0, %v1696
        %v1698 = vpop.f32.mrb[0].mxu0
        %v1699 = vadd.f32 0.0, %v1698
        %1700 = vmatprep.mubr.bf16.mxu0 0
        %1701 = vmatmul.mubr.bf16.gmra.mrb[0].mxu0 %v1640
        %v1702 = vpop.f32.mrb[0].mxu0
        %v1703 = vadd.f32 0.0, %v1702
        %v1704 = vpop.f32.mrb[0].mxu0
        %v1705 = vadd.f32 0.0, %v1704
        %v1706 = vpop.f32.mrb[0].mxu0
        %v1707 = vadd.f32 0.0, %v1706
        %v1708 = vpop.f32.mrb[0].mxu0
        %v1709 = vadd.f32 0.0, %v1708
        %1710 = vdwg.mxu0
        %v1711 = vadd.f32 %v1414, %v1683
        %v1712 = vadd.f32 %v1415, %v1685
        %v1713 = vadd.f32 %v1416, %v1687
        %v1714 = vadd.f32 %v1417, %v1689
        %v1715 = vadd.f32 %v1418, %v1693
        %v1716 = vadd.f32 %v1419, %v1695
        %v1717 = vadd.f32 %v1420, %v1697
        %v1718 = vadd.f32 %v1421, %v1699
        %v1719 = vadd.f32 %v1422, %v1703
        %v1720 = vadd.f32 %v1423, %v1705
        %v1721 = vadd.f32 %v1424, %v1707
        %v1722 = vadd.f32 %v1425, %v1709
        %s1723 = scalar_lea.vmem %s1, 384
        %v1724 = vld [vmem:[%s1723] sm:$0xff]
        %v1725 = vld [vmem:[%s1723 + $0x8] sm:$0xff]
        %v1726 = vld [vmem:[%s1723 + $0x10] sm:$0xff]
        %v1727 = vld [vmem:[%s1723 + $0x18] sm:$0xff]
        %v1728 = vld [vmem:[%s1723 + $0x20] sm:$0xff]
        %v1729 = vld [vmem:[%s1723 + $0x28] sm:$0xff]
        %v1730 = vld [vmem:[%s1723 + $0x30] sm:$0xff]
        %v1731 = vld [vmem:[%s1723 + $0x38] sm:$0xff]
        %v1732 = vld [vmem:[%s1723 + $0x40] sm:$0xff]
        %v1733 = vld [vmem:[%s1723 + $0x48] sm:$0xff]
        %v1734 = vld [vmem:[%s1723 + $0x50] sm:$0x77]
        %v1735 = vld [vmem:[%s1723 + $0x58] sm:$0x77]
        %v1748 = vunpack.c.l.b16 %v1724
        %v1749 = vunpack.c.h.b16 %v1724
        %v1750 = vunpack.c.l.b16 %v1725
        %v1751 = vunpack.c.h.b16 %v1725
        %v1752 = vunpack.c.l.b16 %v1726
        %v1753 = vunpack.c.h.b16 %v1726
        %v1754 = vunpack.c.l.b16 %v1727
        %v1755 = vunpack.c.h.b16 %v1727
        %v1756 = vunpack.c.l.b16 %v1728
        %v1757 = vunpack.c.h.b16 %v1728
        %v1758 = vunpack.c.l.b16 %v1729
        %v1759 = vunpack.c.h.b16 %v1729
        %v1760 = vunpack.c.l.b16 %v1730
        %v1761 = vunpack.c.h.b16 %v1730
        %v1762 = vunpack.c.l.b16 %v1731
        %v1763 = vunpack.c.h.b16 %v1731
        %v1764 = vunpack.c.l.b16 %v1732
        %v1765 = vunpack.c.h.b16 %v1732
        %v1766 = vunpack.c.l.b16 %v1733
        %v1767 = vunpack.c.h.b16 %v1733
        %v1768 = vunpack.c.l.b16 %v1734
        %v1769 = vunpack.c.h.b16 %v1734
        %v1770 = vunpack.c.l.b16 %v1735
        %v1771 = vunpack.c.h.b16 %v1735
        %v1772 = vpack.c.b16 %v1752, %v1748
        %v1773 = vpack.c.b16 %v1753, %v1749
        %v1774 = vpack.c.b16 %v1754, %v1750
        %v1775 = vpack.c.b16 %v1755, %v1751
        %v1776 = vpack.c.b16 %v1760, %v1756
        %v1777 = vpack.c.b16 %v1761, %v1757
        %v1778 = vpack.c.b16 %v1762, %v1758
        %v1779 = vpack.c.b16 %v1763, %v1759
        %v1780 = vpack.c.b16 %v1768, %v1764
        %v1781 = vpack.c.b16 %v1769, %v1765
        %v1782 = vpack.c.b16 %v1770, %v1766
        %v1783 = vpack.c.b16 %v1771, %v1767
        %v1794 = vsel %vm617, %v1775, 0
        %v1797 = vsel %vm617, %v1779, 0
        %v1800 = vsel %vm617, %v1783, 0
        %1802 = vmatprep.subr.bf16.mxu0 0
        %1803 = vmatpush1.bf16.msra.mxu0 %v556
        %1804 = vmatprep.subr.bf16.mxu0 0
        %1805 = vmatpush1.bf16.msra.mxu0 %v557
        %1806 = vmatprep.subr.bf16.mxu0 0
        %1807 = vmatpush1.bf16.msra.mxu0 %v558
        %1808 = vmatprep.subr.bf16.mxu0 0
        %1809 = vmatpush1.bf16.msra.mxu0 %v559
        %1810 = vmatprep.subr.bf16.mxu0 0
        %1811 = vmatpush1.bf16.msra.mxu0 %v560
        %1812 = vmatprep.subr.bf16.mxu0 0
        %1813 = vmatpush1.bf16.msra.mxu0 %v561
        %1814 = vmatprep.subr.bf16.mxu0 0
        %1815 = vmatpush1.bf16.msra.mxu0 %v562
        %1816 = vmatprep.subr.bf16.mxu0 0
        %1817 = vmatpush1.bf16.msra.mxu0 %v563
        %1818 = vmatprep.subr.bf16.mxu0 0
        %1819 = vmatpush1.bf16.msra.mxu0 %v564
        %1820 = vmatprep.subr.bf16.mxu0 0
        %1821 = vmatpush1.bf16.msra.mxu0 %v565
        %1822 = vmatprep.subr.bf16.mxu0 0
        %1823 = vmatpush1.bf16.msra.mxu0 %v566
        %1824 = vmatprep.subr.bf16.mxu0 0
        %1825 = vmatpush1.bf16.msra.mxu0 %v567
        %1826 = vmatprep.subr.bf16.mxu0 0
        %1827 = vmatpush1.bf16.msra.mxu0 %v568
        %1828 = vmatprep.subr.bf16.mxu0 0
        %1829 = vmatpush1.bf16.msra.mxu0 %v569
        %1830 = vmatprep.subr.bf16.mxu0 0
        %1831 = vmatpush1.bf16.msra.mxu0 %v570
        %1832 = vmatprep.subr.bf16.mxu0 0
        %1833 = vmatpush1.bf16.msra.mxu0 %v571
        %1834 = vmatprep.mubr.bf16.mxu0 %v1773
        %1835 = vmatmul.mubr.bf16.gmra.mrb[0].mxu0 %v1772
        %v1836 = vpop.f32.mrb[0].mxu0
        %v1837 = vadd.f32 0.0, %v1836
        %v1838 = vpop.f32.mrb[0].mxu0
        %v1839 = vpop.f32.mrb[0].mxu0
        %v1840 = vadd.f32 0.0, %v1839
        %v1841 = vpop.f32.mrb[0].mxu0
        %1842 = vmatprep.mubr.bf16.mxu0 %v1777
        %1843 = vmatmul.mubr.bf16.gmra.mrb[0].mxu0 %v1776
        %v1844 = vpop.f32.mrb[0].mxu0
        %v1845 = vadd.f32 0.0, %v1844
        %v1846 = vpop.f32.mrb[0].mxu0
        %v1847 = vpop.f32.mrb[0].mxu0
        %v1848 = vadd.f32 0.0, %v1847
        %v1849 = vpop.f32.mrb[0].mxu0
        %1850 = vmatprep.mubr.bf16.mxu0 %v1781
        %1851 = vmatmul.mubr.bf16.gmra.mrb[0].mxu0 %v1780
        %v1852 = vpop.f32.mrb[0].mxu0
        %v1853 = vadd.f32 0.0, %v1852
        %v1854 = vpop.f32.mrb[0].mxu0
        %v1855 = vpop.f32.mrb[0].mxu0
        %v1856 = vadd.f32 0.0, %v1855
        %v1857 = vpop.f32.mrb[0].mxu0
        %1858 = vdwg.mxu0
        %1859 = vmatprep.subr.bf16.mxu0 0
        %1860 = vmatpush1.bf16.msra.mxu0 %v572
        %1861 = vmatprep.subr.bf16.mxu0 0
        %1862 = vmatpush1.bf16.msra.mxu0 %v573
        %1863 = vmatprep.subr.bf16.mxu0 0
        %1864 = vmatpush1.bf16.msra.mxu0 %v574
        %1865 = vmatprep.subr.bf16.mxu0 0
        %1866 = vmatpush1.bf16.msra.mxu0 %v575
        %1867 = vmatprep.subr.bf16.mxu0 0
        %1868 = vmatpush1.bf16.msra.mxu0 %v576
        %1869 = vmatprep.subr.bf16.mxu0 0
        %1870 = vmatpush1.bf16.msra.mxu0 %v577
        %1871 = vmatprep.subr.bf16.mxu0 0
        %1872 = vmatpush1.bf16.msra.mxu0 %v578
        %1873 = vmatprep.subr.bf16.mxu0 0
        %1874 = vmatpush1.bf16.msra.mxu0 %v579
        %1875 = vmatprep.subr.bf16.mxu0 0
        %1876 = vmatpush1.bf16.msra.mxu0 %v580
        %1877 = vmatprep.subr.bf16.mxu0 0
        %1878 = vmatpush1.bf16.msra.mxu0 %v581
        %1879 = vmatprep.subr.bf16.mxu0 0
        %1880 = vmatpush1.bf16.msra.mxu0 %v582
        %1881 = vmatprep.subr.bf16.mxu0 0
        %1882 = vmatpush1.bf16.msra.mxu0 %v583
        %1883 = vmatprep.subr.bf16.mxu0 0
        %1884 = vmatpush1.bf16.msra.mxu0 %v584
        %1885 = vmatprep.subr.bf16.mxu0 0
        %1886 = vmatpush1.bf16.msra.mxu0 %v585
        %1887 = vmatprep.subr.bf16.mxu0 0
        %1888 = vmatpush1.bf16.msra.mxu0 %v632
        %1889 = vmatprep.subr.bf16.mxu0 0
        %1890 = vmatpush1.bf16.msra.mxu0 0
        %1891 = vmatprep.mubr.bf16.mxu0 %v1794
        %1892 = vmatmul.mubr.bf16.gmra.mrb[0].mxu0 %v1774
        %v1893 = vpop.f32.mrb[0].mxu0
        %v1894 = vadd.f32 %v1837, %v1893
        %v1895 = vpop.f32.mrb[0].mxu0
        %v1896 = vpop.f32.mrb[0].mxu0
        %v1897 = vadd.f32 %v1840, %v1896
        %v1898 = vpop.f32.mrb[0].mxu0
        %1899 = vmatprep.mubr.bf16.mxu0 %v1797
        %1900 = vmatmul.mubr.bf16.gmra.mrb[0].mxu0 %v1778
        %v1901 = vpop.f32.mrb[0].mxu0
        %v1902 = vadd.f32 %v1845, %v1901
        %v1903 = vpop.f32.mrb[0].mxu0
        %v1904 = vpop.f32.mrb[0].mxu0
        %v1905 = vadd.f32 %v1848, %v1904
        %v1906 = vpop.f32.mrb[0].mxu0
        %1907 = vmatprep.mubr.bf16.mxu0 %v1800
        %1908 = vmatmul.mubr.bf16.gmra.mrb[0].mxu0 %v1782
        %v1909 = vpop.f32.mrb[0].mxu0
        %v1910 = vadd.f32 %v1853, %v1909
        %v1911 = vpop.f32.mrb[0].mxu0
        %v1912 = vpop.f32.mrb[0].mxu0
        %v1913 = vadd.f32 %v1856, %v1912
        %v1914 = vpop.f32.mrb[0].mxu0
        %1915 = vdwg.mxu0
        %v1916 = vpack.c.bf16 %v1897, %v1894
        %v1917 = vpack.c.bf16 %v1905, %v1902
        %v1918 = vpack.c.bf16 %v1913, %v1910
        %s1919 = scalar_lea.vmem %s2, 64
        %v1920 = vld [vmem:[%s1919] sm:$0xff]
        %v1921 = vld [vmem:[%s1919 + $0x8] sm:$0x11]
        %v1924 = vunpack.c.l.b16 %v1920
        %v1925 = vunpack.c.h.b16 %v1920
        %v1926 = vunpack.c.l.b16 %v1921
        %v1927 = vunpack.c.h.b16 %v1921
        %v1928 = vpack.c.b16 %v1926, %v1924
        %v1929 = vpack.c.b16 %v1927, %v1925
        %v1931 = vsel %vm960, %v1916, 0
        %v1934 = vsel %vm960, %v1917, 0
        %v1937 = vsel %vm960, %v1918, 0
        %v1940 = vand.u32 %v1928, %v973
        %v1943 = vand.u32 %v1929, %v973
        %1945 = vmatprep.subr.bf16.mxu0 %v1943
        %1946 = vmatpush1.bf16.msra.mxu0 %v1940
        %1947 = vmatprep.subr.bf16.mxu0 0
        %1948 = vmatpush1.bf16.msra.mxu0 0
        %1949 = vmatprep.subr.bf16.mxu0 0
        %1950 = vmatpush1.bf16.msra.mxu0 0
        %1951 = vmatprep.subr.bf16.mxu0 0
        %1952 = vmatpush1.bf16.msra.mxu0 0
        %1953 = vmatprep.subr.bf16.mxu0 0
        %1954 = vmatpush1.bf16.msra.mxu0 0
        %1955 = vmatprep.subr.bf16.mxu0 0
        %1956 = vmatpush1.bf16.msra.mxu0 0
        %1957 = vmatprep.subr.bf16.mxu0 0
        %1958 = vmatpush1.bf16.msra.mxu0 0
        %1959 = vmatprep.subr.bf16.mxu0 0
        %1960 = vmatpush1.bf16.msra.mxu0 0
        %1961 = vmatprep.subr.bf16.mxu0 0
        %1962 = vmatpush1.bf16.msra.mxu0 0
        %1963 = vmatprep.subr.bf16.mxu0 0
        %1964 = vmatpush1.bf16.msra.mxu0 0
        %1965 = vmatprep.subr.bf16.mxu0 0
        %1966 = vmatpush1.bf16.msra.mxu0 0
        %1967 = vmatprep.subr.bf16.mxu0 0
        %1968 = vmatpush1.bf16.msra.mxu0 0
        %1969 = vmatprep.subr.bf16.mxu0 0
        %1970 = vmatpush1.bf16.msra.mxu0 0
        %1971 = vmatprep.subr.bf16.mxu0 0
        %1972 = vmatpush1.bf16.msra.mxu0 0
        %1973 = vmatprep.subr.bf16.mxu0 0
        %1974 = vmatpush1.bf16.msra.mxu0 0
        %1975 = vmatprep.subr.bf16.mxu0 0
        %1976 = vmatpush1.bf16.msra.mxu0 0
        %1977 = vmatprep.mubr.bf16.mxu0 0
        %1978 = vmatmul.mubr.bf16.gmra.mrb[0].mxu0 %v1931
        %v1979 = vpop.f32.mrb[0].mxu0
        %v1980 = vadd.f32 0.0, %v1979
        %v1981 = vpop.f32.mrb[0].mxu0
        %v1982 = vadd.f32 0.0, %v1981
        %v1983 = vpop.f32.mrb[0].mxu0
        %v1984 = vadd.f32 0.0, %v1983
        %v1985 = vpop.f32.mrb[0].mxu0
        %v1986 = vadd.f32 0.0, %v1985
        %1987 = vmatprep.mubr.bf16.mxu0 0
        %1988 = vmatmul.mubr.bf16.gmra.mrb[0].mxu0 %v1934
        %v1989 = vpop.f32.mrb[0].mxu0
        %v1990 = vadd.f32 0.0, %v1989
        %v1991 = vpop.f32.mrb[0].mxu0
        %v1992 = vadd.f32 0.0, %v1991
        %v1993 = vpop.f32.mrb[0].mxu0
        %v1994 = vadd.f32 0.0, %v1993
        %v1995 = vpop.f32.mrb[0].mxu0
        %v1996 = vadd.f32 0.0, %v1995
        %1997 = vmatprep.mubr.bf16.mxu0 0
        %1998 = vmatmul.mubr.bf16.gmra.mrb[0].mxu0 %v1937
        %v1999 = vpop.f32.mrb[0].mxu0
        %v2000 = vadd.f32 0.0, %v1999
        %v2001 = vpop.f32.mrb[0].mxu0
        %v2002 = vadd.f32 0.0, %v2001
        %v2003 = vpop.f32.mrb[0].mxu0
        %v2004 = vadd.f32 0.0, %v2003
        %v2005 = vpop.f32.mrb[0].mxu0
        %v2006 = vadd.f32 0.0, %v2005
        %2007 = vdwg.mxu0
        %v2008 = vadd.f32 %v1711, %v1980
        %v2009 = vadd.f32 %v1712, %v1982
        %v2010 = vadd.f32 %v1713, %v1984
        %v2011 = vadd.f32 %v1714, %v1986
        %v2012 = vadd.f32 %v1715, %v1990
        %v2013 = vadd.f32 %v1716, %v1992
        %v2014 = vadd.f32 %v1717, %v1994
        %v2015 = vadd.f32 %v1718, %v1996
        %v2016 = vadd.f32 %v1719, %v2000
        %v2017 = vadd.f32 %v1720, %v2002
        %v2018 = vadd.f32 %v1721, %v2004
        %v2019 = vadd.f32 %v1722, %v2006
        %s2020 = scalar_lea.vmem %s1, 480
        %v2021 = vld [vmem:[%s2020] sm:$0xff]
        %v2022 = vld [vmem:[%s2020 + $0x8] sm:$0xff]
        %v2023 = vld [vmem:[%s2020 + $0x10] sm:$0xff]
        %v2024 = vld [vmem:[%s2020 + $0x18] sm:$0xff]
        %v2025 = vld [vmem:[%s2020 + $0x20] sm:$0xff]
        %v2026 = vld [vmem:[%s2020 + $0x28] sm:$0xff]
        %v2027 = vld [vmem:[%s2020 + $0x30] sm:$0xff]
        %v2028 = vld [vmem:[%s2020 + $0x38] sm:$0xff]
        %v2029 = vld [vmem:[%s2020 + $0x40] sm:$0xff]
        %v2030 = vld [vmem:[%s2020 + $0x48] sm:$0xff]
        %v2031 = vld [vmem:[%s2020 + $0x50] sm:$0x77]
        %v2032 = vld [vmem:[%s2020 + $0x58] sm:$0x77]
        %v2045 = vunpack.c.l.b16 %v2021
        %v2046 = vunpack.c.h.b16 %v2021
        %v2047 = vunpack.c.l.b16 %v2022
        %v2048 = vunpack.c.h.b16 %v2022
        %v2049 = vunpack.c.l.b16 %v2023
        %v2050 = vunpack.c.h.b16 %v2023
        %v2051 = vunpack.c.l.b16 %v2024
        %v2052 = vunpack.c.h.b16 %v2024
        %v2053 = vunpack.c.l.b16 %v2025
        %v2054 = vunpack.c.h.b16 %v2025
        %v2055 = vunpack.c.l.b16 %v2026
        %v2056 = vunpack.c.h.b16 %v2026
        %v2057 = vunpack.c.l.b16 %v2027
        %v2058 = vunpack.c.h.b16 %v2027
        %v2059 = vunpack.c.l.b16 %v2028
        %v2060 = vunpack.c.h.b16 %v2028
        %v2061 = vunpack.c.l.b16 %v2029
        %v2062 = vunpack.c.h.b16 %v2029
        %v2063 = vunpack.c.l.b16 %v2030
        %v2064 = vunpack.c.h.b16 %v2030
        %v2065 = vunpack.c.l.b16 %v2031
        %v2066 = vunpack.c.h.b16 %v2031
        %v2067 = vunpack.c.l.b16 %v2032
        %v2068 = vunpack.c.h.b16 %v2032
        %v2069 = vpack.c.b16 %v2049, %v2045
        %v2070 = vpack.c.b16 %v2050, %v2046
        %v2071 = vpack.c.b16 %v2051, %v2047
        %v2072 = vpack.c.b16 %v2052, %v2048
        %v2073 = vpack.c.b16 %v2057, %v2053
        %v2074 = vpack.c.b16 %v2058, %v2054
        %v2075 = vpack.c.b16 %v2059, %v2055
        %v2076 = vpack.c.b16 %v2060, %v2056
        %v2077 = vpack.c.b16 %v2065, %v2061
        %v2078 = vpack.c.b16 %v2066, %v2062
        %v2079 = vpack.c.b16 %v2067, %v2063
        %v2080 = vpack.c.b16 %v2068, %v2064
        %v2091 = vsel %vm617, %v2072, 0
        %v2094 = vsel %vm617, %v2076, 0
        %v2097 = vsel %vm617, %v2080, 0
        %2099 = vmatprep.subr.bf16.mxu0 0
        %2100 = vmatpush1.bf16.msra.mxu0 %v556
        %2101 = vmatprep.subr.bf16.mxu0 0
        %2102 = vmatpush1.bf16.msra.mxu0 %v557
        %2103 = vmatprep.subr.bf16.mxu0 0
        %2104 = vmatpush1.bf16.msra.mxu0 %v558
        %2105 = vmatprep.subr.bf16.mxu0 0
        %2106 = vmatpush1.bf16.msra.mxu0 %v559
        %2107 = vmatprep.subr.bf16.mxu0 0
        %2108 = vmatpush1.bf16.msra.mxu0 %v560
        %2109 = vmatprep.subr.bf16.mxu0 0
        %2110 = vmatpush1.bf16.msra.mxu0 %v561
        %2111 = vmatprep.subr.bf16.mxu0 0
        %2112 = vmatpush1.bf16.msra.mxu0 %v562
        %2113 = vmatprep.subr.bf16.mxu0 0
        %2114 = vmatpush1.bf16.msra.mxu0 %v563
        %2115 = vmatprep.subr.bf16.mxu0 0
        %2116 = vmatpush1.bf16.msra.mxu0 %v564
        %2117 = vmatprep.subr.bf16.mxu0 0
        %2118 = vmatpush1.bf16.msra.mxu0 %v565
        %2119 = vmatprep.subr.bf16.mxu0 0
        %2120 = vmatpush1.bf16.msra.mxu0 %v566
        %2121 = vmatprep.subr.bf16.mxu0 0
        %2122 = vmatpush1.bf16.msra.mxu0 %v567
        %2123 = vmatprep.subr.bf16.mxu0 0
        %2124 = vmatpush1.bf16.msra.mxu0 %v568
        %2125 = vmatprep.subr.bf16.mxu0 0
        %2126 = vmatpush1.bf16.msra.mxu0 %v569
        %2127 = vmatprep.subr.bf16.mxu0 0
        %2128 = vmatpush1.bf16.msra.mxu0 %v570
        %2129 = vmatprep.subr.bf16.mxu0 0
        %2130 = vmatpush1.bf16.msra.mxu0 %v571
        %2131 = vmatprep.mubr.bf16.mxu0 %v2070
        %2132 = vmatmul.mubr.bf16.gmra.mrb[0].mxu0 %v2069
        %v2133 = vpop.f32.mrb[0].mxu0
        %v2134 = vadd.f32 0.0, %v2133
        %v2135 = vpop.f32.mrb[0].mxu0
        %v2136 = vpop.f32.mrb[0].mxu0
        %v2137 = vadd.f32 0.0, %v2136
        %v2138 = vpop.f32.mrb[0].mxu0
        %2139 = vmatprep.mubr.bf16.mxu0 %v2074
        %2140 = vmatmul.mubr.bf16.gmra.mrb[0].mxu0 %v2073
        %v2141 = vpop.f32.mrb[0].mxu0
        %v2142 = vadd.f32 0.0, %v2141
        %v2143 = vpop.f32.mrb[0].mxu0
        %v2144 = vpop.f32.mrb[0].mxu0
        %v2145 = vadd.f32 0.0, %v2144
        %v2146 = vpop.f32.mrb[0].mxu0
        %2147 = vmatprep.mubr.bf16.mxu0 %v2078
        %2148 = vmatmul.mubr.bf16.gmra.mrb[0].mxu0 %v2077
        %v2149 = vpop.f32.mrb[0].mxu0
        %v2150 = vadd.f32 0.0, %v2149
        %v2151 = vpop.f32.mrb[0].mxu0
        %v2152 = vpop.f32.mrb[0].mxu0
        %v2153 = vadd.f32 0.0, %v2152
        %v2154 = vpop.f32.mrb[0].mxu0
        %2155 = vdwg.mxu0
        %2156 = vmatprep.subr.bf16.mxu0 0
        %2157 = vmatpush1.bf16.msra.mxu0 %v572
        %2158 = vmatprep.subr.bf16.mxu0 0
        %2159 = vmatpush1.bf16.msra.mxu0 %v573
        %2160 = vmatprep.subr.bf16.mxu0 0
        %2161 = vmatpush1.bf16.msra.mxu0 %v574
        %2162 = vmatprep.subr.bf16.mxu0 0
        %2163 = vmatpush1.bf16.msra.mxu0 %v575
        %2164 = vmatprep.subr.bf16.mxu0 0
        %2165 = vmatpush1.bf16.msra.mxu0 %v576
        %2166 = vmatprep.subr.bf16.mxu0 0
        %2167 = vmatpush1.bf16.msra.mxu0 %v577
        %2168 = vmatprep.subr.bf16.mxu0 0
        %2169 = vmatpush1.bf16.msra.mxu0 %v578
        %2170 = vmatprep.subr.bf16.mxu0 0
        %2171 = vmatpush1.bf16.msra.mxu0 %v579
        %2172 = vmatprep.subr.bf16.mxu0 0
        %2173 = vmatpush1.bf16.msra.mxu0 %v580
        %2174 = vmatprep.subr.bf16.mxu0 0
        %2175 = vmatpush1.bf16.msra.mxu0 %v581
        %2176 = vmatprep.subr.bf16.mxu0 0
        %2177 = vmatpush1.bf16.msra.mxu0 %v582
        %2178 = vmatprep.subr.bf16.mxu0 0
        %2179 = vmatpush1.bf16.msra.mxu0 %v583
        %2180 = vmatprep.subr.bf16.mxu0 0
        %2181 = vmatpush1.bf16.msra.mxu0 %v584
        %2182 = vmatprep.subr.bf16.mxu0 0
        %2183 = vmatpush1.bf16.msra.mxu0 %v585
        %2184 = vmatprep.subr.bf16.mxu0 0
        %2185 = vmatpush1.bf16.msra.mxu0 %v632
        %2186 = vmatprep.subr.bf16.mxu0 0
        %2187 = vmatpush1.bf16.msra.mxu0 0
        %2188 = vmatprep.mubr.bf16.mxu0 %v2091
        %2189 = vmatmul.mubr.bf16.gmra.mrb[0].mxu0 %v2071
        %v2190 = vpop.f32.mrb[0].mxu0
        %v2191 = vadd.f32 %v2134, %v2190
        %v2192 = vpop.f32.mrb[0].mxu0
        %v2193 = vpop.f32.mrb[0].mxu0
        %v2194 = vadd.f32 %v2137, %v2193
        %v2195 = vpop.f32.mrb[0].mxu0
        %2196 = vmatprep.mubr.bf16.mxu0 %v2094
        %2197 = vmatmul.mubr.bf16.gmra.mrb[0].mxu0 %v2075
        %v2198 = vpop.f32.mrb[0].mxu0
        %v2199 = vadd.f32 %v2142, %v2198
        %v2200 = vpop.f32.mrb[0].mxu0
        %v2201 = vpop.f32.mrb[0].mxu0
        %v2202 = vadd.f32 %v2145, %v2201
        %v2203 = vpop.f32.mrb[0].mxu0
        %2204 = vmatprep.mubr.bf16.mxu0 %v2097
        %2205 = vmatmul.mubr.bf16.gmra.mrb[0].mxu0 %v2079
        %v2206 = vpop.f32.mrb[0].mxu0
        %v2207 = vadd.f32 %v2150, %v2206
        %v2208 = vpop.f32.mrb[0].mxu0
        %v2209 = vpop.f32.mrb[0].mxu0
        %v2210 = vadd.f32 %v2153, %v2209
        %v2211 = vpop.f32.mrb[0].mxu0
        %2212 = vdwg.mxu0
        %v2213 = vpack.c.bf16 %v2194, %v2191
        %v2214 = vpack.c.bf16 %v2202, %v2199
        %v2215 = vpack.c.bf16 %v2210, %v2207
        %s2216 = scalar_lea.vmem %s2, 80
        %v2217 = vld [vmem:[%s2216] sm:$0xff]
        %v2218 = vld [vmem:[%s2216 + $0x8] sm:$0x11]
        %v2221 = vunpack.c.l.b16 %v2217
        %v2222 = vunpack.c.h.b16 %v2217
        %v2223 = vunpack.c.l.b16 %v2218
        %v2224 = vunpack.c.h.b16 %v2218
        %v2225 = vpack.c.b16 %v2223, %v2221
        %v2226 = vpack.c.b16 %v2224, %v2222
        %v2228 = vsel %vm960, %v2213, 0
        %v2231 = vsel %vm960, %v2214, 0
        %v2234 = vsel %vm960, %v2215, 0
        %v2237 = vand.u32 %v2225, %v973
        %v2240 = vand.u32 %v2226, %v973
        %2242 = vmatprep.subr.bf16.mxu0 %v2240
        %2243 = vmatpush1.bf16.msra.mxu0 %v2237
        %2244 = vmatprep.subr.bf16.mxu0 0
        %2245 = vmatpush1.bf16.msra.mxu0 0
        %2246 = vmatprep.subr.bf16.mxu0 0
        %2247 = vmatpush1.bf16.msra.mxu0 0
        %2248 = vmatprep.subr.bf16.mxu0 0
        %2249 = vmatpush1.bf16.msra.mxu0 0
        %2250 = vmatprep.subr.bf16.mxu0 0
        %2251 = vmatpush1.bf16.msra.mxu0 0
        %2252 = vmatprep.subr.bf16.mxu0 0
        %2253 = vmatpush1.bf16.msra.mxu0 0
        %2254 = vmatprep.subr.bf16.mxu0 0
        %2255 = vmatpush1.bf16.msra.mxu0 0
        %2256 = vmatprep.subr.bf16.mxu0 0
        %2257 = vmatpush1.bf16.msra.mxu0 0
        %2258 = vmatprep.subr.bf16.mxu0 0
        %2259 = vmatpush1.bf16.msra.mxu0 0
        %2260 = vmatprep.subr.bf16.mxu0 0
        %2261 = vmatpush1.bf16.msra.mxu0 0
        %2262 = vmatprep.subr.bf16.mxu0 0
        %2263 = vmatpush1.bf16.msra.mxu0 0
        %2264 = vmatprep.subr.bf16.mxu0 0
        %2265 = vmatpush1.bf16.msra.mxu0 0
        %2266 = vmatprep.subr.bf16.mxu0 0
        %2267 = vmatpush1.bf16.msra.mxu0 0
        %2268 = vmatprep.subr.bf16.mxu0 0
        %2269 = vmatpush1.bf16.msra.mxu0 0
        %2270 = vmatprep.subr.bf16.mxu0 0
        %2271 = vmatpush1.bf16.msra.mxu0 0
        %2272 = vmatprep.subr.bf16.mxu0 0
        %2273 = vmatpush1.bf16.msra.mxu0 0
        %2274 = vmatprep.mubr.bf16.mxu0 0
        %2275 = vmatmul.mubr.bf16.gmra.mrb[0].mxu0 %v2228
        %v2276 = vpop.f32.mrb[0].mxu0
        %v2277 = vadd.f32 0.0, %v2276
        %v2278 = vpop.f32.mrb[0].mxu0
        %v2279 = vadd.f32 0.0, %v2278
        %v2280 = vpop.f32.mrb[0].mxu0
        %v2281 = vadd.f32 0.0, %v2280
        %v2282 = vpop.f32.mrb[0].mxu0
        %v2283 = vadd.f32 0.0, %v2282
        %2284 = vmatprep.mubr.bf16.mxu0 0
        %2285 = vmatmul.mubr.bf16.gmra.mrb[0].mxu0 %v2231
        %v2286 = vpop.f32.mrb[0].mxu0
        %v2287 = vadd.f32 0.0, %v2286
        %v2288 = vpop.f32.mrb[0].mxu0
        %v2289 = vadd.f32 0.0, %v2288
        %v2290 = vpop.f32.mrb[0].mxu0
        %v2291 = vadd.f32 0.0, %v2290
        %v2292 = vpop.f32.mrb[0].mxu0
        %v2293 = vadd.f32 0.0, %v2292
        %2294 = vmatprep.mubr.bf16.mxu0 0
        %2295 = vmatmul.mubr.bf16.gmra.mrb[0].mxu0 %v2234
        %v2296 = vpop.f32.mrb[0].mxu0
        %v2297 = vadd.f32 0.0, %v2296
        %v2298 = vpop.f32.mrb[0].mxu0
        %v2299 = vadd.f32 0.0, %v2298
        %v2300 = vpop.f32.mrb[0].mxu0
        %v2301 = vadd.f32 0.0, %v2300
        %v2302 = vpop.f32.mrb[0].mxu0
        %v2303 = vadd.f32 0.0, %v2302
        %2304 = vdwg.mxu0
        %v2305 = vadd.f32 %v2008, %v2277
        %v2306 = vadd.f32 %v2009, %v2279
        %v2307 = vadd.f32 %v2010, %v2281
        %v2308 = vadd.f32 %v2011, %v2283
        %v2309 = vadd.f32 %v2012, %v2287
        %v2310 = vadd.f32 %v2013, %v2289
        %v2311 = vadd.f32 %v2014, %v2291
        %v2312 = vadd.f32 %v2015, %v2293
        %v2313 = vadd.f32 %v2016, %v2297
        %v2314 = vadd.f32 %v2017, %v2299
        %v2315 = vadd.f32 %v2018, %v2301
        %v2316 = vadd.f32 %v2019, %v2303
        %v2317 = vpack.c.bf16 %v2307, %v2305
        %v2318 = vpack.c.bf16 %v2308, %v2306
        %v2319 = vpack.c.bf16 %v2311, %v2309
        %v2320 = vpack.c.bf16 %v2312, %v2310
        %v2321 = vpack.c.bf16 %v2313, %v2313
        %v2322 = vpack.c.bf16 %v2314, %v2314
        %v2323 = vld [vmem:[%s3] sm:$0xff]
        %v2324 = vld [vmem:[%s3 + $0x8] sm:$0xff]
        %v2325 = vld [vmem:[%s3 + $0x10] sm:$0xff]
        %v2326 = vld [vmem:[%s3 + $0x18] sm:$0xff]
        %v2327 = vld [vmem:[%s3 + $0x20] sm:$0xff]
        %v2328 = vld [vmem:[%s3 + $0x28] sm:$0xff]
        %v2329 = vld [vmem:[%s3 + $0x30] sm:$0xff]
        %v2330 = vld [vmem:[%s3 + $0x38] sm:$0xff]
        %v2331 = vld [vmem:[%s3 + $0x40] sm:$0xff]
        %v2332 = vld [vmem:[%s3 + $0x48] sm:$0xff]
        %v2333 = vld [vmem:[%s3 + $0x50] sm:$0xff]
        %v2334 = vld [vmem:[%s3 + $0x58] sm:$0xff]
        %v2335 = vld [vmem:[%s3 + $0x60] sm:$0xff]
        %v2336 = vld [vmem:[%s3 + $0x68] sm:$0xff]
        %v2337 = vld [vmem:[%s3 + $0x70] sm:$0xff]
        %v2338 = vld [vmem:[%s3 + $0x78] sm:$0xff]
        %v2339 = vld [vmem:[%s3 + $0x80] sm:$0xff]
        %v2340 = vld [vmem:[%s3 + $0x88] sm:$0xff]
        %v2341 = vld [vmem:[%s3 + $0x90] sm:$0xff]
        %v2342 = vld [vmem:[%s3 + $0x98] sm:$0xff]
        %v2343 = vld [vmem:[%s3 + $0xa0] sm:$0xff]
        %v2344 = vld [vmem:[%s3 + $0xa8] sm:$0xff]
        %v2345 = vld [vmem:[%s3 + $0xb0] sm:$0xff]
        %v2346 = vld [vmem:[%s3 + $0xb8] sm:$0xff]
        %v2347 = vld [vmem:[%s3 + $0xc0] sm:$0xff]
        %v2348 = vld [vmem:[%s3 + $0xc8] sm:$0xff]
        %v2349 = vld [vmem:[%s3 + $0xd0] sm:$0xff]
        %v2350 = vld [vmem:[%s3 + $0xd8] sm:$0xff]
        %v2351 = vld [vmem:[%s3 + $0xe0] sm:$0xff]
        %v2352 = vld [vmem:[%s3 + $0xe8] sm:$0xff]
        %v2353 = vld [vmem:[%s3 + $0xf0] sm:$0xff]
        %v2354 = vld [vmem:[%s3 + $0xf8] sm:$0xff]
        %v2355 = vpack.c.bf16 %v2315, %v2313
        %v2356 = vpack.c.bf16 %v2316, %v2314
        %s2357 = scalar_lea.vmem %s3, 256
        %v2358 = vld [vmem:[%s2357] sm:$0xff]
        %v2359 = vld [vmem:[%s2357 + $0x8] sm:$0xff]
        %v2360 = vld [vmem:[%s2357 + $0x10] sm:$0xff]
        %v2361 = vld [vmem:[%s2357 + $0x18] sm:$0xff]
        %v2362 = vld [vmem:[%s2357 + $0x20] sm:$0xff]
        %v2363 = vld [vmem:[%s2357 + $0x28] sm:$0xff]
        %v2364 = vld [vmem:[%s2357 + $0x30] sm:$0xff]
        %v2365 = vld [vmem:[%s2357 + $0x38] sm:$0xff]
        %v2366 = vld [vmem:[%s2357 + $0x40] sm:$0xff]
        %v2367 = vld [vmem:[%s2357 + $0x48] sm:$0xff]
        %v2368 = vld [vmem:[%s2357 + $0x50] sm:$0xff]
        %v2369 = vld [vmem:[%s2357 + $0x58] sm:$0xff]
        %v2370 = vld [vmem:[%s2357 + $0x60] sm:$0xff]
        %v2371 = vld [vmem:[%s2357 + $0x68] sm:$0xff]
        %v2372 = vld [vmem:[%s2357 + $0x70] sm:$0xff]
        %v2373 = vld [vmem:[%s2357 + $0x78] sm:$0xff]
        %v2374 = vld [vmem:[%s2357 + $0x80] sm:$0xff]
        %v2375 = vld [vmem:[%s2357 + $0x88] sm:$0xff]
        %v2376 = vld [vmem:[%s2357 + $0x90] sm:$0xff]
        %v2377 = vld [vmem:[%s2357 + $0x98] sm:$0xff]
        %v2378 = vld [vmem:[%s2357 + $0xa0] sm:$0xff]
        %v2379 = vld [vmem:[%s2357 + $0xa8] sm:$0xff]
        %v2380 = vld [vmem:[%s2357 + $0xb0] sm:$0xff]
        %v2381 = vld [vmem:[%s2357 + $0xb8] sm:$0xff]
        %v2382 = vld [vmem:[%s2357 + $0xc0] sm:$0xff]
        %v2383 = vld [vmem:[%s2357 + $0xc8] sm:$0xff]
        %v2384 = vld [vmem:[%s2357 + $0xd0] sm:$0xff]
        %v2385 = vld [vmem:[%s2357 + $0xd8] sm:$0xff]
        %v2386 = vld [vmem:[%s2357 + $0xe0] sm:$0xff]
        %v2387 = vld [vmem:[%s2357 + $0xe8] sm:$0xff]
        %v2388 = vld [vmem:[%s2357 + $0xf0] sm:$0xff]
        %v2389 = vld [vmem:[%s2357 + $0xf8] sm:$0xff]
        %vm2390 = vsmask.f32 7424
        %v2392 = vshrl.u32 %v2317, 16
        %v2394 = vshll.u32 %v2317, 16
        %v2396 = vrot.slane %v2394, 1
        %v2397 = vor.u32 %v2392, %v2396
        %v2399 = vshll.u32 %v2319, 16
        %v2401 = vrot.slane %v2399, 1
        %v2402 = vsel %vm2390, %v2397, %v2401
        %v2404 = vshrl.u32 %v2318, 16
        %v2406 = vshll.u32 %v2318, 16
        %v2408 = vrot.slane %v2406, 1
        %v2409 = vor.u32 %v2404, %v2408
        %v2411 = vshll.u32 %v2320, 16
        %v2413 = vrot.slane %v2411, 1
        %v2414 = vsel %vm2390, %v2409, %v2413
        %v2415 = vshrl.u32 %v2319, 16
        %v2417 = vor.u32 %v2415, %v2401
        %v2419 = vshll.u32 %v2355, 16
        %v2421 = vrot.slane %v2419, 1
        %v2422 = vsel %vm2390, %v2417, %v2421
        %v2423 = vshrl.u32 %v2320, 16
        %v2425 = vor.u32 %v2423, %v2413
        %v2427 = vshll.u32 %v2356, 16
        %v2429 = vrot.slane %v2427, 1
        %v2430 = vsel %vm2390, %v2425, %v2429
        %v2431 = vshrl.u32 %v2355, 16
        %v2433 = vor.u32 %v2431, %v2421
        %v2434 = vshrl.u32 %v2356, 16
        %v2436 = vor.u32 %v2434, %v2429
        %v2475 = vunpack.c.l.b16 %v2358
        %v2476 = vunpack.c.h.b16 %v2358
        %v2477 = vunpack.c.l.b16 %v2359
        %v2478 = vunpack.c.h.b16 %v2359
        %v2479 = vunpack.c.l.b16 %v2360
        %v2480 = vunpack.c.h.b16 %v2360
        %v2481 = vunpack.c.l.b16 %v2361
        %v2482 = vunpack.c.h.b16 %v2361
        %v2483 = vunpack.c.l.b16 %v2362
        %v2484 = vunpack.c.h.b16 %v2362
        %v2485 = vunpack.c.l.b16 %v2363
        %v2486 = vunpack.c.h.b16 %v2363
        %v2487 = vunpack.c.l.b16 %v2364
        %v2488 = vunpack.c.h.b16 %v2364
        %v2489 = vunpack.c.l.b16 %v2365
        %v2490 = vunpack.c.h.b16 %v2365
        %v2491 = vunpack.c.l.b16 %v2366
        %v2492 = vunpack.c.h.b16 %v2366
        %v2493 = vunpack.c.l.b16 %v2367
        %v2494 = vunpack.c.h.b16 %v2367
        %v2495 = vunpack.c.l.b16 %v2368
        %v2496 = vunpack.c.h.b16 %v2368
        %v2497 = vunpack.c.l.b16 %v2369
        %v2498 = vunpack.c.h.b16 %v2369
        %v2499 = vunpack.c.l.b16 %v2370
        %v2500 = vunpack.c.h.b16 %v2370
        %v2501 = vunpack.c.l.b16 %v2371
        %v2502 = vunpack.c.h.b16 %v2371
        %v2503 = vunpack.c.l.b16 %v2372
        %v2504 = vunpack.c.h.b16 %v2372
        %v2505 = vunpack.c.l.b16 %v2373
        %v2506 = vunpack.c.h.b16 %v2373
        %v2507 = vunpack.c.l.b16 %v2374
        %v2508 = vunpack.c.h.b16 %v2374
        %v2509 = vunpack.c.l.b16 %v2375
        %v2510 = vunpack.c.h.b16 %v2375
        %v2511 = vunpack.c.l.b16 %v2376
        %v2512 = vunpack.c.h.b16 %v2376
        %v2513 = vunpack.c.l.b16 %v2377
        %v2514 = vunpack.c.h.b16 %v2377
        %v2515 = vunpack.c.l.b16 %v2378
        %v2516 = vunpack.c.h.b16 %v2378
        %v2517 = vunpack.c.l.b16 %v2379
        %v2518 = vunpack.c.h.b16 %v2379
        %v2519 = vunpack.c.l.b16 %v2380
        %v2520 = vunpack.c.h.b16 %v2380
        %v2521 = vunpack.c.l.b16 %v2381
        %v2522 = vunpack.c.h.b16 %v2381
        %v2523 = vunpack.c.l.b16 %v2382
        %v2524 = vunpack.c.h.b16 %v2382
        %v2525 = vunpack.c.l.b16 %v2383
        %v2526 = vunpack.c.h.b16 %v2383
        %v2527 = vunpack.c.l.b16 %v2384
        %v2528 = vunpack.c.h.b16 %v2384
        %v2529 = vunpack.c.l.b16 %v2385
        %v2530 = vunpack.c.h.b16 %v2385
        %v2531 = vunpack.c.l.b16 %v2386
        %v2532 = vunpack.c.h.b16 %v2386
        %v2533 = vunpack.c.l.b16 %v2387
        %v2534 = vunpack.c.h.b16 %v2387
        %v2535 = vunpack.c.l.b16 %v2388
        %v2536 = vunpack.c.h.b16 %v2388
        %v2537 = vunpack.c.l.b16 %v2389
        %v2538 = vunpack.c.h.b16 %v2389
        %v2539 = vpack.c.b16 %v2477, %v2475
        %v2540 = vpack.c.b16 %v2478, %v2476
        %v2541 = vpack.c.b16 %v2481, %v2479
        %v2542 = vpack.c.b16 %v2482, %v2480
        %v2543 = vpack.c.b16 %v2485, %v2483
        %v2544 = vpack.c.b16 %v2486, %v2484
        %v2545 = vpack.c.b16 %v2489, %v2487
        %v2546 = vpack.c.b16 %v2490, %v2488
        %v2547 = vpack.c.b16 %v2493, %v2491
        %v2548 = vpack.c.b16 %v2494, %v2492
        %v2549 = vpack.c.b16 %v2497, %v2495
        %v2550 = vpack.c.b16 %v2498, %v2496
        %v2551 = vpack.c.b16 %v2501, %v2499
        %v2552 = vpack.c.b16 %v2502, %v2500
        %v2553 = vpack.c.b16 %v2505, %v2503
        %v2554 = vpack.c.b16 %v2506, %v2504
        %v2555 = vpack.c.b16 %v2509, %v2507
        %v2556 = vpack.c.b16 %v2510, %v2508
        %v2557 = vpack.c.b16 %v2513, %v2511
        %v2558 = vpack.c.b16 %v2514, %v2512
        %v2559 = vpack.c.b16 %v2517, %v2515
        %v2560 = vpack.c.b16 %v2518, %v2516
        %v2561 = vpack.c.b16 %v2521, %v2519
        %v2562 = vpack.c.b16 %v2522, %v2520
        %v2563 = vpack.c.b16 %v2525, %v2523
        %v2564 = vpack.c.b16 %v2526, %v2524
        %v2565 = vpack.c.b16 %v2529, %v2527
        %v2566 = vpack.c.b16 %v2530, %v2528
        %v2567 = vpack.c.b16 %v2533, %v2531
        %v2568 = vpack.c.b16 %v2534, %v2532
        %v2569 = vpack.c.b16 %v2537, %v2535
        %v2570 = vpack.c.b16 %v2538, %v2536
        %2603 = vmatprep.subr.bf16.mxu0 %v2540
        %2604 = vmatpush1.bf16.msra.mxu0 %v2539
        %2605 = vmatprep.subr.bf16.mxu0 %v2542
        %2606 = vmatpush1.bf16.msra.mxu0 %v2541
        %2607 = vmatprep.subr.bf16.mxu0 %v2544
        %2608 = vmatpush1.bf16.msra.mxu0 %v2543
        %2609 = vmatprep.subr.bf16.mxu0 %v2546
        %2610 = vmatpush1.bf16.msra.mxu0 %v2545
        %2611 = vmatprep.subr.bf16.mxu0 %v2548
        %2612 = vmatpush1.bf16.msra.mxu0 %v2547
        %2613 = vmatprep.subr.bf16.mxu0 %v2550
        %2614 = vmatpush1.bf16.msra.mxu0 %v2549
        %2615 = vmatprep.subr.bf16.mxu0 %v2552
        %2616 = vmatpush1.bf16.msra.mxu0 %v2551
        %2617 = vmatprep.subr.bf16.mxu0 %v2554
        %2618 = vmatpush1.bf16.msra.mxu0 %v2553
        %2619 = vmatprep.subr.bf16.mxu0 %v2556
        %2620 = vmatpush1.bf16.msra.mxu0 %v2555
        %2621 = vmatprep.subr.bf16.mxu0 %v2558
        %2622 = vmatpush1.bf16.msra.mxu0 %v2557
        %2623 = vmatprep.subr.bf16.mxu0 %v2560
        %2624 = vmatpush1.bf16.msra.mxu0 %v2559
        %2625 = vmatprep.subr.bf16.mxu0 %v2562
        %2626 = vmatpush1.bf16.msra.mxu0 %v2561
        %2627 = vmatprep.subr.bf16.mxu0 %v2564
        %2628 = vmatpush1.bf16.msra.mxu0 %v2563
        %2629 = vmatprep.subr.bf16.mxu0 %v2566
        %2630 = vmatpush1.bf16.msra.mxu0 %v2565
        %2631 = vmatprep.subr.bf16.mxu0 %v2568
        %2632 = vmatpush1.bf16.msra.mxu0 %v2567
        %2633 = vmatprep.subr.bf16.mxu0 %v2570
        %2634 = vmatpush1.bf16.msra.mxu0 %v2569
        %2635 = vmatprep.mubr.bf16.mxu0 %v2414
        %2636 = vmatmul.mubr.bf16.gmra.mrb[0].mxu0 %v2402
        %v2637 = vpop.f32.mrb[0].mxu0
        %v2638 = vadd.f32 0.0, %v2637
        %v2639 = vpop.f32.mrb[0].mxu0
        %v2640 = vadd.f32 0.0, %v2639
        %v2641 = vpop.f32.mrb[0].mxu0
        %v2642 = vadd.f32 0.0, %v2641
        %v2643 = vpop.f32.mrb[0].mxu0
        %v2644 = vadd.f32 0.0, %v2643
        %2645 = vmatprep.mubr.bf16.mxu0 %v2430
        %2646 = vmatmul.mubr.bf16.gmra.mrb[0].mxu0 %v2422
        %v2647 = vpop.f32.mrb[0].mxu0
        %v2648 = vadd.f32 0.0, %v2647
        %v2649 = vpop.f32.mrb[0].mxu0
        %v2650 = vadd.f32 0.0, %v2649
        %v2651 = vpop.f32.mrb[0].mxu0
        %v2652 = vadd.f32 0.0, %v2651
        %v2653 = vpop.f32.mrb[0].mxu0
        %v2654 = vadd.f32 0.0, %v2653
        %2655 = vmatprep.mubr.bf16.mxu0 %v2436
        %2656 = vmatmul.mubr.bf16.gmra.mrb[0].mxu0 %v2433
        %v2657 = vpop.f32.mrb[0].mxu0
        %v2658 = vadd.f32 0.0, %v2657
        %v2659 = vpop.f32.mrb[0].mxu0
        %v2660 = vadd.f32 0.0, %v2659
        %v2661 = vpop.f32.mrb[0].mxu0
        %v2662 = vpop.f32.mrb[0].mxu0
        %2663 = vdwg.mxu0
        %v2696 = vunpack.c.l.b16 %v2323
        %v2697 = vunpack.c.h.b16 %v2323
        %v2698 = vunpack.c.l.b16 %v2324
        %v2699 = vunpack.c.h.b16 %v2324
        %v2700 = vunpack.c.l.b16 %v2325
        %v2701 = vunpack.c.h.b16 %v2325
        %v2702 = vunpack.c.l.b16 %v2326
        %v2703 = vunpack.c.h.b16 %v2326
        %v2704 = vunpack.c.l.b16 %v2327
        %v2705 = vunpack.c.h.b16 %v2327
        %v2706 = vunpack.c.l.b16 %v2328
        %v2707 = vunpack.c.h.b16 %v2328
        %v2708 = vunpack.c.l.b16 %v2329
        %v2709 = vunpack.c.h.b16 %v2329
        %v2710 = vunpack.c.l.b16 %v2330
        %v2711 = vunpack.c.h.b16 %v2330
        %v2712 = vunpack.c.l.b16 %v2331
        %v2713 = vunpack.c.h.b16 %v2331
        %v2714 = vunpack.c.l.b16 %v2332
        %v2715 = vunpack.c.h.b16 %v2332
        %v2716 = vunpack.c.l.b16 %v2333
        %v2717 = vunpack.c.h.b16 %v2333
        %v2718 = vunpack.c.l.b16 %v2334
        %v2719 = vunpack.c.h.b16 %v2334
        %v2720 = vunpack.c.l.b16 %v2335
        %v2721 = vunpack.c.h.b16 %v2335
        %v2722 = vunpack.c.l.b16 %v2336
        %v2723 = vunpack.c.h.b16 %v2336
        %v2724 = vunpack.c.l.b16 %v2337
        %v2725 = vunpack.c.h.b16 %v2337
        %v2726 = vunpack.c.l.b16 %v2338
        %v2727 = vunpack.c.h.b16 %v2338
        %v2728 = vunpack.c.l.b16 %v2339
        %v2729 = vunpack.c.h.b16 %v2339
        %v2730 = vunpack.c.l.b16 %v2340
        %v2731 = vunpack.c.h.b16 %v2340
        %v2732 = vunpack.c.l.b16 %v2341
        %v2733 = vunpack.c.h.b16 %v2341
        %v2734 = vunpack.c.l.b16 %v2342
        %v2735 = vunpack.c.h.b16 %v2342
        %v2736 = vunpack.c.l.b16 %v2343
        %v2737 = vunpack.c.h.b16 %v2343
        %v2738 = vunpack.c.l.b16 %v2344
        %v2739 = vunpack.c.h.b16 %v2344
        %v2740 = vunpack.c.l.b16 %v2345
        %v2741 = vunpack.c.h.b16 %v2345
        %v2742 = vunpack.c.l.b16 %v2346
        %v2743 = vunpack.c.h.b16 %v2346
        %v2744 = vunpack.c.l.b16 %v2347
        %v2745 = vunpack.c.h.b16 %v2347
        %v2746 = vunpack.c.l.b16 %v2348
        %v2747 = vunpack.c.h.b16 %v2348
        %v2748 = vunpack.c.l.b16 %v2349
        %v2749 = vunpack.c.h.b16 %v2349
        %v2750 = vunpack.c.l.b16 %v2350
        %v2751 = vunpack.c.h.b16 %v2350
        %v2752 = vunpack.c.l.b16 %v2351
        %v2753 = vunpack.c.h.b16 %v2351
        %v2754 = vunpack.c.l.b16 %v2352
        %v2755 = vunpack.c.h.b16 %v2352
        %v2756 = vunpack.c.l.b16 %v2353
        %v2757 = vunpack.c.h.b16 %v2353
        %v2758 = vunpack.c.l.b16 %v2354
        %v2759 = vunpack.c.h.b16 %v2354
        %v2760 = vpack.c.b16 %v2698, %v2696
        %v2761 = vpack.c.b16 %v2699, %v2697
        %v2762 = vpack.c.b16 %v2702, %v2700
        %v2763 = vpack.c.b16 %v2703, %v2701
        %v2764 = vpack.c.b16 %v2706, %v2704
        %v2765 = vpack.c.b16 %v2707, %v2705
        %v2766 = vpack.c.b16 %v2710, %v2708
        %v2767 = vpack.c.b16 %v2711, %v2709
        %v2768 = vpack.c.b16 %v2714, %v2712
        %v2769 = vpack.c.b16 %v2715, %v2713
        %v2770 = vpack.c.b16 %v2718, %v2716
        %v2771 = vpack.c.b16 %v2719, %v2717
        %v2772 = vpack.c.b16 %v2722, %v2720
        %v2773 = vpack.c.b16 %v2723, %v2721
        %v2774 = vpack.c.b16 %v2726, %v2724
        %v2775 = vpack.c.b16 %v2727, %v2725
        %v2776 = vpack.c.b16 %v2730, %v2728
        %v2777 = vpack.c.b16 %v2731, %v2729
        %v2778 = vpack.c.b16 %v2734, %v2732
        %v2779 = vpack.c.b16 %v2735, %v2733
        %v2780 = vpack.c.b16 %v2738, %v2736
        %v2781 = vpack.c.b16 %v2739, %v2737
        %v2782 = vpack.c.b16 %v2742, %v2740
        %v2783 = vpack.c.b16 %v2743, %v2741
        %v2784 = vpack.c.b16 %v2746, %v2744
        %v2785 = vpack.c.b16 %v2747, %v2745
        %v2786 = vpack.c.b16 %v2750, %v2748
        %v2787 = vpack.c.b16 %v2751, %v2749
        %v2788 = vpack.c.b16 %v2754, %v2752
        %v2789 = vpack.c.b16 %v2755, %v2753
        %v2790 = vpack.c.b16 %v2758, %v2756
        %v2791 = vpack.c.b16 %v2759, %v2757
        %2824 = vmatprep.subr.bf16.mxu0 %v2761
        %2825 = vmatpush1.bf16.msra.mxu0 %v2760
        %2826 = vmatprep.subr.bf16.mxu0 %v2763
        %2827 = vmatpush1.bf16.msra.mxu0 %v2762
        %2828 = vmatprep.subr.bf16.mxu0 %v2765
        %2829 = vmatpush1.bf16.msra.mxu0 %v2764
        %2830 = vmatprep.subr.bf16.mxu0 %v2767
        %2831 = vmatpush1.bf16.msra.mxu0 %v2766
        %2832 = vmatprep.subr.bf16.mxu0 %v2769
        %2833 = vmatpush1.bf16.msra.mxu0 %v2768
        %2834 = vmatprep.subr.bf16.mxu0 %v2771
        %2835 = vmatpush1.bf16.msra.mxu0 %v2770
        %2836 = vmatprep.subr.bf16.mxu0 %v2773
        %2837 = vmatpush1.bf16.msra.mxu0 %v2772
        %2838 = vmatprep.subr.bf16.mxu0 %v2775
        %2839 = vmatpush1.bf16.msra.mxu0 %v2774
        %2840 = vmatprep.subr.bf16.mxu0 %v2777
        %2841 = vmatpush1.bf16.msra.mxu0 %v2776
        %2842 = vmatprep.subr.bf16.mxu0 %v2779
        %2843 = vmatpush1.bf16.msra.mxu0 %v2778
        %2844 = vmatprep.subr.bf16.mxu0 %v2781
        %2845 = vmatpush1.bf16.msra.mxu0 %v2780
        %2846 = vmatprep.subr.bf16.mxu0 %v2783
        %2847 = vmatpush1.bf16.msra.mxu0 %v2782
        %2848 = vmatprep.subr.bf16.mxu0 %v2785
        %2849 = vmatpush1.bf16.msra.mxu0 %v2784
        %2850 = vmatprep.subr.bf16.mxu0 %v2787
        %2851 = vmatpush1.bf16.msra.mxu0 %v2786
        %2852 = vmatprep.subr.bf16.mxu0 %v2789
        %2853 = vmatpush1.bf16.msra.mxu0 %v2788
        %2854 = vmatprep.subr.bf16.mxu0 %v2791
        %2855 = vmatpush1.bf16.msra.mxu0 %v2790
        %2856 = vmatprep.mubr.bf16.mxu0 %v2318
        %2857 = vmatmul.mubr.bf16.gmra.mrb[0].mxu0 %v2317
        %v2858 = vpop.f32.mrb[0].mxu0
        %v2859 = vadd.f32 %v2638, %v2858
        %v2860 = vpop.f32.mrb[0].mxu0
        %v2861 = vadd.f32 %v2640, %v2860
        %v2862 = vpop.f32.mrb[0].mxu0
        %v2863 = vadd.f32 %v2642, %v2862
        %v2864 = vpop.f32.mrb[0].mxu0
        %v2865 = vadd.f32 %v2644, %v2864
        %2866 = vmatprep.mubr.bf16.mxu0 %v2320
        %2867 = vmatmul.mubr.bf16.gmra.mrb[0].mxu0 %v2319
        %v2868 = vpop.f32.mrb[0].mxu0
        %v2869 = vadd.f32 %v2648, %v2868
        %v2870 = vpop.f32.mrb[0].mxu0
        %v2871 = vadd.f32 %v2650, %v2870
        %v2872 = vpop.f32.mrb[0].mxu0
        %v2873 = vadd.f32 %v2652, %v2872
        %v2874 = vpop.f32.mrb[0].mxu0
        %v2875 = vadd.f32 %v2654, %v2874
        %2876 = vmatprep.mubr.bf16.mxu0 %v2322
        %2877 = vmatmul.mubr.bf16.gmra.mrb[0].mxu0 %v2321
        %v2878 = vpop.f32.mrb[0].mxu0
        %v2879 = vadd.f32 %v2658, %v2878
        %v2880 = vpop.f32.mrb[0].mxu0
        %v2881 = vadd.f32 %v2660, %v2880
        %v2882 = vpop.f32.mrb[0].mxu0
        %v2883 = vpop.f32.mrb[0].mxu0
        %2884 = vdwg.mxu0
        %s2885 = scalar_lea.vmem %s3, 512
        %v2886 = vld [vmem:[%s2885] sm:$0xff]
        %v2887 = vld [vmem:[%s2885 + $0x8] sm:$0xff]
        %v2888 = vld [vmem:[%s2885 + $0x10] sm:$0xff]
        %v2889 = vld [vmem:[%s2885 + $0x18] sm:$0xff]
        %v2890 = vld [vmem:[%s2885 + $0x20] sm:$0xff]
        %v2891 = vld [vmem:[%s2885 + $0x28] sm:$0xff]
        %v2892 = vld [vmem:[%s2885 + $0x30] sm:$0xff]
        %v2893 = vld [vmem:[%s2885 + $0x38] sm:$0xff]
        %v2894 = vld [vmem:[%s2885 + $0x40] sm:$0xff]
        %v2895 = vld [vmem:[%s2885 + $0x48] sm:$0xff]
        %v2896 = vld [vmem:[%s2885 + $0x50] sm:$0xff]
        %v2897 = vld [vmem:[%s2885 + $0x58] sm:$0xff]
        %v2898 = vld [vmem:[%s2885 + $0x60] sm:$0xff]
        %v2899 = vld [vmem:[%s2885 + $0x68] sm:$0xff]
        %v2900 = vld [vmem:[%s2885 + $0x70] sm:$0xff]
        %v2901 = vld [vmem:[%s2885 + $0x78] sm:$0xff]
        %v2902 = vld [vmem:[%s2885 + $0x80] sm:$0xff]
        %v2903 = vld [vmem:[%s2885 + $0x88] sm:$0xff]
        %v2904 = vld [vmem:[%s2885 + $0x90] sm:$0xff]
        %v2905 = vld [vmem:[%s2885 + $0x98] sm:$0xff]
        %v2906 = vld [vmem:[%s2885 + $0xa0] sm:$0xff]
        %v2907 = vld [vmem:[%s2885 + $0xa8] sm:$0xff]
        %v2908 = vld [vmem:[%s2885 + $0xb0] sm:$0xff]
        %v2909 = vld [vmem:[%s2885 + $0xb8] sm:$0xff]
        %v2910 = vld [vmem:[%s2885 + $0xc0] sm:$0xff]
        %v2911 = vld [vmem:[%s2885 + $0xc8] sm:$0xff]
        %v2912 = vld [vmem:[%s2885 + $0xd0] sm:$0xff]
        %v2913 = vld [vmem:[%s2885 + $0xd8] sm:$0xff]
        %v2914 = vld [vmem:[%s2885 + $0xe0] sm:$0xff]
        %v2915 = vld [vmem:[%s2885 + $0xe8] sm:$0xff]
        %v2916 = vld [vmem:[%s2885 + $0xf0] sm:$0xff]
        %v2917 = vld [vmem:[%s2885 + $0xf8] sm:$0xff]
        %vm2924 = vcmask 1046528
        %v2925 = vrot.slane %v2317, 1
        %v2926 = vrot.slane %v2319, 1
        %v2927 = vsel %vm2924, %v2925, %v2926
        %v2928 = vrot.slane %v2318, 1
        %v2929 = vrot.slane %v2320, 1
        %v2930 = vsel %vm2924, %v2928, %v2929
        %v2931 = vrot.slane %v2355, 1
        %v2932 = vsel %vm2924, %v2926, %v2931
        %v2933 = vrot.slane %v2356, 1
        %v2934 = vsel %vm2924, %v2929, %v2933
        %v2973 = vunpack.c.l.b16 %v2886
        %v2974 = vunpack.c.h.b16 %v2886
        %v2975 = vunpack.c.l.b16 %v2887
        %v2976 = vunpack.c.h.b16 %v2887
        %v2977 = vunpack.c.l.b16 %v2888
        %v2978 = vunpack.c.h.b16 %v2888
        %v2979 = vunpack.c.l.b16 %v2889
        %v2980 = vunpack.c.h.b16 %v2889
        %v2981 = vunpack.c.l.b16 %v2890
        %v2982 = vunpack.c.h.b16 %v2890
        %v2983 = vunpack.c.l.b16 %v2891
        %v2984 = vunpack.c.h.b16 %v2891
        %v2985 = vunpack.c.l.b16 %v2892
        %v2986 = vunpack.c.h.b16 %v2892
        %v2987 = vunpack.c.l.b16 %v2893
        %v2988 = vunpack.c.h.b16 %v2893
        %v2989 = vunpack.c.l.b16 %v2894
        %v2990 = vunpack.c.h.b16 %v2894
        %v2991 = vunpack.c.l.b16 %v2895
        %v2992 = vunpack.c.h.b16 %v2895
        %v2993 = vunpack.c.l.b16 %v2896
        %v2994 = vunpack.c.h.b16 %v2896
        %v2995 = vunpack.c.l.b16 %v2897
        %v2996 = vunpack.c.h.b16 %v2897
        %v2997 = vunpack.c.l.b16 %v2898
        %v2998 = vunpack.c.h.b16 %v2898
        %v2999 = vunpack.c.l.b16 %v2899
        %v3000 = vunpack.c.h.b16 %v2899
        %v3001 = vunpack.c.l.b16 %v2900
        %v3002 = vunpack.c.h.b16 %v2900
        %v3003 = vunpack.c.l.b16 %v2901
        %v3004 = vunpack.c.h.b16 %v2901
        %v3005 = vunpack.c.l.b16 %v2902
        %v3006 = vunpack.c.h.b16 %v2902
        %v3007 = vunpack.c.l.b16 %v2903
        %v3008 = vunpack.c.h.b16 %v2903
        %v3009 = vunpack.c.l.b16 %v2904
        %v3010 = vunpack.c.h.b16 %v2904
        %v3011 = vunpack.c.l.b16 %v2905
        %v3012 = vunpack.c.h.b16 %v2905
        %v3013 = vunpack.c.l.b16 %v2906
        %v3014 = vunpack.c.h.b16 %v2906
        %v3015 = vunpack.c.l.b16 %v2907
        %v3016 = vunpack.c.h.b16 %v2907
        %v3017 = vunpack.c.l.b16 %v2908
        %v3018 = vunpack.c.h.b16 %v2908
        %v3019 = vunpack.c.l.b16 %v2909
        %v3020 = vunpack.c.h.b16 %v2909
        %v3021 = vunpack.c.l.b16 %v2910
        %v3022 = vunpack.c.h.b16 %v2910
        %v3023 = vunpack.c.l.b16 %v2911
        %v3024 = vunpack.c.h.b16 %v2911
        %v3025 = vunpack.c.l.b16 %v2912
        %v3026 = vunpack.c.h.b16 %v2912
        %v3027 = vunpack.c.l.b16 %v2913
        %v3028 = vunpack.c.h.b16 %v2913
        %v3029 = vunpack.c.l.b16 %v2914
        %v3030 = vunpack.c.h.b16 %v2914
        %v3031 = vunpack.c.l.b16 %v2915
        %v3032 = vunpack.c.h.b16 %v2915
        %v3033 = vunpack.c.l.b16 %v2916
        %v3034 = vunpack.c.h.b16 %v2916
        %v3035 = vunpack.c.l.b16 %v2917
        %v3036 = vunpack.c.h.b16 %v2917
        %v3037 = vpack.c.b16 %v2975, %v2973
        %v3038 = vpack.c.b16 %v2976, %v2974
        %v3039 = vpack.c.b16 %v2979, %v2977
        %v3040 = vpack.c.b16 %v2980, %v2978
        %v3041 = vpack.c.b16 %v2983, %v2981
        %v3042 = vpack.c.b16 %v2984, %v2982
        %v3043 = vpack.c.b16 %v2987, %v2985
        %v3044 = vpack.c.b16 %v2988, %v2986
        %v3045 = vpack.c.b16 %v2991, %v2989
        %v3046 = vpack.c.b16 %v2992, %v2990
        %v3047 = vpack.c.b16 %v2995, %v2993
        %v3048 = vpack.c.b16 %v2996, %v2994
        %v3049 = vpack.c.b16 %v2999, %v2997
        %v3050 = vpack.c.b16 %v3000, %v2998
        %v3051 = vpack.c.b16 %v3003, %v3001
        %v3052 = vpack.c.b16 %v3004, %v3002
        %v3053 = vpack.c.b16 %v3007, %v3005
        %v3054 = vpack.c.b16 %v3008, %v3006
        %v3055 = vpack.c.b16 %v3011, %v3009
        %v3056 = vpack.c.b16 %v3012, %v3010
        %v3057 = vpack.c.b16 %v3015, %v3013
        %v3058 = vpack.c.b16 %v3016, %v3014
        %v3059 = vpack.c.b16 %v3019, %v3017
        %v3060 = vpack.c.b16 %v3020, %v3018
        %v3061 = vpack.c.b16 %v3023, %v3021
        %v3062 = vpack.c.b16 %v3024, %v3022
        %v3063 = vpack.c.b16 %v3027, %v3025
        %v3064 = vpack.c.b16 %v3028, %v3026
        %v3065 = vpack.c.b16 %v3031, %v3029
        %v3066 = vpack.c.b16 %v3032, %v3030
        %v3067 = vpack.c.b16 %v3035, %v3033
        %v3068 = vpack.c.b16 %v3036, %v3034
        %3101 = vmatprep.subr.bf16.mxu0 %v3038
        %3102 = vmatpush1.bf16.msra.mxu0 %v3037
        %3103 = vmatprep.subr.bf16.mxu0 %v3040
        %3104 = vmatpush1.bf16.msra.mxu0 %v3039
        %3105 = vmatprep.subr.bf16.mxu0 %v3042
        %3106 = vmatpush1.bf16.msra.mxu0 %v3041
        %3107 = vmatprep.subr.bf16.mxu0 %v3044
        %3108 = vmatpush1.bf16.msra.mxu0 %v3043
        %3109 = vmatprep.subr.bf16.mxu0 %v3046
        %3110 = vmatpush1.bf16.msra.mxu0 %v3045
        %3111 = vmatprep.subr.bf16.mxu0 %v3048
        %3112 = vmatpush1.bf16.msra.mxu0 %v3047
        %3113 = vmatprep.subr.bf16.mxu0 %v3050
        %3114 = vmatpush1.bf16.msra.mxu0 %v3049
        %3115 = vmatprep.subr.bf16.mxu0 %v3052
        %3116 = vmatpush1.bf16.msra.mxu0 %v3051
        %3117 = vmatprep.subr.bf16.mxu0 %v3054
        %3118 = vmatpush1.bf16.msra.mxu0 %v3053
        %3119 = vmatprep.subr.bf16.mxu0 %v3056
        %3120 = vmatpush1.bf16.msra.mxu0 %v3055
        %3121 = vmatprep.subr.bf16.mxu0 %v3058
        %3122 = vmatpush1.bf16.msra.mxu0 %v3057
        %3123 = vmatprep.subr.bf16.mxu0 %v3060
        %3124 = vmatpush1.bf16.msra.mxu0 %v3059
        %3125 = vmatprep.subr.bf16.mxu0 %v3062
        %3126 = vmatpush1.bf16.msra.mxu0 %v3061
        %3127 = vmatprep.subr.bf16.mxu0 %v3064
        %3128 = vmatpush1.bf16.msra.mxu0 %v3063
        %3129 = vmatprep.subr.bf16.mxu0 %v3066
        %3130 = vmatpush1.bf16.msra.mxu0 %v3065
        %3131 = vmatprep.subr.bf16.mxu0 %v3068
        %3132 = vmatpush1.bf16.msra.mxu0 %v3067
        %3133 = vmatprep.mubr.bf16.mxu0 %v2930
        %3134 = vmatmul.mubr.bf16.gmra.mrb[0].mxu0 %v2927
        %v3135 = vpop.f32.mrb[0].mxu0
        %v3136 = vadd.f32 0.0, %v3135
        %v3137 = vpop.f32.mrb[0].mxu0
        %v3138 = vadd.f32 0.0, %v3137
        %v3139 = vpop.f32.mrb[0].mxu0
        %v3140 = vadd.f32 0.0, %v3139
        %v3141 = vpop.f32.mrb[0].mxu0
        %v3142 = vadd.f32 0.0, %v3141
        %3143 = vmatprep.mubr.bf16.mxu0 %v2934
        %3144 = vmatmul.mubr.bf16.gmra.mrb[0].mxu0 %v2932
        %v3145 = vpop.f32.mrb[0].mxu0
        %v3146 = vadd.f32 0.0, %v3145
        %v3147 = vpop.f32.mrb[0].mxu0
        %v3148 = vadd.f32 0.0, %v3147
        %v3149 = vpop.f32.mrb[0].mxu0
        %v3150 = vadd.f32 0.0, %v3149
        %v3151 = vpop.f32.mrb[0].mxu0
        %v3152 = vadd.f32 0.0, %v3151
        %3153 = vmatprep.mubr.bf16.mxu0 %v2933
        %3154 = vmatmul.mubr.bf16.gmra.mrb[0].mxu0 %v2931
        %v3155 = vpop.f32.mrb[0].mxu0
        %v3156 = vadd.f32 0.0, %v3155
        %v3157 = vpop.f32.mrb[0].mxu0
        %v3158 = vadd.f32 0.0, %v3157
        %v3159 = vpop.f32.mrb[0].mxu0
        %v3160 = vpop.f32.mrb[0].mxu0
        %3161 = vdwg.mxu0
        %v3162 = vadd.f32 %v2859, %v3136
        %v3163 = vadd.f32 %v2861, %v3138
        %v3164 = vadd.f32 %v2863, %v3140
        %v3165 = vadd.f32 %v2865, %v3142
        %v3166 = vadd.f32 %v2869, %v3146
        %v3167 = vadd.f32 %v2871, %v3148
        %v3168 = vadd.f32 %v2873, %v3150
        %v3169 = vadd.f32 %v2875, %v3152
        %v3170 = vadd.f32 %v2879, %v3156
        %v3171 = vadd.f32 %v2881, %v3158
        %s3172 = scalar_lea.vmem %s3, 768
        %v3173 = vld [vmem:[%s3172] sm:$0xff]
        %v3174 = vld [vmem:[%s3172 + $0x8] sm:$0xff]
        %v3175 = vld [vmem:[%s3172 + $0x10] sm:$0xff]
        %v3176 = vld [vmem:[%s3172 + $0x18] sm:$0xff]
        %v3177 = vld [vmem:[%s3172 + $0x20] sm:$0xff]
        %v3178 = vld [vmem:[%s3172 + $0x28] sm:$0xff]
        %v3179 = vld [vmem:[%s3172 + $0x30] sm:$0xff]
        %v3180 = vld [vmem:[%s3172 + $0x38] sm:$0xff]
        %v3181 = vld [vmem:[%s3172 + $0x40] sm:$0xff]
        %v3182 = vld [vmem:[%s3172 + $0x48] sm:$0xff]
        %v3183 = vld [vmem:[%s3172 + $0x50] sm:$0xff]
        %v3184 = vld [vmem:[%s3172 + $0x58] sm:$0xff]
        %v3185 = vld [vmem:[%s3172 + $0x60] sm:$0xff]
        %v3186 = vld [vmem:[%s3172 + $0x68] sm:$0xff]
        %v3187 = vld [vmem:[%s3172 + $0x70] sm:$0xff]
        %v3188 = vld [vmem:[%s3172 + $0x78] sm:$0xff]
        %v3189 = vld [vmem:[%s3172 + $0x80] sm:$0xff]
        %v3190 = vld [vmem:[%s3172 + $0x88] sm:$0xff]
        %v3191 = vld [vmem:[%s3172 + $0x90] sm:$0xff]
        %v3192 = vld [vmem:[%s3172 + $0x98] sm:$0xff]
        %v3193 = vld [vmem:[%s3172 + $0xa0] sm:$0xff]
        %v3194 = vld [vmem:[%s3172 + $0xa8] sm:$0xff]
        %v3195 = vld [vmem:[%s3172 + $0xb0] sm:$0xff]
        %v3196 = vld [vmem:[%s3172 + $0xb8] sm:$0xff]
        %v3197 = vld [vmem:[%s3172 + $0xc0] sm:$0xff]
        %v3198 = vld [vmem:[%s3172 + $0xc8] sm:$0xff]
        %v3199 = vld [vmem:[%s3172 + $0xd0] sm:$0xff]
        %v3200 = vld [vmem:[%s3172 + $0xd8] sm:$0xff]
        %v3201 = vld [vmem:[%s3172 + $0xe0] sm:$0xff]
        %v3202 = vld [vmem:[%s3172 + $0xe8] sm:$0xff]
        %v3203 = vld [vmem:[%s3172 + $0xf0] sm:$0xff]
        %v3204 = vld [vmem:[%s3172 + $0xf8] sm:$0xff]
        %vm3205 = vsmask.f32 6400
        %v3206 = vrot.slane %v2392, 1
        %v3207 = vrot.slane %v2394, 2
        %v3208 = vor.u32 %v3206, %v3207
        %v3209 = vrot.slane %v2415, 1
        %v3210 = vrot.slane %v2399, 2
        %v3211 = vor.u32 %v3209, %v3210
        %v3212 = vsel %vm3205, %v3208, %v3211
        %v3213 = vrot.slane %v2404, 1
        %v3214 = vrot.slane %v2406, 2
        %v3215 = vor.u32 %v3213, %v3214
        %v3216 = vrot.slane %v2423, 1
        %v3217 = vrot.slane %v2411, 2
        %v3218 = vor.u32 %v3216, %v3217
        %v3219 = vsel %vm3205, %v3215, %v3218
        %v3220 = vrot.slane %v2431, 1
        %v3221 = vrot.slane %v2419, 2
        %v3222 = vor.u32 %v3220, %v3221
        %v3223 = vsel %vm3205, %v3211, %v3222
        %v3224 = vrot.slane %v2434, 1
        %v3225 = vrot.slane %v2427, 2
        %v3226 = vor.u32 %v3224, %v3225
        %v3227 = vsel %vm3205, %v3218, %v3226
        %v3266 = vunpack.c.l.b16 %v3173
        %v3267 = vunpack.c.h.b16 %v3173
        %v3268 = vunpack.c.l.b16 %v3174
        %v3269 = vunpack.c.h.b16 %v3174
        %v3270 = vunpack.c.l.b16 %v3175
        %v3271 = vunpack.c.h.b16 %v3175
        %v3272 = vunpack.c.l.b16 %v3176
        %v3273 = vunpack.c.h.b16 %v3176
        %v3274 = vunpack.c.l.b16 %v3177
        %v3275 = vunpack.c.h.b16 %v3177
        %v3276 = vunpack.c.l.b16 %v3178
        %v3277 = vunpack.c.h.b16 %v3178
        %v3278 = vunpack.c.l.b16 %v3179
        %v3279 = vunpack.c.h.b16 %v3179
        %v3280 = vunpack.c.l.b16 %v3180
        %v3281 = vunpack.c.h.b16 %v3180
        %v3282 = vunpack.c.l.b16 %v3181
        %v3283 = vunpack.c.h.b16 %v3181
        %v3284 = vunpack.c.l.b16 %v3182
        %v3285 = vunpack.c.h.b16 %v3182
        %v3286 = vunpack.c.l.b16 %v3183
        %v3287 = vunpack.c.h.b16 %v3183
        %v3288 = vunpack.c.l.b16 %v3184
        %v3289 = vunpack.c.h.b16 %v3184
        %v3290 = vunpack.c.l.b16 %v3185
        %v3291 = vunpack.c.h.b16 %v3185
        %v3292 = vunpack.c.l.b16 %v3186
        %v3293 = vunpack.c.h.b16 %v3186
        %v3294 = vunpack.c.l.b16 %v3187
        %v3295 = vunpack.c.h.b16 %v3187
        %v3296 = vunpack.c.l.b16 %v3188
        %v3297 = vunpack.c.h.b16 %v3188
        %v3298 = vunpack.c.l.b16 %v3189
        %v3299 = vunpack.c.h.b16 %v3189
        %v3300 = vunpack.c.l.b16 %v3190
        %v3301 = vunpack.c.h.b16 %v3190
        %v3302 = vunpack.c.l.b16 %v3191
        %v3303 = vunpack.c.h.b16 %v3191
        %v3304 = vunpack.c.l.b16 %v3192
        %v3305 = vunpack.c.h.b16 %v3192
        %v3306 = vunpack.c.l.b16 %v3193
        %v3307 = vunpack.c.h.b16 %v3193
        %v3308 = vunpack.c.l.b16 %v3194
        %v3309 = vunpack.c.h.b16 %v3194
        %v3310 = vunpack.c.l.b16 %v3195
        %v3311 = vunpack.c.h.b16 %v3195
        %v3312 = vunpack.c.l.b16 %v3196
        %v3313 = vunpack.c.h.b16 %v3196
        %v3314 = vunpack.c.l.b16 %v3197
        %v3315 = vunpack.c.h.b16 %v3197
        %v3316 = vunpack.c.l.b16 %v3198
        %v3317 = vunpack.c.h.b16 %v3198
        %v3318 = vunpack.c.l.b16 %v3199
        %v3319 = vunpack.c.h.b16 %v3199
        %v3320 = vunpack.c.l.b16 %v3200
        %v3321 = vunpack.c.h.b16 %v3200
        %v3322 = vunpack.c.l.b16 %v3201
        %v3323 = vunpack.c.h.b16 %v3201
        %v3324 = vunpack.c.l.b16 %v3202
        %v3325 = vunpack.c.h.b16 %v3202
        %v3326 = vunpack.c.l.b16 %v3203
        %v3327 = vunpack.c.h.b16 %v3203
        %v3328 = vunpack.c.l.b16 %v3204
        %v3329 = vunpack.c.h.b16 %v3204
        %v3330 = vpack.c.b16 %v3268, %v3266
        %v3331 = vpack.c.b16 %v3269, %v3267
        %v3332 = vpack.c.b16 %v3272, %v3270
        %v3333 = vpack.c.b16 %v3273, %v3271
        %v3334 = vpack.c.b16 %v3276, %v3274
        %v3335 = vpack.c.b16 %v3277, %v3275
        %v3336 = vpack.c.b16 %v3280, %v3278
        %v3337 = vpack.c.b16 %v3281, %v3279
        %v3338 = vpack.c.b16 %v3284, %v3282
        %v3339 = vpack.c.b16 %v3285, %v3283
        %v3340 = vpack.c.b16 %v3288, %v3286
        %v3341 = vpack.c.b16 %v3289, %v3287
        %v3342 = vpack.c.b16 %v3292, %v3290
        %v3343 = vpack.c.b16 %v3293, %v3291
        %v3344 = vpack.c.b16 %v3296, %v3294
        %v3345 = vpack.c.b16 %v3297, %v3295
        %v3346 = vpack.c.b16 %v3300, %v3298
        %v3347 = vpack.c.b16 %v3301, %v3299
        %v3348 = vpack.c.b16 %v3304, %v3302
        %v3349 = vpack.c.b16 %v3305, %v3303
        %v3350 = vpack.c.b16 %v3308, %v3306
        %v3351 = vpack.c.b16 %v3309, %v3307
        %v3352 = vpack.c.b16 %v3312, %v3310
        %v3353 = vpack.c.b16 %v3313, %v3311
        %v3354 = vpack.c.b16 %v3316, %v3314
        %v3355 = vpack.c.b16 %v3317, %v3315
        %v3356 = vpack.c.b16 %v3320, %v3318
        %v3357 = vpack.c.b16 %v3321, %v3319
        %v3358 = vpack.c.b16 %v3324, %v3322
        %v3359 = vpack.c.b16 %v3325, %v3323
        %v3360 = vpack.c.b16 %v3328, %v3326
        %v3361 = vpack.c.b16 %v3329, %v3327
        %3394 = vmatprep.subr.bf16.mxu0 %v3331
        %3395 = vmatpush1.bf16.msra.mxu0 %v3330
        %3396 = vmatprep.subr.bf16.mxu0 %v3333
        %3397 = vmatpush1.bf16.msra.mxu0 %v3332
        %3398 = vmatprep.subr.bf16.mxu0 %v3335
        %3399 = vmatpush1.bf16.msra.mxu0 %v3334
        %3400 = vmatprep.subr.bf16.mxu0 %v3337
        %3401 = vmatpush1.bf16.msra.mxu0 %v3336
        %3402 = vmatprep.subr.bf16.mxu0 %v3339
        %3403 = vmatpush1.bf16.msra.mxu0 %v3338
        %3404 = vmatprep.subr.bf16.mxu0 %v3341
        %3405 = vmatpush1.bf16.msra.mxu0 %v3340
        %3406 = vmatprep.subr.bf16.mxu0 %v3343
        %3407 = vmatpush1.bf16.msra.mxu0 %v3342
        %3408 = vmatprep.subr.bf16.mxu0 %v3345
        %3409 = vmatpush1.bf16.msra.mxu0 %v3344
        %3410 = vmatprep.subr.bf16.mxu0 %v3347
        %3411 = vmatpush1.bf16.msra.mxu0 %v3346
        %3412 = vmatprep.subr.bf16.mxu0 %v3349
        %3413 = vmatpush1.bf16.msra.mxu0 %v3348
        %3414 = vmatprep.subr.bf16.mxu0 %v3351
        %3415 = vmatpush1.bf16.msra.mxu0 %v3350
        %3416 = vmatprep.subr.bf16.mxu0 %v3353
        %3417 = vmatpush1.bf16.msra.mxu0 %v3352
        %3418 = vmatprep.subr.bf16.mxu0 %v3355
        %3419 = vmatpush1.bf16.msra.mxu0 %v3354
        %3420 = vmatprep.subr.bf16.mxu0 %v3357
        %3421 = vmatpush1.bf16.msra.mxu0 %v3356
        %3422 = vmatprep.subr.bf16.mxu0 %v3359
        %3423 = vmatpush1.bf16.msra.mxu0 %v3358
        %3424 = vmatprep.subr.bf16.mxu0 %v3361
        %3425 = vmatpush1.bf16.msra.mxu0 %v3360
        %3426 = vmatprep.mubr.bf16.mxu0 %v3219
        %3427 = vmatmul.mubr.bf16.gmra.mrb[0].mxu0 %v3212
        %v3428 = vpop.f32.mrb[0].mxu0
        %v3429 = vadd.f32 0.0, %v3428
        %v3430 = vpop.f32.mrb[0].mxu0
        %v3431 = vadd.f32 0.0, %v3430
        %v3432 = vpop.f32.mrb[0].mxu0
        %v3433 = vadd.f32 0.0, %v3432
        %v3434 = vpop.f32.mrb[0].mxu0
        %v3435 = vadd.f32 0.0, %v3434
        %3436 = vmatprep.mubr.bf16.mxu0 %v3227
        %3437 = vmatmul.mubr.bf16.gmra.mrb[0].mxu0 %v3223
        %v3438 = vpop.f32.mrb[0].mxu0
        %v3439 = vadd.f32 0.0, %v3438
        %v3440 = vpop.f32.mrb[0].mxu0
        %v3441 = vadd.f32 0.0, %v3440
        %v3442 = vpop.f32.mrb[0].mxu0
        %v3443 = vadd.f32 0.0, %v3442
        %v3444 = vpop.f32.mrb[0].mxu0
        %v3445 = vadd.f32 0.0, %v3444
        %3446 = vmatprep.mubr.bf16.mxu0 %v3226
        %3447 = vmatmul.mubr.bf16.gmra.mrb[0].mxu0 %v3222
        %v3448 = vpop.f32.mrb[0].mxu0
        %v3449 = vadd.f32 0.0, %v3448
        %v3450 = vpop.f32.mrb[0].mxu0
        %v3451 = vadd.f32 0.0, %v3450
        %v3452 = vpop.f32.mrb[0].mxu0
        %v3453 = vpop.f32.mrb[0].mxu0
        %3454 = vdwg.mxu0
        %v3455 = vadd.f32 %v3162, %v3429
        %v3456 = vadd.f32 %v3163, %v3431
        %v3457 = vadd.f32 %v3164, %v3433
        %v3458 = vadd.f32 %v3165, %v3435
        %v3459 = vadd.f32 %v3166, %v3439
        %v3460 = vadd.f32 %v3167, %v3441
        %v3461 = vadd.f32 %v3168, %v3443
        %v3462 = vadd.f32 %v3169, %v3445
        %v3463 = vadd.f32 %v3170, %v3449
        %v3464 = vadd.f32 %v3171, %v3451
        %s3465 = scalar_lea.vmem %s3, 1024
        %v3466 = vld [vmem:[%s3465] sm:$0xff]
        %v3467 = vld [vmem:[%s3465 + $0x8] sm:$0xff]
        %v3468 = vld [vmem:[%s3465 + $0x10] sm:$0xff]
        %v3469 = vld [vmem:[%s3465 + $0x18] sm:$0xff]
        %v3470 = vld [vmem:[%s3465 + $0x20] sm:$0xff]
        %v3471 = vld [vmem:[%s3465 + $0x28] sm:$0xff]
        %v3472 = vld [vmem:[%s3465 + $0x30] sm:$0xff]
        %v3473 = vld [vmem:[%s3465 + $0x38] sm:$0xff]
        %v3474 = vld [vmem:[%s3465 + $0x40] sm:$0xff]
        %v3475 = vld [vmem:[%s3465 + $0x48] sm:$0xff]
        %v3476 = vld [vmem:[%s3465 + $0x50] sm:$0xff]
        %v3477 = vld [vmem:[%s3465 + $0x58] sm:$0xff]
        %v3478 = vld [vmem:[%s3465 + $0x60] sm:$0xff]
        %v3479 = vld [vmem:[%s3465 + $0x68] sm:$0xff]
        %v3480 = vld [vmem:[%s3465 + $0x70] sm:$0xff]
        %v3481 = vld [vmem:[%s3465 + $0x78] sm:$0xff]
        %v3482 = vld [vmem:[%s3465 + $0x80] sm:$0xff]
        %v3483 = vld [vmem:[%s3465 + $0x88] sm:$0xff]
        %v3484 = vld [vmem:[%s3465 + $0x90] sm:$0xff]
        %v3485 = vld [vmem:[%s3465 + $0x98] sm:$0xff]
        %v3486 = vld [vmem:[%s3465 + $0xa0] sm:$0xff]
        %v3487 = vld [vmem:[%s3465 + $0xa8] sm:$0xff]
        %v3488 = vld [vmem:[%s3465 + $0xb0] sm:$0xff]
        %v3489 = vld [vmem:[%s3465 + $0xb8] sm:$0xff]
        %v3490 = vld [vmem:[%s3465 + $0xc0] sm:$0xff]
        %v3491 = vld [vmem:[%s3465 + $0xc8] sm:$0xff]
        %v3492 = vld [vmem:[%s3465 + $0xd0] sm:$0xff]
        %v3493 = vld [vmem:[%s3465 + $0xd8] sm:$0xff]
        %v3494 = vld [vmem:[%s3465 + $0xe0] sm:$0xff]
        %v3495 = vld [vmem:[%s3465 + $0xe8] sm:$0xff]
        %v3496 = vld [vmem:[%s3465 + $0xf0] sm:$0xff]
        %v3497 = vld [vmem:[%s3465 + $0xf8] sm:$0xff]
        %vm3498 = vcmask 1045504
        %v3499 = vrot.slane %v2317, 2
        %v3500 = vrot.slane %v2319, 2
        %v3501 = vsel %vm3498, %v3499, %v3500
        %v3502 = vrot.slane %v2318, 2
        %v3503 = vrot.slane %v2320, 2
        %v3504 = vsel %vm3498, %v3502, %v3503
        %v3505 = vrot.slane %v2355, 2
        %v3506 = vsel %vm3498, %v3500, %v3505
        %v3507 = vrot.slane %v2356, 2
        %v3508 = vsel %vm3498, %v3503, %v3507
        %v3547 = vunpack.c.l.b16 %v3466
        %v3548 = vunpack.c.h.b16 %v3466
        %v3549 = vunpack.c.l.b16 %v3467
        %v3550 = vunpack.c.h.b16 %v3467
        %v3551 = vunpack.c.l.b16 %v3468
        %v3552 = vunpack.c.h.b16 %v3468
        %v3553 = vunpack.c.l.b16 %v3469
        %v3554 = vunpack.c.h.b16 %v3469
        %v3555 = vunpack.c.l.b16 %v3470
        %v3556 = vunpack.c.h.b16 %v3470
        %v3557 = vunpack.c.l.b16 %v3471
        %v3558 = vunpack.c.h.b16 %v3471
        %v3559 = vunpack.c.l.b16 %v3472
        %v3560 = vunpack.c.h.b16 %v3472
        %v3561 = vunpack.c.l.b16 %v3473
        %v3562 = vunpack.c.h.b16 %v3473
        %v3563 = vunpack.c.l.b16 %v3474
        %v3564 = vunpack.c.h.b16 %v3474
        %v3565 = vunpack.c.l.b16 %v3475
        %v3566 = vunpack.c.h.b16 %v3475
        %v3567 = vunpack.c.l.b16 %v3476
        %v3568 = vunpack.c.h.b16 %v3476
        %v3569 = vunpack.c.l.b16 %v3477
        %v3570 = vunpack.c.h.b16 %v3477
        %v3571 = vunpack.c.l.b16 %v3478
        %v3572 = vunpack.c.h.b16 %v3478
        %v3573 = vunpack.c.l.b16 %v3479
        %v3574 = vunpack.c.h.b16 %v3479
        %v3575 = vunpack.c.l.b16 %v3480
        %v3576 = vunpack.c.h.b16 %v3480
        %v3577 = vunpack.c.l.b16 %v3481
        %v3578 = vunpack.c.h.b16 %v3481
        %v3579 = vunpack.c.l.b16 %v3482
        %v3580 = vunpack.c.h.b16 %v3482
        %v3581 = vunpack.c.l.b16 %v3483
        %v3582 = vunpack.c.h.b16 %v3483
        %v3583 = vunpack.c.l.b16 %v3484
        %v3584 = vunpack.c.h.b16 %v3484
        %v3585 = vunpack.c.l.b16 %v3485
        %v3586 = vunpack.c.h.b16 %v3485
        %v3587 = vunpack.c.l.b16 %v3486
        %v3588 = vunpack.c.h.b16 %v3486
        %v3589 = vunpack.c.l.b16 %v3487
        %v3590 = vunpack.c.h.b16 %v3487
        %v3591 = vunpack.c.l.b16 %v3488
        %v3592 = vunpack.c.h.b16 %v3488
        %v3593 = vunpack.c.l.b16 %v3489
        %v3594 = vunpack.c.h.b16 %v3489
        %v3595 = vunpack.c.l.b16 %v3490
        %v3596 = vunpack.c.h.b16 %v3490
        %v3597 = vunpack.c.l.b16 %v3491
        %v3598 = vunpack.c.h.b16 %v3491
        %v3599 = vunpack.c.l.b16 %v3492
        %v3600 = vunpack.c.h.b16 %v3492
        %v3601 = vunpack.c.l.b16 %v3493
        %v3602 = vunpack.c.h.b16 %v3493
        %v3603 = vunpack.c.l.b16 %v3494
        %v3604 = vunpack.c.h.b16 %v3494
        %v3605 = vunpack.c.l.b16 %v3495
        %v3606 = vunpack.c.h.b16 %v3495
        %v3607 = vunpack.c.l.b16 %v3496
        %v3608 = vunpack.c.h.b16 %v3496
        %v3609 = vunpack.c.l.b16 %v3497
        %v3610 = vunpack.c.h.b16 %v3497
        %v3611 = vpack.c.b16 %v3549, %v3547
        %v3612 = vpack.c.b16 %v3550, %v3548
        %v3613 = vpack.c.b16 %v3553, %v3551
        %v3614 = vpack.c.b16 %v3554, %v3552
        %v3615 = vpack.c.b16 %v3557, %v3555
        %v3616 = vpack.c.b16 %v3558, %v3556
        %v3617 = vpack.c.b16 %v3561, %v3559
        %v3618 = vpack.c.b16 %v3562, %v3560
        %v3619 = vpack.c.b16 %v3565, %v3563
        %v3620 = vpack.c.b16 %v3566, %v3564
        %v3621 = vpack.c.b16 %v3569, %v3567
        %v3622 = vpack.c.b16 %v3570, %v3568
        %v3623 = vpack.c.b16 %v3573, %v3571
        %v3624 = vpack.c.b16 %v3574, %v3572
        %v3625 = vpack.c.b16 %v3577, %v3575
        %v3626 = vpack.c.b16 %v3578, %v3576
        %v3627 = vpack.c.b16 %v3581, %v3579
        %v3628 = vpack.c.b16 %v3582, %v3580
        %v3629 = vpack.c.b16 %v3585, %v3583
        %v3630 = vpack.c.b16 %v3586, %v3584
        %v3631 = vpack.c.b16 %v3589, %v3587
        %v3632 = vpack.c.b16 %v3590, %v3588
        %v3633 = vpack.c.b16 %v3593, %v3591
        %v3634 = vpack.c.b16 %v3594, %v3592
        %v3635 = vpack.c.b16 %v3597, %v3595
        %v3636 = vpack.c.b16 %v3598, %v3596
        %v3637 = vpack.c.b16 %v3601, %v3599
        %v3638 = vpack.c.b16 %v3602, %v3600
        %v3639 = vpack.c.b16 %v3605, %v3603
        %v3640 = vpack.c.b16 %v3606, %v3604
        %v3641 = vpack.c.b16 %v3609, %v3607
        %v3642 = vpack.c.b16 %v3610, %v3608
        %3675 = vmatprep.subr.bf16.mxu0 %v3612
        %3676 = vmatpush1.bf16.msra.mxu0 %v3611
        %3677 = vmatprep.subr.bf16.mxu0 %v3614
        %3678 = vmatpush1.bf16.msra.mxu0 %v3613
        %3679 = vmatprep.subr.bf16.mxu0 %v3616
        %3680 = vmatpush1.bf16.msra.mxu0 %v3615
        %3681 = vmatprep.subr.bf16.mxu0 %v3618
        %3682 = vmatpush1.bf16.msra.mxu0 %v3617
        %3683 = vmatprep.subr.bf16.mxu0 %v3620
        %3684 = vmatpush1.bf16.msra.mxu0 %v3619
        %3685 = vmatprep.subr.bf16.mxu0 %v3622
        %3686 = vmatpush1.bf16.msra.mxu0 %v3621
        %3687 = vmatprep.subr.bf16.mxu0 %v3624
        %3688 = vmatpush1.bf16.msra.mxu0 %v3623
        %3689 = vmatprep.subr.bf16.mxu0 %v3626
        %3690 = vmatpush1.bf16.msra.mxu0 %v3625
        %3691 = vmatprep.subr.bf16.mxu0 %v3628
        %3692 = vmatpush1.bf16.msra.mxu0 %v3627
        %3693 = vmatprep.subr.bf16.mxu0 %v3630
        %3694 = vmatpush1.bf16.msra.mxu0 %v3629
        %3695 = vmatprep.subr.bf16.mxu0 %v3632
        %3696 = vmatpush1.bf16.msra.mxu0 %v3631
        %3697 = vmatprep.subr.bf16.mxu0 %v3634
        %3698 = vmatpush1.bf16.msra.mxu0 %v3633
        %3699 = vmatprep.subr.bf16.mxu0 %v3636
        %3700 = vmatpush1.bf16.msra.mxu0 %v3635
        %3701 = vmatprep.subr.bf16.mxu0 %v3638
        %3702 = vmatpush1.bf16.msra.mxu0 %v3637
        %3703 = vmatprep.subr.bf16.mxu0 %v3640
        %3704 = vmatpush1.bf16.msra.mxu0 %v3639
        %3705 = vmatprep.subr.bf16.mxu0 %v3642
        %3706 = vmatpush1.bf16.msra.mxu0 %v3641
        %3707 = vmatprep.mubr.bf16.mxu0 %v3504
        %3708 = vmatmul.mubr.bf16.gmra.mrb[0].mxu0 %v3501
        %v3709 = vpop.f32.mrb[0].mxu0
        %v3710 = vadd.f32 0.0, %v3709
        %v3711 = vpop.f32.mrb[0].mxu0
        %v3712 = vadd.f32 0.0, %v3711
        %v3713 = vpop.f32.mrb[0].mxu0
        %v3714 = vadd.f32 0.0, %v3713
        %v3715 = vpop.f32.mrb[0].mxu0
        %v3716 = vadd.f32 0.0, %v3715
        %3717 = vmatprep.mubr.bf16.mxu0 %v3508
        %3718 = vmatmul.mubr.bf16.gmra.mrb[0].mxu0 %v3506
        %v3719 = vpop.f32.mrb[0].mxu0
        %v3720 = vadd.f32 0.0, %v3719
        %v3721 = vpop.f32.mrb[0].mxu0
        %v3722 = vadd.f32 0.0, %v3721
        %v3723 = vpop.f32.mrb[0].mxu0
        %v3724 = vadd.f32 0.0, %v3723
        %v3725 = vpop.f32.mrb[0].mxu0
        %v3726 = vadd.f32 0.0, %v3725
        %3727 = vmatprep.mubr.bf16.mxu0 %v3507
        %3728 = vmatmul.mubr.bf16.gmra.mrb[0].mxu0 %v3505
        %v3729 = vpop.f32.mrb[0].mxu0
        %v3730 = vadd.f32 0.0, %v3729
        %v3731 = vpop.f32.mrb[0].mxu0
        %v3732 = vadd.f32 0.0, %v3731
        %v3733 = vpop.f32.mrb[0].mxu0
        %v3734 = vpop.f32.mrb[0].mxu0
        %3735 = vdwg.mxu0
        %v3736 = vadd.f32 %v3455, %v3710
        %v3737 = vadd.f32 %v3456, %v3712
        %v3738 = vadd.f32 %v3457, %v3714
        %v3739 = vadd.f32 %v3458, %v3716
        %v3740 = vadd.f32 %v3459, %v3720
        %v3741 = vadd.f32 %v3460, %v3722
        %v3742 = vadd.f32 %v3461, %v3724
        %v3743 = vadd.f32 %v3462, %v3726
        %v3744 = vadd.f32 %v3463, %v3730
        %v3745 = vadd.f32 %v3464, %v3732
        %s3746 = scalar_lea.vmem %s3, 1280
        %v3747 = vld [vmem:[%s3746] sm:$0xff]
        %v3748 = vld [vmem:[%s3746 + $0x8] sm:$0xff]
        %v3749 = vld [vmem:[%s3746 + $0x10] sm:$0xff]
        %v3750 = vld [vmem:[%s3746 + $0x18] sm:$0xff]
        %v3751 = vld [vmem:[%s3746 + $0x20] sm:$0xff]
        %v3752 = vld [vmem:[%s3746 + $0x28] sm:$0xff]
        %v3753 = vld [vmem:[%s3746 + $0x30] sm:$0xff]
        %v3754 = vld [vmem:[%s3746 + $0x38] sm:$0xff]
        %v3755 = vld [vmem:[%s3746 + $0x40] sm:$0xff]
        %v3756 = vld [vmem:[%s3746 + $0x48] sm:$0xff]
        %v3757 = vld [vmem:[%s3746 + $0x50] sm:$0xff]
        %v3758 = vld [vmem:[%s3746 + $0x58] sm:$0xff]
        %v3759 = vld [vmem:[%s3746 + $0x60] sm:$0xff]
        %v3760 = vld [vmem:[%s3746 + $0x68] sm:$0xff]
        %v3761 = vld [vmem:[%s3746 + $0x70] sm:$0xff]
        %v3762 = vld [vmem:[%s3746 + $0x78] sm:$0xff]
        %v3763 = vld [vmem:[%s3746 + $0x80] sm:$0xff]
        %v3764 = vld [vmem:[%s3746 + $0x88] sm:$0xff]
        %v3765 = vld [vmem:[%s3746 + $0x90] sm:$0xff]
        %v3766 = vld [vmem:[%s3746 + $0x98] sm:$0xff]
        %v3767 = vld [vmem:[%s3746 + $0xa0] sm:$0xff]
        %v3768 = vld [vmem:[%s3746 + $0xa8] sm:$0xff]
        %v3769 = vld [vmem:[%s3746 + $0xb0] sm:$0xff]
        %v3770 = vld [vmem:[%s3746 + $0xb8] sm:$0xff]
        %v3771 = vld [vmem:[%s3746 + $0xc0] sm:$0xff]
        %v3772 = vld [vmem:[%s3746 + $0xc8] sm:$0xff]
        %v3773 = vld [vmem:[%s3746 + $0xd0] sm:$0xff]
        %v3774 = vld [vmem:[%s3746 + $0xd8] sm:$0xff]
        %v3775 = vld [vmem:[%s3746 + $0xe0] sm:$0xff]
        %v3776 = vld [vmem:[%s3746 + $0xe8] sm:$0xff]
        %v3777 = vld [vmem:[%s3746 + $0xf0] sm:$0xff]
        %v3778 = vld [vmem:[%s3746 + $0xf8] sm:$0xff]
        %vm3779 = vsmask.f32 5376
        %v3780 = vrot.slane %v2392, 2
        %v3781 = vrot.slane %v2394, 3
        %v3782 = vor.u32 %v3780, %v3781
        %v3783 = vrot.slane %v2415, 2
        %v3784 = vrot.slane %v2399, 3
        %v3785 = vor.u32 %v3783, %v3784
        %v3786 = vsel %vm3779, %v3782, %v3785
        %v3787 = vrot.slane %v2404, 2
        %v3788 = vrot.slane %v2406, 3
        %v3789 = vor.u32 %v3787, %v3788
        %v3790 = vrot.slane %v2423, 2
        %v3791 = vrot.slane %v2411, 3
        %v3792 = vor.u32 %v3790, %v3791
        %v3793 = vsel %vm3779, %v3789, %v3792
        %v3794 = vrot.slane %v2431, 2
        %v3795 = vrot.slane %v2419, 3
        %v3796 = vor.u32 %v3794, %v3795
        %v3797 = vsel %vm3779, %v3785, %v3796
        %v3798 = vrot.slane %v2434, 2
        %v3799 = vrot.slane %v2427, 3
        %v3800 = vor.u32 %v3798, %v3799
        %v3801 = vsel %vm3779, %v3792, %v3800
        %v3840 = vunpack.c.l.b16 %v3747
        %v3841 = vunpack.c.h.b16 %v3747
        %v3842 = vunpack.c.l.b16 %v3748
        %v3843 = vunpack.c.h.b16 %v3748
        %v3844 = vunpack.c.l.b16 %v3749
        %v3845 = vunpack.c.h.b16 %v3749
        %v3846 = vunpack.c.l.b16 %v3750
        %v3847 = vunpack.c.h.b16 %v3750
        %v3848 = vunpack.c.l.b16 %v3751
        %v3849 = vunpack.c.h.b16 %v3751
        %v3850 = vunpack.c.l.b16 %v3752
        %v3851 = vunpack.c.h.b16 %v3752
        %v3852 = vunpack.c.l.b16 %v3753
        %v3853 = vunpack.c.h.b16 %v3753
        %v3854 = vunpack.c.l.b16 %v3754
        %v3855 = vunpack.c.h.b16 %v3754
        %v3856 = vunpack.c.l.b16 %v3755
        %v3857 = vunpack.c.h.b16 %v3755
        %v3858 = vunpack.c.l.b16 %v3756
        %v3859 = vunpack.c.h.b16 %v3756
        %v3860 = vunpack.c.l.b16 %v3757
        %v3861 = vunpack.c.h.b16 %v3757
        %v3862 = vunpack.c.l.b16 %v3758
        %v3863 = vunpack.c.h.b16 %v3758
        %v3864 = vunpack.c.l.b16 %v3759
        %v3865 = vunpack.c.h.b16 %v3759
        %v3866 = vunpack.c.l.b16 %v3760
        %v3867 = vunpack.c.h.b16 %v3760
        %v3868 = vunpack.c.l.b16 %v3761
        %v3869 = vunpack.c.h.b16 %v3761
        %v3870 = vunpack.c.l.b16 %v3762
        %v3871 = vunpack.c.h.b16 %v3762
        %v3872 = vunpack.c.l.b16 %v3763
        %v3873 = vunpack.c.h.b16 %v3763
        %v3874 = vunpack.c.l.b16 %v3764
        %v3875 = vunpack.c.h.b16 %v3764
        %v3876 = vunpack.c.l.b16 %v3765
        %v3877 = vunpack.c.h.b16 %v3765
        %v3878 = vunpack.c.l.b16 %v3766
        %v3879 = vunpack.c.h.b16 %v3766
        %v3880 = vunpack.c.l.b16 %v3767
        %v3881 = vunpack.c.h.b16 %v3767
        %v3882 = vunpack.c.l.b16 %v3768
        %v3883 = vunpack.c.h.b16 %v3768
        %v3884 = vunpack.c.l.b16 %v3769
        %v3885 = vunpack.c.h.b16 %v3769
        %v3886 = vunpack.c.l.b16 %v3770
        %v3887 = vunpack.c.h.b16 %v3770
        %v3888 = vunpack.c.l.b16 %v3771
        %v3889 = vunpack.c.h.b16 %v3771
        %v3890 = vunpack.c.l.b16 %v3772
        %v3891 = vunpack.c.h.b16 %v3772
        %v3892 = vunpack.c.l.b16 %v3773
        %v3893 = vunpack.c.h.b16 %v3773
        %v3894 = vunpack.c.l.b16 %v3774
        %v3895 = vunpack.c.h.b16 %v3774
        %v3896 = vunpack.c.l.b16 %v3775
        %v3897 = vunpack.c.h.b16 %v3775
        %v3898 = vunpack.c.l.b16 %v3776
        %v3899 = vunpack.c.h.b16 %v3776
        %v3900 = vunpack.c.l.b16 %v3777
        %v3901 = vunpack.c.h.b16 %v3777
        %v3902 = vunpack.c.l.b16 %v3778
        %v3903 = vunpack.c.h.b16 %v3778
        %v3904 = vpack.c.b16 %v3842, %v3840
        %v3905 = vpack.c.b16 %v3843, %v3841
        %v3906 = vpack.c.b16 %v3846, %v3844
        %v3907 = vpack.c.b16 %v3847, %v3845
        %v3908 = vpack.c.b16 %v3850, %v3848
        %v3909 = vpack.c.b16 %v3851, %v3849
        %v3910 = vpack.c.b16 %v3854, %v3852
        %v3911 = vpack.c.b16 %v3855, %v3853
        %v3912 = vpack.c.b16 %v3858, %v3856
        %v3913 = vpack.c.b16 %v3859, %v3857
        %v3914 = vpack.c.b16 %v3862, %v3860
        %v3915 = vpack.c.b16 %v3863, %v3861
        %v3916 = vpack.c.b16 %v3866, %v3864
        %v3917 = vpack.c.b16 %v3867, %v3865
        %v3918 = vpack.c.b16 %v3870, %v3868
        %v3919 = vpack.c.b16 %v3871, %v3869
        %v3920 = vpack.c.b16 %v3874, %v3872
        %v3921 = vpack.c.b16 %v3875, %v3873
        %v3922 = vpack.c.b16 %v3878, %v3876
        %v3923 = vpack.c.b16 %v3879, %v3877
        %v3924 = vpack.c.b16 %v3882, %v3880
        %v3925 = vpack.c.b16 %v3883, %v3881
        %v3926 = vpack.c.b16 %v3886, %v3884
        %v3927 = vpack.c.b16 %v3887, %v3885
        %v3928 = vpack.c.b16 %v3890, %v3888
        %v3929 = vpack.c.b16 %v3891, %v3889
        %v3930 = vpack.c.b16 %v3894, %v3892
        %v3931 = vpack.c.b16 %v3895, %v3893
        %v3932 = vpack.c.b16 %v3898, %v3896
        %v3933 = vpack.c.b16 %v3899, %v3897
        %v3934 = vpack.c.b16 %v3902, %v3900
        %v3935 = vpack.c.b16 %v3903, %v3901
        %3968 = vmatprep.subr.bf16.mxu0 %v3905
        %3969 = vmatpush1.bf16.msra.mxu0 %v3904
        %3970 = vmatprep.subr.bf16.mxu0 %v3907
        %3971 = vmatpush1.bf16.msra.mxu0 %v3906
        %3972 = vmatprep.subr.bf16.mxu0 %v3909
        %3973 = vmatpush1.bf16.msra.mxu0 %v3908
        %3974 = vmatprep.subr.bf16.mxu0 %v3911
        %3975 = vmatpush1.bf16.msra.mxu0 %v3910
        %3976 = vmatprep.subr.bf16.mxu0 %v3913
        %3977 = vmatpush1.bf16.msra.mxu0 %v3912
        %3978 = vmatprep.subr.bf16.mxu0 %v3915
        %3979 = vmatpush1.bf16.msra.mxu0 %v3914
        %3980 = vmatprep.subr.bf16.mxu0 %v3917
        %3981 = vmatpush1.bf16.msra.mxu0 %v3916
        %3982 = vmatprep.subr.bf16.mxu0 %v3919
        %3983 = vmatpush1.bf16.msra.mxu0 %v3918
        %3984 = vmatprep.subr.bf16.mxu0 %v3921
        %3985 = vmatpush1.bf16.msra.mxu0 %v3920
        %3986 = vmatprep.subr.bf16.mxu0 %v3923
        %3987 = vmatpush1.bf16.msra.mxu0 %v3922
        %3988 = vmatprep.subr.bf16.mxu0 %v3925
        %3989 = vmatpush1.bf16.msra.mxu0 %v3924
        %3990 = vmatprep.subr.bf16.mxu0 %v3927
        %3991 = vmatpush1.bf16.msra.mxu0 %v3926
        %3992 = vmatprep.subr.bf16.mxu0 %v3929
        %3993 = vmatpush1.bf16.msra.mxu0 %v3928
        %3994 = vmatprep.subr.bf16.mxu0 %v3931
        %3995 = vmatpush1.bf16.msra.mxu0 %v3930
        %3996 = vmatprep.subr.bf16.mxu0 %v3933
        %3997 = vmatpush1.bf16.msra.mxu0 %v3932
        %3998 = vmatprep.subr.bf16.mxu0 %v3935
        %3999 = vmatpush1.bf16.msra.mxu0 %v3934
        %4000 = vmatprep.mubr.bf16.mxu0 %v3793
        %4001 = vmatmul.mubr.bf16.gmra.mrb[0].mxu0 %v3786
        %v4002 = vpop.f32.mrb[0].mxu0
        %v4003 = vadd.f32 0.0, %v4002
        %v4004 = vpop.f32.mrb[0].mxu0
        %v4005 = vadd.f32 0.0, %v4004
        %v4006 = vpop.f32.mrb[0].mxu0
        %v4007 = vadd.f32 0.0, %v4006
        %v4008 = vpop.f32.mrb[0].mxu0
        %v4009 = vadd.f32 0.0, %v4008
        %4010 = vmatprep.mubr.bf16.mxu0 %v3801
        %4011 = vmatmul.mubr.bf16.gmra.mrb[0].mxu0 %v3797
        %v4012 = vpop.f32.mrb[0].mxu0
        %v4013 = vadd.f32 0.0, %v4012
        %v4014 = vpop.f32.mrb[0].mxu0
        %v4015 = vadd.f32 0.0, %v4014
        %v4016 = vpop.f32.mrb[0].mxu0
        %v4017 = vadd.f32 0.0, %v4016
        %v4018 = vpop.f32.mrb[0].mxu0
        %v4019 = vadd.f32 0.0, %v4018
        %4020 = vmatprep.mubr.bf16.mxu0 %v3800
        %4021 = vmatmul.mubr.bf16.gmra.mrb[0].mxu0 %v3796
        %v4022 = vpop.f32.mrb[0].mxu0
        %v4023 = vadd.f32 0.0, %v4022
        %v4024 = vpop.f32.mrb[0].mxu0
        %v4025 = vadd.f32 0.0, %v4024
        %v4026 = vpop.f32.mrb[0].mxu0
        %v4027 = vpop.f32.mrb[0].mxu0
        %4028 = vdwg.mxu0
        %v4029 = vadd.f32 %v3736, %v4003
        %v4030 = vadd.f32 %v3737, %v4005
        %v4031 = vadd.f32 %v3738, %v4007
        %v4032 = vadd.f32 %v3739, %v4009
        %v4033 = vadd.f32 %v3740, %v4013
        %v4034 = vadd.f32 %v3741, %v4015
        %v4035 = vadd.f32 %v3742, %v4017
        %v4036 = vadd.f32 %v3743, %v4019
        %v4037 = vadd.f32 %v3744, %v4023
        %v4038 = vadd.f32 %v3745, %v4025
        %v4039 = vld [vmem:[%s4] sm:$0xff]
        %v4040 = vld [vmem:[%s4 + $0x8] sm:$0xff]
        %v4041 = vld [vmem:[%s4 + $0x10] sm:$0xff]
        %v4042 = vld [vmem:[%s4 + $0x18] sm:$0xff]
        %v4043 = vld [vmem:[%s4 + $0x20] sm:$0xff]
        %4045 = vset.pattern.permute.xlu0 0
        %4046 = vperm.xlu0 %4045, %v4039
        %v4047 = vpop.permute.xlu0 %4046
        %4050 = vset.pattern.permute.xlu0 0
        %4051 = vperm.xlu0 %4050, %v4040
        %v4052 = vpop.permute.xlu0 %4051
        %4055 = vset.pattern.permute.xlu0 0
        %4056 = vperm.xlu0 %4055, %v4041
        %v4057 = vpop.permute.xlu0 %4056
        %4060 = vset.pattern.permute.xlu0 0
        %4061 = vperm.xlu0 %4060, %v4042
        %v4062 = vpop.permute.xlu0 %4061
        %4065 = vset.pattern.permute.xlu0 0
        %4066 = vperm.xlu0 %4065, %v4043
        %v4067 = vpop.permute.xlu0 %4066
        %v4069 = vmul.f32 %v4029, %v4047
        %v4070 = vmul.f32 %v4030, %v4047
        %v4071 = vmul.f32 %v4031, %v4052
        %v4072 = vmul.f32 %v4032, %v4052
        %v4073 = vmul.f32 %v4033, %v4057
        %v4074 = vmul.f32 %v4034, %v4057
        %v4075 = vmul.f32 %v4035, %v4062
        %v4076 = vmul.f32 %v4036, %v4062
        %v4077 = vmul.f32 %v4037, %v4067
        %v4078 = vmul.f32 %v4038, %v4067
        %v4079 = vadd.f32 %v4069, %v4071
        %v4080 = vadd.f32 %v4079, %v4073
        %v4081 = vadd.f32 %v4080, %v4075
        %v4082 = vadd.f32 %v4081, %v4077
        %v4083 = vrot.slane %v4082, 4
        %v4084 = vadd.f32 %v4082, %v4083
        %v4085 = vrot.slane %v4084, 2
        %v4086 = vadd.f32 %v4084, %v4085
        %v4087 = vrot.slane %v4086, 1
        %v4088 = vadd.f32 %v4086, %v4087
        %v4089 = vadd.f32 %v4070, %v4072
        %v4090 = vadd.f32 %v4089, %v4074
        %v4091 = vadd.f32 %v4090, %v4076
        %v4092 = vadd.f32 %v4091, %v4078
        %v4093 = vrot.slane %v4092, 4
        %v4094 = vadd.f32 %v4092, %v4093
        %v4095 = vrot.slane %v4094, 2
        %v4096 = vadd.f32 %v4094, %v4095
        %v4097 = vrot.slane %v4096, 1
        %v4098 = vadd.f32 %v4096, %v4097
        %v4099 = vpack.c.bf16 %v4088, %v4088
        %v4100 = vpack.c.bf16 %v4098, %v4098
        %v4101 = vld [vmem:[%s5] sm:$0xff]
        %v4102 = vld [vmem:[%s5 + $0x8] sm:$0xff]
        %v4103 = vld [vmem:[%s5 + $0x10] sm:$0xff]
        %v4104 = vld [vmem:[%s5 + $0x18] sm:$0xff]
        %v4105 = vld [vmem:[%s5 + $0x20] sm:$0xff]
        %v4106 = vld [vmem:[%s5 + $0x28] sm:$0xff]
        %v4107 = vld [vmem:[%s5 + $0x30] sm:$0xff]
        %v4108 = vld [vmem:[%s5 + $0x38] sm:$0xff]
        %v4109 = vld [vmem:[%s5 + $0x40] sm:$0xff]
        %v4110 = vld [vmem:[%s5 + $0x48] sm:$0xff]
        %v4111 = vld [vmem:[%s5 + $0x50] sm:$0xff]
        %v4112 = vld [vmem:[%s5 + $0x58] sm:$0xff]
        %v4113 = vld [vmem:[%s5 + $0x60] sm:$0xff]
        %v4114 = vld [vmem:[%s5 + $0x68] sm:$0xff]
        %v4115 = vld [vmem:[%s5 + $0x70] sm:$0xff]
        %v4116 = vld [vmem:[%s5 + $0x78] sm:$0xff]
        %v4117 = vld [vmem:[%s5 + $0x80] sm:$0xff]
        %v4118 = vld [vmem:[%s5 + $0x88] sm:$0xff]
        %v4119 = vld [vmem:[%s5 + $0x90] sm:$0xff]
        %v4120 = vld [vmem:[%s5 + $0x98] sm:$0xff]
        %v4121 = vld [vmem:[%s5 + $0xa0] sm:$0xff]
        %v4122 = vld [vmem:[%s5 + $0xa8] sm:$0xff]
        %v4123 = vld [vmem:[%s5 + $0xb0] sm:$0xff]
        %v4124 = vld [vmem:[%s5 + $0xb8] sm:$0xff]
        %v4125 = vld [vmem:[%s5 + $0xc0] sm:$0xff]
        %v4126 = vld [vmem:[%s5 + $0xc8] sm:$0xff]
        %v4127 = vld [vmem:[%s5 + $0xd0] sm:$0xff]
        %v4128 = vld [vmem:[%s5 + $0xd8] sm:$0xff]
        %v4129 = vld [vmem:[%s5 + $0xe0] sm:$0xff]
        %v4130 = vld [vmem:[%s5 + $0xe8] sm:$0xff]
        %v4131 = vld [vmem:[%s5 + $0xf0] sm:$0xff]
        %v4132 = vld [vmem:[%s5 + $0xf8] sm:$0xff]
        %v4133 = vld [vmem:[%s5 + $0x100] sm:$0xff]
        %v4134 = vld [vmem:[%s5 + $0x108] sm:$0xff]
        %v4135 = vld [vmem:[%s5 + $0x110] sm:$0xff]
        %v4136 = vld [vmem:[%s5 + $0x118] sm:$0xff]
        %v4137 = vld [vmem:[%s5 + $0x120] sm:$0xff]
        %v4138 = vld [vmem:[%s5 + $0x128] sm:$0xff]
        %v4139 = vld [vmem:[%s5 + $0x130] sm:$0xff]
        %v4140 = vld [vmem:[%s5 + $0x138] sm:$0xff]
        %v4141 = vld [vmem:[%s5 + $0x140] sm:$0xff]
        %v4142 = vld [vmem:[%s5 + $0x148] sm:$0xff]
        %v4143 = vld [vmem:[%s5 + $0x150] sm:$0xff]
        %v4144 = vld [vmem:[%s5 + $0x158] sm:$0xff]
        %v4145 = vld [vmem:[%s5 + $0x160] sm:$0xff]
        %v4146 = vld [vmem:[%s5 + $0x168] sm:$0xff]
        %v4147 = vld [vmem:[%s5 + $0x170] sm:$0xff]
        %v4148 = vld [vmem:[%s5 + $0x178] sm:$0xff]
        %v4149 = vld [vmem:[%s5 + $0x180] sm:$0xff]
        %v4150 = vld [vmem:[%s5 + $0x188] sm:$0xff]
        %v4151 = vld [vmem:[%s5 + $0x190] sm:$0xff]
        %v4152 = vld [vmem:[%s5 + $0x198] sm:$0xff]
        %v4153 = vld [vmem:[%s5 + $0x1a0] sm:$0xff]
        %v4154 = vld [vmem:[%s5 + $0x1a8] sm:$0xff]
        %v4155 = vld [vmem:[%s5 + $0x1b0] sm:$0xff]
        %v4156 = vld [vmem:[%s5 + $0x1b8] sm:$0xff]
        %v4157 = vld [vmem:[%s5 + $0x1c0] sm:$0xff]
        %v4158 = vld [vmem:[%s5 + $0x1c8] sm:$0xff]
        %v4159 = vld [vmem:[%s5 + $0x1d0] sm:$0xff]
        %v4160 = vld [vmem:[%s5 + $0x1d8] sm:$0xff]
        %v4161 = vld [vmem:[%s5 + $0x1e0] sm:$0xff]
        %v4162 = vld [vmem:[%s5 + $0x1e8] sm:$0xff]
        %v4163 = vld [vmem:[%s5 + $0x1f0] sm:$0xff]
        %v4164 = vld [vmem:[%s5 + $0x1f8] sm:$0xff]
        %v4229 = vunpack.c.l.b16 %v4101
        %v4230 = vunpack.c.h.b16 %v4101
        %v4231 = vunpack.c.l.b16 %v4102
        %v4232 = vunpack.c.h.b16 %v4102
        %v4233 = vunpack.c.l.b16 %v4103
        %v4234 = vunpack.c.h.b16 %v4103
        %v4235 = vunpack.c.l.b16 %v4104
        %v4236 = vunpack.c.h.b16 %v4104
        %v4237 = vunpack.c.l.b16 %v4105
        %v4238 = vunpack.c.h.b16 %v4105
        %v4239 = vunpack.c.l.b16 %v4106
        %v4240 = vunpack.c.h.b16 %v4106
        %v4241 = vunpack.c.l.b16 %v4107
        %v4242 = vunpack.c.h.b16 %v4107
        %v4243 = vunpack.c.l.b16 %v4108
        %v4244 = vunpack.c.h.b16 %v4108
        %v4245 = vunpack.c.l.b16 %v4109
        %v4246 = vunpack.c.h.b16 %v4109
        %v4247 = vunpack.c.l.b16 %v4110
        %v4248 = vunpack.c.h.b16 %v4110
        %v4249 = vunpack.c.l.b16 %v4111
        %v4250 = vunpack.c.h.b16 %v4111
        %v4251 = vunpack.c.l.b16 %v4112
        %v4252 = vunpack.c.h.b16 %v4112
        %v4253 = vunpack.c.l.b16 %v4113
        %v4254 = vunpack.c.h.b16 %v4113
        %v4255 = vunpack.c.l.b16 %v4114
        %v4256 = vunpack.c.h.b16 %v4114
        %v4257 = vunpack.c.l.b16 %v4115
        %v4258 = vunpack.c.h.b16 %v4115
        %v4259 = vunpack.c.l.b16 %v4116
        %v4260 = vunpack.c.h.b16 %v4116
        %v4261 = vunpack.c.l.b16 %v4117
        %v4262 = vunpack.c.h.b16 %v4117
        %v4263 = vunpack.c.l.b16 %v4118
        %v4264 = vunpack.c.h.b16 %v4118
        %v4265 = vunpack.c.l.b16 %v4119
        %v4266 = vunpack.c.h.b16 %v4119
        %v4267 = vunpack.c.l.b16 %v4120
        %v4268 = vunpack.c.h.b16 %v4120
        %v4269 = vunpack.c.l.b16 %v4121
        %v4270 = vunpack.c.h.b16 %v4121
        %v4271 = vunpack.c.l.b16 %v4122
        %v4272 = vunpack.c.h.b16 %v4122
        %v4273 = vunpack.c.l.b16 %v4123
        %v4274 = vunpack.c.h.b16 %v4123
        %v4275 = vunpack.c.l.b16 %v4124
        %v4276 = vunpack.c.h.b16 %v4124
        %v4277 = vunpack.c.l.b16 %v4125
        %v4278 = vunpack.c.h.b16 %v4125
        %v4279 = vunpack.c.l.b16 %v4126
        %v4280 = vunpack.c.h.b16 %v4126
        %v4281 = vunpack.c.l.b16 %v4127
        %v4282 = vunpack.c.h.b16 %v4127
        %v4283 = vunpack.c.l.b16 %v4128
        %v4284 = vunpack.c.h.b16 %v4128
        %v4285 = vunpack.c.l.b16 %v4129
        %v4286 = vunpack.c.h.b16 %v4129
        %v4287 = vunpack.c.l.b16 %v4130
        %v4288 = vunpack.c.h.b16 %v4130
        %v4289 = vunpack.c.l.b16 %v4131
        %v4290 = vunpack.c.h.b16 %v4131
        %v4291 = vunpack.c.l.b16 %v4132
        %v4292 = vunpack.c.h.b16 %v4132
        %v4293 = vunpack.c.l.b16 %v4133
        %v4294 = vunpack.c.h.b16 %v4133
        %v4295 = vunpack.c.l.b16 %v4134
        %v4296 = vunpack.c.h.b16 %v4134
        %v4297 = vunpack.c.l.b16 %v4135
        %v4298 = vunpack.c.h.b16 %v4135
        %v4299 = vunpack.c.l.b16 %v4136
        %v4300 = vunpack.c.h.b16 %v4136
        %v4301 = vunpack.c.l.b16 %v4137
        %v4302 = vunpack.c.h.b16 %v4137
        %v4303 = vunpack.c.l.b16 %v4138
        %v4304 = vunpack.c.h.b16 %v4138
        %v4305 = vunpack.c.l.b16 %v4139
        %v4306 = vunpack.c.h.b16 %v4139
        %v4307 = vunpack.c.l.b16 %v4140
        %v4308 = vunpack.c.h.b16 %v4140
        %v4309 = vunpack.c.l.b16 %v4141
        %v4310 = vunpack.c.h.b16 %v4141
        %v4311 = vunpack.c.l.b16 %v4142
        %v4312 = vunpack.c.h.b16 %v4142
        %v4313 = vunpack.c.l.b16 %v4143
        %v4314 = vunpack.c.h.b16 %v4143
        %v4315 = vunpack.c.l.b16 %v4144
        %v4316 = vunpack.c.h.b16 %v4144
        %v4317 = vunpack.c.l.b16 %v4145
        %v4318 = vunpack.c.h.b16 %v4145
        %v4319 = vunpack.c.l.b16 %v4146
        %v4320 = vunpack.c.h.b16 %v4146
        %v4321 = vunpack.c.l.b16 %v4147
        %v4322 = vunpack.c.h.b16 %v4147
        %v4323 = vunpack.c.l.b16 %v4148
        %v4324 = vunpack.c.h.b16 %v4148
        %v4325 = vunpack.c.l.b16 %v4149
        %v4326 = vunpack.c.h.b16 %v4149
        %v4327 = vunpack.c.l.b16 %v4150
        %v4328 = vunpack.c.h.b16 %v4150
        %v4329 = vunpack.c.l.b16 %v4151
        %v4330 = vunpack.c.h.b16 %v4151
        %v4331 = vunpack.c.l.b16 %v4152
        %v4332 = vunpack.c.h.b16 %v4152
        %v4333 = vunpack.c.l.b16 %v4153
        %v4334 = vunpack.c.h.b16 %v4153
        %v4335 = vunpack.c.l.b16 %v4154
        %v4336 = vunpack.c.h.b16 %v4154
        %v4337 = vunpack.c.l.b16 %v4155
        %v4338 = vunpack.c.h.b16 %v4155
        %v4339 = vunpack.c.l.b16 %v4156
        %v4340 = vunpack.c.h.b16 %v4156
        %v4341 = vunpack.c.l.b16 %v4157
        %v4342 = vunpack.c.h.b16 %v4157
        %v4343 = vunpack.c.l.b16 %v4158
        %v4344 = vunpack.c.h.b16 %v4158
        %v4345 = vunpack.c.l.b16 %v4159
        %v4346 = vunpack.c.h.b16 %v4159
        %v4347 = vunpack.c.l.b16 %v4160
        %v4348 = vunpack.c.h.b16 %v4160
        %v4349 = vunpack.c.l.b16 %v4161
        %v4350 = vunpack.c.h.b16 %v4161
        %v4351 = vunpack.c.l.b16 %v4162
        %v4352 = vunpack.c.h.b16 %v4162
        %v4353 = vunpack.c.l.b16 %v4163
        %v4354 = vunpack.c.h.b16 %v4163
        %v4355 = vunpack.c.l.b16 %v4164
        %v4356 = vunpack.c.h.b16 %v4164
        %v4357 = vpack.c.b16 %v4233, %v4229
        %v4358 = vpack.c.b16 %v4234, %v4230
        %v4359 = vpack.c.b16 %v4235, %v4231
        %v4360 = vpack.c.b16 %v4236, %v4232
        %v4361 = vpack.c.b16 %v4241, %v4237
        %v4362 = vpack.c.b16 %v4242, %v4238
        %v4363 = vpack.c.b16 %v4243, %v4239
        %v4364 = vpack.c.b16 %v4244, %v4240
        %v4365 = vpack.c.b16 %v4249, %v4245
        %v4366 = vpack.c.b16 %v4250, %v4246
        %v4367 = vpack.c.b16 %v4251, %v4247
        %v4368 = vpack.c.b16 %v4252, %v4248
        %v4369 = vpack.c.b16 %v4257, %v4253
        %v4370 = vpack.c.b16 %v4258, %v4254
        %v4371 = vpack.c.b16 %v4259, %v4255
        %v4372 = vpack.c.b16 %v4260, %v4256
        %v4373 = vpack.c.b16 %v4265, %v4261
        %v4374 = vpack.c.b16 %v4266, %v4262
        %v4375 = vpack.c.b16 %v4267, %v4263
        %v4376 = vpack.c.b16 %v4268, %v4264
        %v4377 = vpack.c.b16 %v4273, %v4269
        %v4378 = vpack.c.b16 %v4274, %v4270
        %v4379 = vpack.c.b16 %v4275, %v4271
        %v4380 = vpack.c.b16 %v4276, %v4272
        %v4381 = vpack.c.b16 %v4281, %v4277
        %v4382 = vpack.c.b16 %v4282, %v4278
        %v4383 = vpack.c.b16 %v4283, %v4279
        %v4384 = vpack.c.b16 %v4284, %v4280
        %v4385 = vpack.c.b16 %v4289, %v4285
        %v4386 = vpack.c.b16 %v4290, %v4286
        %v4387 = vpack.c.b16 %v4291, %v4287
        %v4388 = vpack.c.b16 %v4292, %v4288
        %v4389 = vpack.c.b16 %v4297, %v4293
        %v4390 = vpack.c.b16 %v4298, %v4294
        %v4391 = vpack.c.b16 %v4299, %v4295
        %v4392 = vpack.c.b16 %v4300, %v4296
        %v4393 = vpack.c.b16 %v4305, %v4301
        %v4394 = vpack.c.b16 %v4306, %v4302
        %v4395 = vpack.c.b16 %v4307, %v4303
        %v4396 = vpack.c.b16 %v4308, %v4304
        %v4397 = vpack.c.b16 %v4313, %v4309
        %v4398 = vpack.c.b16 %v4314, %v4310
        %v4399 = vpack.c.b16 %v4315, %v4311
        %v4400 = vpack.c.b16 %v4316, %v4312
        %v4401 = vpack.c.b16 %v4321, %v4317
        %v4402 = vpack.c.b16 %v4322, %v4318
        %v4403 = vpack.c.b16 %v4323, %v4319
        %v4404 = vpack.c.b16 %v4324, %v4320
        %v4405 = vpack.c.b16 %v4329, %v4325
        %v4406 = vpack.c.b16 %v4330, %v4326
        %v4407 = vpack.c.b16 %v4331, %v4327
        %v4408 = vpack.c.b16 %v4332, %v4328
        %v4409 = vpack.c.b16 %v4337, %v4333
        %v4410 = vpack.c.b16 %v4338, %v4334
        %v4411 = vpack.c.b16 %v4339, %v4335
        %v4412 = vpack.c.b16 %v4340, %v4336
        %v4413 = vpack.c.b16 %v4345, %v4341
        %v4414 = vpack.c.b16 %v4346, %v4342
        %v4415 = vpack.c.b16 %v4347, %v4343
        %v4416 = vpack.c.b16 %v4348, %v4344
        %v4417 = vpack.c.b16 %v4353, %v4349
        %v4418 = vpack.c.b16 %v4354, %v4350
        %v4419 = vpack.c.b16 %v4355, %v4351
        %v4420 = vpack.c.b16 %v4356, %v4352
        %4485 = vmatprep.subr.bf16.mxu0 %v4358
        %4486 = vmatpush1.bf16.msra.mxu0 %v4357
        %4487 = vmatprep.subr.bf16.mxu0 %v4362
        %4488 = vmatpush1.bf16.msra.mxu0 %v4361
        %4489 = vmatprep.subr.bf16.mxu0 %v4366
        %4490 = vmatpush1.bf16.msra.mxu0 %v4365
        %4491 = vmatprep.subr.bf16.mxu0 %v4370
        %4492 = vmatpush1.bf16.msra.mxu0 %v4369
        %4493 = vmatprep.subr.bf16.mxu0 %v4374
        %4494 = vmatpush1.bf16.msra.mxu0 %v4373
        %4495 = vmatprep.subr.bf16.mxu0 %v4378
        %4496 = vmatpush1.bf16.msra.mxu0 %v4377
        %4497 = vmatprep.subr.bf16.mxu0 %v4382
        %4498 = vmatpush1.bf16.msra.mxu0 %v4381
        %4499 = vmatprep.subr.bf16.mxu0 %v4386
        %4500 = vmatpush1.bf16.msra.mxu0 %v4385
        %4501 = vmatprep.subr.bf16.mxu0 %v4390
        %4502 = vmatpush1.bf16.msra.mxu0 %v4389
        %4503 = vmatprep.subr.bf16.mxu0 %v4394
        %4504 = vmatpush1.bf16.msra.mxu0 %v4393
        %4505 = vmatprep.subr.bf16.mxu0 %v4398
        %4506 = vmatpush1.bf16.msra.mxu0 %v4397
        %4507 = vmatprep.subr.bf16.mxu0 %v4402
        %4508 = vmatpush1.bf16.msra.mxu0 %v4401
        %4509 = vmatprep.subr.bf16.mxu0 %v4406
        %4510 = vmatpush1.bf16.msra.mxu0 %v4405
        %4511 = vmatprep.subr.bf16.mxu0 %v4410
        %4512 = vmatpush1.bf16.msra.mxu0 %v4409
        %4513 = vmatprep.subr.bf16.mxu0 %v4414
        %4514 = vmatpush1.bf16.msra.mxu0 %v4413
        %4515 = vmatprep.subr.bf16.mxu0 %v4418
        %4516 = vmatpush1.bf16.msra.mxu0 %v4417
        %4517 = vmatprep.mubr.bf16.mxu0 %v4100
        %4518 = vmatmul.mubr.bf16.gmra.mrb[0].mxu0 %v4099
        %v4519 = vpop.f32.mrb[0].mxu0
        %v4520 = vadd.f32 0.0, %v4519
        %v4521 = vpop.f32.mrb[0].mxu0
        %v4522 = vadd.f32 0.0, %v4521
        %v4523 = vpop.f32.mrb[0].mxu0
        %v4524 = vpop.f32.mrb[0].mxu0
        %4525 = vdwg.mxu0
        %4526 = vmatprep.subr.bf16.mxu0 %v4360
        %4527 = vmatpush1.bf16.msra.mxu0 %v4359
        %4528 = vmatprep.subr.bf16.mxu0 %v4364
        %4529 = vmatpush1.bf16.msra.mxu0 %v4363
        %4530 = vmatprep.subr.bf16.mxu0 %v4368
        %4531 = vmatpush1.bf16.msra.mxu0 %v4367
        %4532 = vmatprep.subr.bf16.mxu0 %v4372
        %4533 = vmatpush1.bf16.msra.mxu0 %v4371
        %4534 = vmatprep.subr.bf16.mxu0 %v4376
        %4535 = vmatpush1.bf16.msra.mxu0 %v4375
        %4536 = vmatprep.subr.bf16.mxu0 %v4380
        %4537 = vmatpush1.bf16.msra.mxu0 %v4379
        %4538 = vmatprep.subr.bf16.mxu0 %v4384
        %4539 = vmatpush1.bf16.msra.mxu0 %v4383
        %4540 = vmatprep.subr.bf16.mxu0 %v4388
        %4541 = vmatpush1.bf16.msra.mxu0 %v4387
        %4542 = vmatprep.subr.bf16.mxu0 %v4392
        %4543 = vmatpush1.bf16.msra.mxu0 %v4391
        %4544 = vmatprep.subr.bf16.mxu0 %v4396
        %4545 = vmatpush1.bf16.msra.mxu0 %v4395
        %4546 = vmatprep.subr.bf16.mxu0 %v4400
        %4547 = vmatpush1.bf16.msra.mxu0 %v4399
        %4548 = vmatprep.subr.bf16.mxu0 %v4404
        %4549 = vmatpush1.bf16.msra.mxu0 %v4403
        %4550 = vmatprep.subr.bf16.mxu0 %v4408
        %4551 = vmatpush1.bf16.msra.mxu0 %v4407
        %4552 = vmatprep.subr.bf16.mxu0 %v4412
        %4553 = vmatpush1.bf16.msra.mxu0 %v4411
        %4554 = vmatprep.subr.bf16.mxu0 %v4416
        %4555 = vmatpush1.bf16.msra.mxu0 %v4415
        %4556 = vmatprep.subr.bf16.mxu0 %v4420
        %4557 = vmatpush1.bf16.msra.mxu0 %v4419
        %4558 = vmatprep.mubr.bf16.mxu0 %v4100
        %4559 = vmatmul.mubr.bf16.gmra.mrb[0].mxu0 %v4099
        %v4560 = vpop.f32.mrb[0].mxu0
        %v4561 = vadd.f32 0.0, %v4560
        %v4562 = vpop.f32.mrb[0].mxu0
        %v4563 = vadd.f32 0.0, %v4562
        %v4564 = vpop.f32.mrb[0].mxu0
        %v4565 = vpop.f32.mrb[0].mxu0
        %4566 = vdwg.mxu0
        %v4567 = vpack.c.bf16 %v4520, %v4520
        %v4568 = vpack.c.bf16 %v4522, %v4522
        %v4569 = vpack.c.bf16 %v4561, %v4561
        %v4570 = vpack.c.bf16 %v4563, %v4563
        %v4571 = vld [vmem:[%s6] sm:$0xf]
        %v4572 = vld [vmem:[%s6 + $0x4] sm:$0xf]
        %v4573 = vld [vmem:[%s6 + $0x8] sm:$0xf]
        %v4574 = vld [vmem:[%s6 + $0xc] sm:$0xf]
        %v4575 = vld [vmem:[%s6 + $0x10] sm:$0xf]
        %v4576 = vld [vmem:[%s6 + $0x14] sm:$0xf]
        %v4577 = vld [vmem:[%s6 + $0x18] sm:$0xf]
        %v4578 = vld [vmem:[%s6 + $0x1c] sm:$0xf]
        %v4579 = vld [vmem:[%s6 + $0x20] sm:$0xf]
        %v4580 = vld [vmem:[%s6 + $0x24] sm:$0xf]
        %v4581 = vld [vmem:[%s6 + $0x28] sm:$0xf]
        %v4582 = vld [vmem:[%s6 + $0x2c] sm:$0xf]
        %v4583 = vld [vmem:[%s6 + $0x30] sm:$0xf]
        %v4584 = vld [vmem:[%s6 + $0x34] sm:$0xf]
        %v4585 = vld [vmem:[%s6 + $0x38] sm:$0xf]
        %v4586 = vld [vmem:[%s6 + $0x3c] sm:$0xf]
        %v4587 = vld [vmem:[%s6 + $0x40] sm:$0xf]
        %v4588 = vld [vmem:[%s6 + $0x44] sm:$0xf]
        %v4589 = vld [vmem:[%s6 + $0x48] sm:$0xf]
        %v4590 = vld [vmem:[%s6 + $0x4c] sm:$0xf]
        %v4591 = vld [vmem:[%s6 + $0x50] sm:$0xf]
        %v4592 = vld [vmem:[%s6 + $0x54] sm:$0xf]
        %v4593 = vld [vmem:[%s6 + $0x58] sm:$0xf]
        %v4594 = vld [vmem:[%s6 + $0x5c] sm:$0xf]
        %v4595 = vld [vmem:[%s6 + $0x60] sm:$0xf]
        %v4596 = vld [vmem:[%s6 + $0x64] sm:$0xf]
        %v4597 = vld [vmem:[%s6 + $0x68] sm:$0xf]
        %v4598 = vld [vmem:[%s6 + $0x6c] sm:$0xf]
        %v4599 = vld [vmem:[%s6 + $0x70] sm:$0xf]
        %v4600 = vld [vmem:[%s6 + $0x74] sm:$0xf]
        %v4601 = vld [vmem:[%s6 + $0x78] sm:$0xf]
        %v4602 = vld [vmem:[%s6 + $0x7c] sm:$0xf]
        %v4603 = vld [vmem:[%s6 + $0x80] sm:$0xf]
        %v4604 = vld [vmem:[%s6 + $0x84] sm:$0xf]
        %v4605 = vld [vmem:[%s6 + $0x88] sm:$0xf]
        %v4606 = vld [vmem:[%s6 + $0x8c] sm:$0xf]
        %v4607 = vld [vmem:[%s6 + $0x90] sm:$0xf]
        %v4608 = vld [vmem:[%s6 + $0x94] sm:$0xf]
        %v4609 = vld [vmem:[%s6 + $0x98] sm:$0xf]
        %v4610 = vld [vmem:[%s6 + $0x9c] sm:$0xf]
        %v4611 = vld [vmem:[%s6 + $0xa0] sm:$0xf]
        %v4612 = vld [vmem:[%s6 + $0xa4] sm:$0xf]
        %v4613 = vld [vmem:[%s6 + $0xa8] sm:$0xf]
        %v4614 = vld [vmem:[%s6 + $0xac] sm:$0xf]
        %v4615 = vld [vmem:[%s6 + $0xb0] sm:$0xf]
        %v4616 = vld [vmem:[%s6 + $0xb4] sm:$0xf]
        %v4617 = vld [vmem:[%s6 + $0xb8] sm:$0xf]
        %v4618 = vld [vmem:[%s6 + $0xbc] sm:$0xf]
        %v4619 = vld [vmem:[%s6 + $0xc0] sm:$0xf]
        %v4620 = vld [vmem:[%s6 + $0xc4] sm:$0xf]
        %v4621 = vld [vmem:[%s6 + $0xc8] sm:$0xf]
        %v4622 = vld [vmem:[%s6 + $0xcc] sm:$0xf]
        %v4623 = vld [vmem:[%s6 + $0xd0] sm:$0xf]
        %v4624 = vld [vmem:[%s6 + $0xd4] sm:$0xf]
        %v4625 = vld [vmem:[%s6 + $0xd8] sm:$0xf]
        %v4626 = vld [vmem:[%s6 + $0xdc] sm:$0xf]
        %v4627 = vld [vmem:[%s6 + $0xe0] sm:$0xf]
        %v4628 = vld [vmem:[%s6 + $0xe4] sm:$0xf]
        %v4629 = vld [vmem:[%s6 + $0xe8] sm:$0xf]
        %v4630 = vld [vmem:[%s6 + $0xec] sm:$0xf]
        %v4631 = vld [vmem:[%s6 + $0xf0] sm:$0xf]
        %v4632 = vld [vmem:[%s6 + $0xf4] sm:$0xf]
        %v4633 = vld [vmem:[%s6 + $0xf8] sm:$0xf]
        %v4634 = vld [vmem:[%s6 + $0xfc] sm:$0xf]
        %v4635 = vld [vmem:[%s7] sm:$0x1]
        %v4700 = vunpack.c.l.b16 %v4571
        %v4701 = vunpack.c.l.b16 %v4572
        %v4702 = vunpack.c.l.b16 %v4573
        %v4703 = vunpack.c.l.b16 %v4574
        %v4704 = vunpack.c.l.b16 %v4575
        %v4705 = vunpack.c.l.b16 %v4576
        %v4706 = vunpack.c.l.b16 %v4577
        %v4707 = vunpack.c.l.b16 %v4578
        %v4708 = vunpack.c.l.b16 %v4579
        %v4709 = vunpack.c.l.b16 %v4580
        %v4710 = vunpack.c.l.b16 %v4581
        %v4711 = vunpack.c.l.b16 %v4582
        %v4712 = vunpack.c.l.b16 %v4583
        %v4713 = vunpack.c.l.b16 %v4584
        %v4714 = vunpack.c.l.b16 %v4585
        %v4715 = vunpack.c.l.b16 %v4586
        %v4716 = vunpack.c.l.b16 %v4587
        %v4717 = vunpack.c.l.b16 %v4588
        %v4718 = vunpack.c.l.b16 %v4589
        %v4719 = vunpack.c.l.b16 %v4590
        %v4720 = vunpack.c.l.b16 %v4591
        %v4721 = vunpack.c.l.b16 %v4592
        %v4722 = vunpack.c.l.b16 %v4593
        %v4723 = vunpack.c.l.b16 %v4594
        %v4724 = vunpack.c.l.b16 %v4595
        %v4725 = vunpack.c.l.b16 %v4596
        %v4726 = vunpack.c.l.b16 %v4597
        %v4727 = vunpack.c.l.b16 %v4598
        %v4728 = vunpack.c.l.b16 %v4599
        %v4729 = vunpack.c.l.b16 %v4600
        %v4730 = vunpack.c.l.b16 %v4601
        %v4731 = vunpack.c.l.b16 %v4602
        %v4732 = vunpack.c.l.b16 %v4603
        %v4733 = vunpack.c.l.b16 %v4604
        %v4734 = vunpack.c.l.b16 %v4605
        %v4735 = vunpack.c.l.b16 %v4606
        %v4736 = vunpack.c.l.b16 %v4607
        %v4737 = vunpack.c.l.b16 %v4608
        %v4738 = vunpack.c.l.b16 %v4609
        %v4739 = vunpack.c.l.b16 %v4610
        %v4740 = vunpack.c.l.b16 %v4611
        %v4741 = vunpack.c.l.b16 %v4612
        %v4742 = vunpack.c.l.b16 %v4613
        %v4743 = vunpack.c.l.b16 %v4614
        %v4744 = vunpack.c.l.b16 %v4615
        %v4745 = vunpack.c.l.b16 %v4616
        %v4746 = vunpack.c.l.b16 %v4617
        %v4747 = vunpack.c.l.b16 %v4618
        %v4748 = vunpack.c.l.b16 %v4619
        %v4749 = vunpack.c.l.b16 %v4620
        %v4750 = vunpack.c.l.b16 %v4621
        %v4751 = vunpack.c.l.b16 %v4622
        %v4752 = vunpack.c.l.b16 %v4623
        %v4753 = vunpack.c.l.b16 %v4624
        %v4754 = vunpack.c.l.b16 %v4625
        %v4755 = vunpack.c.l.b16 %v4626
        %v4756 = vunpack.c.l.b16 %v4627
        %v4757 = vunpack.c.l.b16 %v4628
        %v4758 = vunpack.c.l.b16 %v4629
        %v4759 = vunpack.c.l.b16 %v4630
        %v4760 = vunpack.c.l.b16 %v4631
        %v4761 = vunpack.c.l.b16 %v4632
        %v4762 = vunpack.c.l.b16 %v4633
        %v4763 = vunpack.c.l.b16 %v4634
        %v4764 = vpack.c.b16 %v4701, %v4700
        %v4765 = vpack.c.b16 %v4703, %v4702
        %v4766 = vpack.c.b16 %v4705, %v4704
        %v4767 = vpack.c.b16 %v4707, %v4706
        %v4768 = vpack.c.b16 %v4709, %v4708
        %v4769 = vpack.c.b16 %v4711, %v4710
        %v4770 = vpack.c.b16 %v4713, %v4712
        %v4771 = vpack.c.b16 %v4715, %v4714
        %v4772 = vpack.c.b16 %v4717, %v4716
        %v4773 = vpack.c.b16 %v4719, %v4718
        %v4774 = vpack.c.b16 %v4721, %v4720
        %v4775 = vpack.c.b16 %v4723, %v4722
        %v4776 = vpack.c.b16 %v4725, %v4724
        %v4777 = vpack.c.b16 %v4727, %v4726
        %v4778 = vpack.c.b16 %v4729, %v4728
        %v4779 = vpack.c.b16 %v4731, %v4730
        %v4780 = vpack.c.b16 %v4733, %v4732
        %v4781 = vpack.c.b16 %v4735, %v4734
        %v4782 = vpack.c.b16 %v4737, %v4736
        %v4783 = vpack.c.b16 %v4739, %v4738
        %v4784 = vpack.c.b16 %v4741, %v4740
        %v4785 = vpack.c.b16 %v4743, %v4742
        %v4786 = vpack.c.b16 %v4745, %v4744
        %v4787 = vpack.c.b16 %v4747, %v4746
        %v4788 = vpack.c.b16 %v4749, %v4748
        %v4789 = vpack.c.b16 %v4751, %v4750
        %v4790 = vpack.c.b16 %v4753, %v4752
        %v4791 = vpack.c.b16 %v4755, %v4754
        %v4792 = vpack.c.b16 %v4757, %v4756
        %v4793 = vpack.c.b16 %v4759, %v4758
        %v4794 = vpack.c.b16 %v4761, %v4760
        %v4795 = vpack.c.b16 %v4763, %v4762
        %4828 = vmatprep.subr.bf16.mxu0 0
        %4829 = vmatpush1.bf16.msra.mxu0 %v4764
        %4830 = vmatprep.subr.bf16.mxu0 0
        %4831 = vmatpush1.bf16.msra.mxu0 %v4765
        %4832 = vmatprep.subr.bf16.mxu0 0
        %4833 = vmatpush1.bf16.msra.mxu0 %v4766
        %4834 = vmatprep.subr.bf16.mxu0 0
        %4835 = vmatpush1.bf16.msra.mxu0 %v4767
        %4836 = vmatprep.subr.bf16.mxu0 0
        %4837 = vmatpush1.bf16.msra.mxu0 %v4768
        %4838 = vmatprep.subr.bf16.mxu0 0
        %4839 = vmatpush1.bf16.msra.mxu0 %v4769
        %4840 = vmatprep.subr.bf16.mxu0 0
        %4841 = vmatpush1.bf16.msra.mxu0 %v4770
        %4842 = vmatprep.subr.bf16.mxu0 0
        %4843 = vmatpush1.bf16.msra.mxu0 %v4771
        %4844 = vmatprep.subr.bf16.mxu0 0
        %4845 = vmatpush1.bf16.msra.mxu0 %v4772
        %4846 = vmatprep.subr.bf16.mxu0 0
        %4847 = vmatpush1.bf16.msra.mxu0 %v4773
        %4848 = vmatprep.subr.bf16.mxu0 0
        %4849 = vmatpush1.bf16.msra.mxu0 %v4774
        %4850 = vmatprep.subr.bf16.mxu0 0
        %4851 = vmatpush1.bf16.msra.mxu0 %v4775
        %4852 = vmatprep.subr.bf16.mxu0 0
        %4853 = vmatpush1.bf16.msra.mxu0 %v4776
        %4854 = vmatprep.subr.bf16.mxu0 0
        %4855 = vmatpush1.bf16.msra.mxu0 %v4777
        %4856 = vmatprep.subr.bf16.mxu0 0
        %4857 = vmatpush1.bf16.msra.mxu0 %v4778
        %4858 = vmatprep.subr.bf16.mxu0 0
        %4859 = vmatpush1.bf16.msra.mxu0 %v4779
        %4860 = vmatprep.mubr.bf16.mxu0 %v4568
        %4861 = vmatmul.mubr.bf16.gmra.mrb[0].mxu0 %v4567
        %v4862 = vpop.f32.mrb[0].mxu0
        %v4863 = vadd.f32 %v4635, %v4862
        %v4864 = vpop.f32.mrb[0].mxu0
        %v4865 = vpop.f32.mrb[0].mxu0
        %v4866 = vpop.f32.mrb[0].mxu0
        %4867 = vdwg.mxu0
        %4868 = vmatprep.subr.bf16.mxu0 0
        %4869 = vmatpush1.bf16.msra.mxu0 %v4780
        %4870 = vmatprep.subr.bf16.mxu0 0
        %4871 = vmatpush1.bf16.msra.mxu0 %v4781
        %4872 = vmatprep.subr.bf16.mxu0 0
        %4873 = vmatpush1.bf16.msra.mxu0 %v4782
        %4874 = vmatprep.subr.bf16.mxu0 0
        %4875 = vmatpush1.bf16.msra.mxu0 %v4783
        %4876 = vmatprep.subr.bf16.mxu0 0
        %4877 = vmatpush1.bf16.msra.mxu0 %v4784
        %4878 = vmatprep.subr.bf16.mxu0 0
        %4879 = vmatpush1.bf16.msra.mxu0 %v4785
        %4880 = vmatprep.subr.bf16.mxu0 0
        %4881 = vmatpush1.bf16.msra.mxu0 %v4786
        %4882 = vmatprep.subr.bf16.mxu0 0
        %4883 = vmatpush1.bf16.msra.mxu0 %v4787
        %4884 = vmatprep.subr.bf16.mxu0 0
        %4885 = vmatpush1.bf16.msra.mxu0 %v4788
        %4886 = vmatprep.subr.bf16.mxu0 0
        %4887 = vmatpush1.bf16.msra.mxu0 %v4789
        %4888 = vmatprep.subr.bf16.mxu0 0
        %4889 = vmatpush1.bf16.msra.mxu0 %v4790
        %4890 = vmatprep.subr.bf16.mxu0 0
        %4891 = vmatpush1.bf16.msra.mxu0 %v4791
        %4892 = vmatprep.subr.bf16.mxu0 0
        %4893 = vmatpush1.bf16.msra.mxu0 %v4792
        %4894 = vmatprep.subr.bf16.mxu0 0
        %4895 = vmatpush1.bf16.msra.mxu0 %v4793
        %4896 = vmatprep.subr.bf16.mxu0 0
        %4897 = vmatpush1.bf16.msra.mxu0 %v4794
        %4898 = vmatprep.subr.bf16.mxu0 0
        %4899 = vmatpush1.bf16.msra.mxu0 %v4795
        %4900 = vmatprep.mubr.bf16.mxu0 %v4570
        %4901 = vmatmul.mubr.bf16.gmra.mrb[0].mxu0 %v4569
        %v4902 = vpop.f32.mrb[0].mxu0
        %v4903 = vadd.f32 %v4863, %v4902
        %v4904 = vpop.f32.mrb[0].mxu0
        %v4905 = vpop.f32.mrb[0].mxu0
        %v4906 = vpop.f32.mrb[0].mxu0
        %4907 = vdwg.mxu0
        %vm4908 = vcmask 24576
        %4909 = vst.msk [vmem:[%s297] sm:$0x1] %vm4908, %v4903
        %s4910 = sand.u32 %s203, 1
        %s4911 = scalar_lea.sflag [#allocation3], %s4910
        %s4912 = sand.u32 %s203, 1
        %s4913 = scalar_lea.vmem [#allocation2], %s4912
        // Predicated region
        $region53: #{conv3d_forward.1} parent=51 // pred_check
          %p4914 = pneg %p213
        $region54: #{conv3d_forward.1} parent=51 // pred_check_branch
          %4916 = sbr.rel (%p4914) target = $region56
        $region55: #{conv3d_forward.1} parent=51 // pred_region
          %s4918 = ssub.s32 16, 16
          %4919 = vsyncadd %s4911, %s4918
          %s4920 = smul.addr %s22, 16
          %s4921 = scalar_lea.hbm %s8, %s4920
          %s4923 = sshll.u32 %s4913, 4
          %s4924 = int_to_ptr.vmem [resolvable:$true] %s4923
          %4926 = dma.vmem_to_hbm [thread:$0]  %s4924, 16, %s4921, %s4911
        $region56: #{conv3d_forward.1} parent=51 // pred_fallthru
          _
      $region52: #{conv3d_forward.1} parent=5 // pred_fallthru
        _
      %p4927 = scmp.le.s32.totalorder 2, %s17
      // Predicated region
      $region57: #{conv3d_forward.1} parent=5 // pred_check
        %p4928 = pneg %p4927
      $region58: #{conv3d_forward.1} parent=5 // pred_check_branch
        %4930 = sbr.rel (%p4928) target = $region60
      $region59: #{conv3d_forward.1} parent=5 // pred_region
        %s4931 = ssub.s32 %s17, 2
        // Predicated region
        $region61: #{conv3d_forward.1} parent=59 // pred_check
          %p4932 = pneg %p219
        $region62: #{conv3d_forward.1} parent=59 // pred_check_branch
          %4934 = sbr.rel (%p4932) target = $region64
        $region63: #{conv3d_forward.1} parent=59 // pred_region
          %s4935 = sand.u32 %s204, 1
          %s4936 = scalar_lea.sflag [#allocation3], %s4935
          %s4937 = sand.u32 %s204, 1
          %s4938 = scalar_lea.vmem [#allocation2], %s4937
          %4939 = dma.done %s4936, 16
        $region64: #{conv3d_forward.1} parent=59 // pred_fallthru
          _
      $region60: #{conv3d_forward.1} parent=5 // pred_fallthru
        _
    $region6: #{conv3d_forward.1} parent=1 // loop_footer
      %s21 = sadd.s32 1, %s17
    $region7: #{conv3d_forward.1} parent=1 // loop_footer_branch
      %16 = sbr.rel target = $region3
    $region8: #{conv3d_forward.1} parent=1 // loop_exit
      _
    %4940 = vsyncpa [#allocation3], 1
    %s4941 = scalar_lea.sflag [#allocation3], 1
    %4942 = vsyncpa %s4941, 1

</llo_original>
